<compile_context>
chip_gen: v5e
topology: v5e:2x2
jax: 0.10.0
libtpu: 0.0.40
codegen_flags: <defaults>
</compile_context>

<pallas_src>
from functools import partial

import numpy as np
import jax
import jax.numpy as jnp
from jax.experimental import pallas as pl
from jax.experimental.pallas import tpu as pltpu


# ------------------------------ fused kernel ------------------------------- #

def _lenet_kernel(x_ref,
                  w1_ref, b1_ref, w2_ref, b2_ref,
                  ce1_ref, co1_ref, pe1_ref, po1_ref,
                  ce2_ref, co2_ref, pe2_ref, po2_ref,
                  sel_ref,
                  fw1_ref, fb1_ref, fw2_ref, fb2_ref, fw3_ref, fb3_ref,
                  out_ref):
    f32 = jnp.float32

    def lshift(m, k):
        # out[:, l] = m[:, l + k]; the wrapped tail only lands in unused lanes.
        if k == 0:
            return m
        return jnp.concatenate([m[:, k:], m[:, :k]], axis=1)

    def mm(a, b):
        return jnp.dot(a, b, preferred_element_type=f32)

    xp = x_ref[...]                                    # (3, 32, 32*B): lane = b*32 + w

    # ---- conv1 (5x5 valid) as ONE banded matmul; +bias; ReLU --------------------
    xc = [xp[c] for c in range(3)]                     # (32, 32B) each
    rhs1 = jnp.concatenate(
        [lshift(xc[c], dj) for c in range(3) for dj in range(5)], axis=0)  # (480, 32B)
    y = mm(w1_ref[...], rhs1)                          # (168, 32B): row = co*28 + oh
    y = jnp.maximum(y + b1_ref[...], 0.0)

    # ---- 2x2 max pool #1 (width: even/odd lane compaction, height: row select) --
    t = jnp.maximum(mm(y, ce1_ref[...]), mm(y, co1_ref[...]))              # (168, 16B)
    y1 = jnp.maximum(mm(pe1_ref[...], t), mm(po1_ref[...], t))             # (96, 16B)
    # y1: row = c*16 + oh (rows 14,15 of each channel are zero), lane = b*16 + ow

    # ---- conv2 (5x5 valid) as ONE banded matmul; +bias; ReLU --------------------
    rhs2 = jnp.concatenate(
        [lshift(y1[c * 16:(c + 1) * 16, :], dj)
         for c in range(6) for dj in range(5)], axis=0)                    # (480, 16B)
    z = mm(w2_ref[...], rhs2)                          # (160, 16B): row = co*10 + oh
    z = jnp.maximum(z + b2_ref[...], 0.0)

    # ---- 2x2 max pool #2 --------------------------------------------------------
    t2 = jnp.maximum(mm(z, ce2_ref[...]), mm(z, co2_ref[...]))             # (160, 8B)
    z2 = jnp.maximum(mm(pe2_ref[...], t2), mm(po2_ref[...], t2))           # (80, 8B)
    # z2: row = co*5 + i, lane = b*8 + j (j < 5 valid)

    # ---- flatten (torch order co*25 + i*5 + j) via five 0/1 gather matmuls ------
    sel = sel_ref[...]                                 # (5, 8B, B)
    flat = jnp.concatenate([mm(z2, sel[j]) for j in range(5)], axis=0)     # (400, B)

    # ---- fc1 / fc2 / fc3 on the whole per-step batch ----------------------------
    h = jnp.maximum(mm(fw1_ref[...], flat) + fb1_ref[...], 0.0)            # (128, B)
    h = jnp.maximum(mm(fw2_ref[...], h) + fb2_ref[...], 0.0)               # (128, B)
    o = mm(fw3_ref[...], h) + fb3_ref[...]                                 # (128, B)
    out_ref[0] = o


# ------------------------------ JAX wrapper -------------------------------- #

@partial(jax.jit, static_argnames=("block_batch",))
def net_forward(packed, x, block_batch=8):
    B = block_batch                       # images per grid step (multiple of 4)
    n = x.shape[0]
    steps = pl.cdiv(n, B)
    n_pad = steps * B
    if n_pad != n:
        x = jnp.pad(x, ((0, n_pad - n), (0, 0), (0, 0), (0, 0)))

    # Pack the batch along lanes once in XLA (layout plumbing, 1x input bytes):
    # x_t[c, h, img*32 + w] = x[img, c, h, w]
    x_t = jnp.transpose(x, (1, 2, 0, 3)).reshape(3, 32, n_pad * 32)

    names = ("w1", "b1", "w2", "b2", "ce1", "co1", "pe1", "po1",
             "ce2", "co2", "pe2", "po2", "sel", "fw1", "fb1",
             "fw2", "fb2", "fw3", "fb3")
    weights = [packed[k] for k in names]

    def cspec(a):
        nd = a.ndim
        return pl.BlockSpec(a.shape, lambda i, _nd=nd: (0,) * _nd)

    flops_per_img = 2 * (6 * 28 * 28 * 75 + 16 * 10 * 10 * 150
                         + 400 * 120 + 120 * 84 + 84 * 10)
    w_bytes = sum(int(np.prod(w.shape)) for w in weights) * 4
    cost = pl.CostEstimate(
        flops=flops_per_img * n_pad,
        transcendentals=0,
        bytes_accessed=n_pad * 3 * 32 * 32 * 4 + n_pad * 128 * 4 + w_bytes)

    out = pl.pallas_call(
        _lenet_kernel,
        out_shape=jax.ShapeDtypeStruct((steps, 128, B), jnp.float32),
        grid=(steps,),
        in_specs=[pl.BlockSpec((3, 32, 32 * B), lambda i: (0, 0, i))]
                 + [cspec(w) for w in weights],
        out_specs=pl.BlockSpec((1, 128, B), lambda i: (i, 0, 0)),
        compiler_params=pltpu.CompilerParams(
            dimension_semantics=("parallel",)),
        cost_estimate=cost,
    )(x_t, *weights)

    logits = jnp.transpose(out, (0, 2, 1)).reshape(n_pad, 128)
    return logits[:n, :10]


# ------------------------- one-time host-side packing ----------------------- #

def pack_params(p, block_batch=8):
    """Repack PyTorch-layout params into banded / selection matrices.

    conv -> banded (Toeplitz) weights so each conv is a single MXU matmul;
    pools -> 0/1 lane-compaction and row-selection matrices;
    fc    -> (out, in) matrices zero-padded to 128 rows, flatten-order permuted.
    """
    B = block_batch
    w1 = np.asarray(p["conv1_w"], np.float32)          # (6, 3, 5, 5)
    w2 = np.asarray(p["conv2_w"], np.float32)          # (16, 6, 5, 5)

    band1 = np.zeros((6, 28, 3, 5, 32), np.float32)    # [co, oh, c, dj, h]
    for oh in range(28):
        for di in range(5):
            band1[:, oh, :, :, oh + di] = w1[:, :, di, :]
    band2 = np.zeros((16, 10, 6, 5, 16), np.float32)   # [co, oh, c, dj, h]
    for oh in range(10):
        for di in range(5):
            band2[:, oh, :, :, oh + di] = w2[:, :, di, :]

    b1 = np.repeat(np.asarray(p["conv1_b"], np.float32), 28).reshape(168, 1)
    b2 = np.repeat(np.asarray(p["conv2_b"], np.float32), 10).reshape(160, 1)

    # width pools: pick even / odd lanes (compacting the per-image strip by 2x)
    ce1 = np.zeros((32 * B, 16 * B), np.float32)
    co1 = np.zeros((32 * B, 16 * B), np.float32)
    ce1[2 * np.arange(16 * B), np.arange(16 * B)] = 1.0
    co1[2 * np.arange(16 * B) + 1, np.arange(16 * B)] = 1.0
    ce2 = np.zeros((16 * B, 8 * B), np.float32)
    co2 = np.zeros((16 * B, 8 * B), np.float32)
    ce2[2 * np.arange(8 * B), np.arange(8 * B)] = 1.0
    co2[2 * np.arange(8 * B) + 1, np.arange(8 * B)] = 1.0

    # height pools: pick even / odd rows and re-pack channel blocks
    pe1 = np.zeros((96, 168), np.float32)
    po1 = np.zeros((96, 168), np.float32)
    for c in range(6):
        for k in range(14):
            pe1[c * 16 + k, c * 28 + 2 * k] = 1.0
            po1[c * 16 + k, c * 28 + 2 * k + 1] = 1.0
    pe2 = np.zeros((80, 160), np.float32)
    po2 = np.zeros((80, 160), np.float32)
    for c in range(16):
        for k in range(5):
            pe2[c * 5 + k, c * 10 + 2 * k] = 1.0
            po2[c * 5 + k, c * 10 + 2 * k + 1] = 1.0

    # flatten gather: sel[j, b*8 + j, b] = 1  (moves column j of every image to
    # the batch column b)
    sel = np.zeros((5, 8 * B, B), np.float32)
    for j in range(5):
        for b in range(B):
            sel[j, b * 8 + j, b] = 1.0

    fc1 = np.asarray(p["fc1_w"], np.float32)            # (120, 400) [n, co*25+i*5+j]
    t = fc1.reshape(120, 16, 5, 5).transpose(0, 3, 1, 2).reshape(120, 400)
    fw1 = np.zeros((128, 400), np.float32); fw1[:120] = t   # col = j*80 + co*5 + i
    fb1 = np.zeros((128, 1), np.float32); fb1[:120, 0] = np.asarray(p["fc1_b"])
    fw2 = np.zeros((128, 128), np.float32); fw2[:84, :120] = np.asarray(p["fc2_w"])
    fb2 = np.zeros((128, 1), np.float32); fb2[:84, 0] = np.asarray(p["fc2_b"])
    fw3 = np.zeros((128, 128), np.float32); fw3[:10, :84] = np.asarray(p["fc3_w"])
    fb3 = np.zeros((128, 1), np.float32); fb3[:10, 0] = np.asarray(p["fc3_b"])

    host = dict(w1=band1.reshape(168, 480), b1=b1,
                w2=band2.reshape(160, 480), b2=b2,
                ce1=ce1, co1=co1, pe1=pe1, po1=po1,
                ce2=ce2, co2=co2, pe2=pe2, po2=po2, sel=sel,
                fw1=fw1, fb1=fb1, fw2=fw2, fb2=fb2, fw3=fw3, fb3=fb3)
    return {k: jnp.asarray(v) for k, v in host.items()}


def init_params(key):
    def uniform(k, shape, fan_in):
        bound = 1.0 / jnp.sqrt(jnp.float32(fan_in))
        return jax.random.uniform(k, shape, jnp.float32, -bound, bound)

    ks = jax.random.split(key, 10)
    return {
        "conv1_w": uniform(ks[0], (6, 3, 5, 5), 3 * 5 * 5),
        "conv1_b": uniform(ks[1], (6,), 3 * 5 * 5),
        "conv2_w": uniform(ks[2], (16, 6, 5, 5), 6 * 5 * 5),
        "conv2_b": uniform(ks[3], (16,), 6 * 5 * 5),
        "fc1_w": uniform(ks[4], (120, 400), 400),
        "fc1_b": uniform(ks[5], (120,), 400),
        "fc2_w": uniform(ks[6], (84, 120), 120),
        "fc2_b": uniform(ks[7], (84,), 120),
        "fc3_w": uniform(ks[8], (10, 84), 84),
        "fc3_b": uniform(ks[9], (10,), 84),
    }


def net_forward_ref(params, x):
    """Pure-JAX reference (same math, no Pallas) for correctness checking."""
    def conv(x, w, b):
        y = jax.lax.conv_general_dilated(
            x, w, window_strides=(1, 1), padding="VALID",
            dimension_numbers=("NCHW", "OIHW", "NCHW"))
        return jax.nn.relu(y + b[None, :, None, None])

    def pool(x):
        n, c, h, w = x.shape
        return x.reshape(n, c, h // 2, 2, w // 2, 2).max(axis=(3, 5))

    y = pool(conv(x, params["conv1_w"], params["conv1_b"]))
    y = pool(conv(y, params["conv2_w"], params["conv2_b"]))
    flat = y.reshape(x.shape[0], -1)
    h = jax.nn.relu(flat @ params["fc1_w"].T + params["fc1_b"])
    h = jax.nn.relu(h @ params["fc2_w"].T + params["fc2_b"])
    return h @ params["fc3_w"].T + params["fc3_b"]


if __name__ == "__main__":
    key = jax.random.PRNGKey(0)
    pkey, xkey = jax.random.split(key)
    params = init_params(pkey)
    packed = pack_params(params, block_batch=8)
    x = jax.random.normal(xkey, (16, 3, 32, 32), jnp.float32)  # NCHW, CIFAR-size

    out = jax.block_until_ready(net_forward(packed, x))
    ref = jax.block_until_ready(net_forward_ref(params, x))

    assert out.shape == (16, 10), out.shape
    err = float(jnp.max(jnp.abs(out - ref)))
    assert jnp.allclose(out, ref, atol=2e-3, rtol=2e-3), f"max abs err {err}"
    print("KERNEL_OK")
</pallas_src>

<mosaic_0001>
module attributes {stable_mosaic.version = 11 : i64} {
  func.func @_lenet_kernel(%arg0: i32, %arg1: memref<3x32x256xf32, #tpu.memory_space<vmem>>, %arg2: memref<168x480xf32, #tpu.memory_space<vmem>>, %arg3: memref<168x1xf32, #tpu.memory_space<vmem>>, %arg4: memref<160x480xf32, #tpu.memory_space<vmem>>, %arg5: memref<160x1xf32, #tpu.memory_space<vmem>>, %arg6: memref<256x128xf32, #tpu.memory_space<vmem>>, %arg7: memref<256x128xf32, #tpu.memory_space<vmem>>, %arg8: memref<96x168xf32, #tpu.memory_space<vmem>>, %arg9: memref<96x168xf32, #tpu.memory_space<vmem>>, %arg10: memref<128x64xf32, #tpu.memory_space<vmem>>, %arg11: memref<128x64xf32, #tpu.memory_space<vmem>>, %arg12: memref<80x160xf32, #tpu.memory_space<vmem>>, %arg13: memref<80x160xf32, #tpu.memory_space<vmem>>, %arg14: memref<5x64x8xf32, #tpu.memory_space<vmem>>, %arg15: memref<128x400xf32, #tpu.memory_space<vmem>>, %arg16: memref<128x1xf32, #tpu.memory_space<vmem>>, %arg17: memref<128x128xf32, #tpu.memory_space<vmem>>, %arg18: memref<128x1xf32, #tpu.memory_space<vmem>>, %arg19: memref<128x128xf32, #tpu.memory_space<vmem>>, %arg20: memref<128x1xf32, #tpu.memory_space<vmem>>, %arg21: memref<1x128x8xf32, #tpu.memory_space<vmem>>) attributes {dimension_semantics = [#tpu.dimension_semantics<parallel>], iteration_bounds = array<i64: 2>, scalar_prefetch = 0 : i64, scratch_operands = 0 : i64, tpu.core_type = #tpu.core_type<tc>, window_params = [{transform_indices = @transform_0, window_bounds = array<i64: 3, 32, 256>}, {pipeline_mode = #tpu.pipeline_mode<synchronous>, transform_indices = @transform_1, window_bounds = array<i64: 168, 480>}, {pipeline_mode = #tpu.pipeline_mode<synchronous>, transform_indices = @transform_2, window_bounds = array<i64: 168, 1>}, {pipeline_mode = #tpu.pipeline_mode<synchronous>, transform_indices = @transform_3, window_bounds = array<i64: 160, 480>}, {pipeline_mode = #tpu.pipeline_mode<synchronous>, transform_indices = @transform_4, window_bounds = array<i64: 160, 1>}, {pipeline_mode = #tpu.pipeline_mode<synchronous>, transform_indices = @transform_5, window_bounds = array<i64: 256, 128>}, {pipeline_mode = #tpu.pipeline_mode<synchronous>, transform_indices = @transform_6, window_bounds = array<i64: 256, 128>}, {pipeline_mode = #tpu.pipeline_mode<synchronous>, transform_indices = @transform_7, window_bounds = array<i64: 96, 168>}, {pipeline_mode = #tpu.pipeline_mode<synchronous>, transform_indices = @transform_8, window_bounds = array<i64: 96, 168>}, {pipeline_mode = #tpu.pipeline_mode<synchronous>, transform_indices = @transform_9, window_bounds = array<i64: 128, 64>}, {pipeline_mode = #tpu.pipeline_mode<synchronous>, transform_indices = @transform_10, window_bounds = array<i64: 128, 64>}, {pipeline_mode = #tpu.pipeline_mode<synchronous>, transform_indices = @transform_11, window_bounds = array<i64: 80, 160>}, {pipeline_mode = #tpu.pipeline_mode<synchronous>, transform_indices = @transform_12, window_bounds = array<i64: 80, 160>}, {pipeline_mode = #tpu.pipeline_mode<synchronous>, transform_indices = @transform_13, window_bounds = array<i64: 5, 64, 8>}, {pipeline_mode = #tpu.pipeline_mode<synchronous>, transform_indices = @transform_14, window_bounds = array<i64: 128, 400>}, {pipeline_mode = #tpu.pipeline_mode<synchronous>, transform_indices = @transform_15, window_bounds = array<i64: 128, 1>}, {pipeline_mode = #tpu.pipeline_mode<synchronous>, transform_indices = @transform_16, window_bounds = array<i64: 128, 128>}, {pipeline_mode = #tpu.pipeline_mode<synchronous>, transform_indices = @transform_17, window_bounds = array<i64: 128, 1>}, {pipeline_mode = #tpu.pipeline_mode<synchronous>, transform_indices = @transform_18, window_bounds = array<i64: 128, 128>}, {pipeline_mode = #tpu.pipeline_mode<synchronous>, transform_indices = @transform_19, window_bounds = array<i64: 128, 1>}, {transform_indices = @transform_20, window_bounds = array<i64: 1, 128, 8>}]} {
    %c0 = arith.constant 0 : index
    %c0_0 = arith.constant 0 : index
    %c0_1 = arith.constant 0 : index
    %0 = vector.load %arg1[%c0, %c0_0, %c0_1] : memref<3x32x256xf32, #tpu.memory_space<vmem>>, vector<3x32x256xf32>
    %1 = vector.extract_strided_slice %0 {offsets = [0, 0, 0], sizes = [1, 32, 256], strides = [1, 1, 1]} : vector<3x32x256xf32> to vector<1x32x256xf32>
    %2 = vector.shape_cast %1 : vector<1x32x256xf32> to vector<32x256xf32>
    %3 = vector.extract_strided_slice %0 {offsets = [1, 0, 0], sizes = [1, 32, 256], strides = [1, 1, 1]} : vector<3x32x256xf32> to vector<1x32x256xf32>
    %4 = vector.shape_cast %3 : vector<1x32x256xf32> to vector<32x256xf32>
    %5 = vector.extract_strided_slice %0 {offsets = [2, 0, 0], sizes = [1, 32, 256], strides = [1, 1, 1]} : vector<3x32x256xf32> to vector<1x32x256xf32>
    %6 = vector.shape_cast %5 : vector<1x32x256xf32> to vector<32x256xf32>
    %7 = vector.extract_strided_slice %2 {offsets = [0, 1], sizes = [32, 255], strides = [1, 1]} : vector<32x256xf32> to vector<32x255xf32>
    %8 = vector.extract_strided_slice %2 {offsets = [0, 0], sizes = [32, 1], strides = [1, 1]} : vector<32x256xf32> to vector<32x1xf32>
    %9 = tpu.concatenate %7, %8 in 1 : vector<32x255xf32>, vector<32x1xf32> -> vector<32x256xf32>
    %10 = vector.extract_strided_slice %2 {offsets = [0, 2], sizes = [32, 254], strides = [1, 1]} : vector<32x256xf32> to vector<32x254xf32>
    %11 = vector.extract_strided_slice %2 {offsets = [0, 0], sizes = [32, 2], strides = [1, 1]} : vector<32x256xf32> to vector<32x2xf32>
    %12 = tpu.concatenate %10, %11 in 1 : vector<32x254xf32>, vector<32x2xf32> -> vector<32x256xf32>
    %13 = vector.extract_strided_slice %2 {offsets = [0, 3], sizes = [32, 253], strides = [1, 1]} : vector<32x256xf32> to vector<32x253xf32>
    %14 = vector.extract_strided_slice %2 {offsets = [0, 0], sizes = [32, 3], strides = [1, 1]} : vector<32x256xf32> to vector<32x3xf32>
    %15 = tpu.concatenate %13, %14 in 1 : vector<32x253xf32>, vector<32x3xf32> -> vector<32x256xf32>
    %16 = vector.extract_strided_slice %2 {offsets = [0, 4], sizes = [32, 252], strides = [1, 1]} : vector<32x256xf32> to vector<32x252xf32>
    %17 = vector.extract_strided_slice %2 {offsets = [0, 0], sizes = [32, 4], strides = [1, 1]} : vector<32x256xf32> to vector<32x4xf32>
    %18 = tpu.concatenate %16, %17 in 1 : vector<32x252xf32>, vector<32x4xf32> -> vector<32x256xf32>
    %19 = vector.extract_strided_slice %4 {offsets = [0, 1], sizes = [32, 255], strides = [1, 1]} : vector<32x256xf32> to vector<32x255xf32>
    %20 = vector.extract_strided_slice %4 {offsets = [0, 0], sizes = [32, 1], strides = [1, 1]} : vector<32x256xf32> to vector<32x1xf32>
    %21 = tpu.concatenate %19, %20 in 1 : vector<32x255xf32>, vector<32x1xf32> -> vector<32x256xf32>
    %22 = vector.extract_strided_slice %4 {offsets = [0, 2], sizes = [32, 254], strides = [1, 1]} : vector<32x256xf32> to vector<32x254xf32>
    %23 = vector.extract_strided_slice %4 {offsets = [0, 0], sizes = [32, 2], strides = [1, 1]} : vector<32x256xf32> to vector<32x2xf32>
    %24 = tpu.concatenate %22, %23 in 1 : vector<32x254xf32>, vector<32x2xf32> -> vector<32x256xf32>
    %25 = vector.extract_strided_slice %4 {offsets = [0, 3], sizes = [32, 253], strides = [1, 1]} : vector<32x256xf32> to vector<32x253xf32>
    %26 = vector.extract_strided_slice %4 {offsets = [0, 0], sizes = [32, 3], strides = [1, 1]} : vector<32x256xf32> to vector<32x3xf32>
    %27 = tpu.concatenate %25, %26 in 1 : vector<32x253xf32>, vector<32x3xf32> -> vector<32x256xf32>
    %28 = vector.extract_strided_slice %4 {offsets = [0, 4], sizes = [32, 252], strides = [1, 1]} : vector<32x256xf32> to vector<32x252xf32>
    %29 = vector.extract_strided_slice %4 {offsets = [0, 0], sizes = [32, 4], strides = [1, 1]} : vector<32x256xf32> to vector<32x4xf32>
    %30 = tpu.concatenate %28, %29 in 1 : vector<32x252xf32>, vector<32x4xf32> -> vector<32x256xf32>
    %31 = vector.extract_strided_slice %6 {offsets = [0, 1], sizes = [32, 255], strides = [1, 1]} : vector<32x256xf32> to vector<32x255xf32>
    %32 = vector.extract_strided_slice %6 {offsets = [0, 0], sizes = [32, 1], strides = [1, 1]} : vector<32x256xf32> to vector<32x1xf32>
    %33 = tpu.concatenate %31, %32 in 1 : vector<32x255xf32>, vector<32x1xf32> -> vector<32x256xf32>
    %34 = vector.extract_strided_slice %6 {offsets = [0, 2], sizes = [32, 254], strides = [1, 1]} : vector<32x256xf32> to vector<32x254xf32>
    %35 = vector.extract_strided_slice %6 {offsets = [0, 0], sizes = [32, 2], strides = [1, 1]} : vector<32x256xf32> to vector<32x2xf32>
    %36 = tpu.concatenate %34, %35 in 1 : vector<32x254xf32>, vector<32x2xf32> -> vector<32x256xf32>
    %37 = vector.extract_strided_slice %6 {offsets = [0, 3], sizes = [32, 253], strides = [1, 1]} : vector<32x256xf32> to vector<32x253xf32>
    %38 = vector.extract_strided_slice %6 {offsets = [0, 0], sizes = [32, 3], strides = [1, 1]} : vector<32x256xf32> to vector<32x3xf32>
    %39 = tpu.concatenate %37, %38 in 1 : vector<32x253xf32>, vector<32x3xf32> -> vector<32x256xf32>
    %40 = vector.extract_strided_slice %6 {offsets = [0, 4], sizes = [32, 252], strides = [1, 1]} : vector<32x256xf32> to vector<32x252xf32>
    %41 = vector.extract_strided_slice %6 {offsets = [0, 0], sizes = [32, 4], strides = [1, 1]} : vector<32x256xf32> to vector<32x4xf32>
    %42 = tpu.concatenate %40, %41 in 1 : vector<32x252xf32>, vector<32x4xf32> -> vector<32x256xf32>
    %43 = tpu.concatenate %2, %9, %12, %15, %18, %4, %21, %24, %27, %30, %6, %33, %36, %39, %42 in 0 : vector<32x256xf32>, vector<32x256xf32>, vector<32x256xf32>, vector<32x256xf32>, vector<32x256xf32>, vector<32x256xf32>, vector<32x256xf32>, vector<32x256xf32>, vector<32x256xf32>, vector<32x256xf32>, vector<32x256xf32>, vector<32x256xf32>, vector<32x256xf32>, vector<32x256xf32>, vector<32x256xf32> -> vector<480x256xf32>
    %c0_2 = arith.constant 0 : index
    %c0_3 = arith.constant 0 : index
    %44 = vector.load %arg2[%c0_2, %c0_3] : memref<168x480xf32, #tpu.memory_space<vmem>>, vector<168x480xf32>
    %cst = arith.constant dense<0.000000e+00> : vector<168x256xf32>
    %45 = tpu.matmul %44, %43, %cst {dimension_numbers = #tpu.dot_dimension_numbers<[1], [0], [0], [1], [0, 0, 1, 1], [], []>} : vector<168x480xf32>, vector<480x256xf32>, vector<168x256xf32> -> vector<168x256xf32>
    %c0_4 = arith.constant 0 : index
    %c0_5 = arith.constant 0 : index
    %46 = vector.load %arg3[%c0_4, %c0_5] : memref<168x1xf32, #tpu.memory_space<vmem>>, vector<168x1xf32>
    %47 = vector.broadcast %46 : vector<168x1xf32> to vector<168x256xf32>
    %48 = arith.addf %45, %47 : vector<168x256xf32>
    %cst_6 = arith.constant 0.000000e+00 : f32
    %49 = vector.broadcast %cst_6 : f32 to vector<168x256xf32>
    %50 = arith.maximumf %48, %49 : vector<168x256xf32>
    %c0_7 = arith.constant 0 : index
    %c0_8 = arith.constant 0 : index
    %51 = vector.load %arg6[%c0_7, %c0_8] : memref<256x128xf32, #tpu.memory_space<vmem>>, vector<256x128xf32>
    %cst_9 = arith.constant dense<0.000000e+00> : vector<168x128xf32>
    %52 = tpu.matmul %50, %51, %cst_9 {dimension_numbers = #tpu.dot_dimension_numbers<[1], [0], [0], [1], [0, 0, 1, 1], [], []>} : vector<168x256xf32>, vector<256x128xf32>, vector<168x128xf32> -> vector<168x128xf32>
    %c0_10 = arith.constant 0 : index
    %c0_11 = arith.constant 0 : index
    %53 = vector.load %arg7[%c0_10, %c0_11] : memref<256x128xf32, #tpu.memory_space<vmem>>, vector<256x128xf32>
    %cst_12 = arith.constant dense<0.000000e+00> : vector<168x128xf32>
    %54 = tpu.matmul %50, %53, %cst_12 {dimension_numbers = #tpu.dot_dimension_numbers<[1], [0], [0], [1], [0, 0, 1, 1], [], []>} : vector<168x256xf32>, vector<256x128xf32>, vector<168x128xf32> -> vector<168x128xf32>
    %55 = arith.maximumf %52, %54 : vector<168x128xf32>
    %c0_13 = arith.constant 0 : index
    %c0_14 = arith.constant 0 : index
    %56 = vector.load %arg8[%c0_13, %c0_14] : memref<96x168xf32, #tpu.memory_space<vmem>>, vector<96x168xf32>
    %cst_15 = arith.constant dense<0.000000e+00> : vector<96x128xf32>
    %57 = tpu.matmul %56, %55, %cst_15 {dimension_numbers = #tpu.dot_dimension_numbers<[1], [0], [0], [1], [0, 0, 1, 1], [], []>} : vector<96x168xf32>, vector<168x128xf32>, vector<96x128xf32> -> vector<96x128xf32>
    %c0_16 = arith.constant 0 : index
    %c0_17 = arith.constant 0 : index
    %58 = vector.load %arg9[%c0_16, %c0_17] : memref<96x168xf32, #tpu.memory_space<vmem>>, vector<96x168xf32>
    %cst_18 = arith.constant dense<0.000000e+00> : vector<96x128xf32>
    %59 = tpu.matmul %58, %55, %cst_18 {dimension_numbers = #tpu.dot_dimension_numbers<[1], [0], [0], [1], [0, 0, 1, 1], [], []>} : vector<96x168xf32>, vector<168x128xf32>, vector<96x128xf32> -> vector<96x128xf32>
    %60 = arith.maximumf %57, %59 : vector<96x128xf32>
    %61 = vector.extract_strided_slice %60 {offsets = [0, 0], sizes = [16, 128], strides = [1, 1]} : vector<96x128xf32> to vector<16x128xf32>
    %62 = vector.extract_strided_slice %60 {offsets = [0, 0], sizes = [16, 128], strides = [1, 1]} : vector<96x128xf32> to vector<16x128xf32>
    %63 = vector.extract_strided_slice %62 {offsets = [0, 1], sizes = [16, 127], strides = [1, 1]} : vector<16x128xf32> to vector<16x127xf32>
    %64 = vector.extract_strided_slice %62 {offsets = [0, 0], sizes = [16, 1], strides = [1, 1]} : vector<16x128xf32> to vector<16x1xf32>
    %65 = tpu.concatenate %63, %64 in 1 : vector<16x127xf32>, vector<16x1xf32> -> vector<16x128xf32>
    %66 = vector.extract_strided_slice %60 {offsets = [0, 0], sizes = [16, 128], strides = [1, 1]} : vector<96x128xf32> to vector<16x128xf32>
    %67 = vector.extract_strided_slice %66 {offsets = [0, 2], sizes = [16, 126], strides = [1, 1]} : vector<16x128xf32> to vector<16x126xf32>
    %68 = vector.extract_strided_slice %66 {offsets = [0, 0], sizes = [16, 2], strides = [1, 1]} : vector<16x128xf32> to vector<16x2xf32>
    %69 = tpu.concatenate %67, %68 in 1 : vector<16x126xf32>, vector<16x2xf32> -> vector<16x128xf32>
    %70 = vector.extract_strided_slice %60 {offsets = [0, 0], sizes = [16, 128], strides = [1, 1]} : vector<96x128xf32> to vector<16x128xf32>
    %71 = vector.extract_strided_slice %70 {offsets = [0, 3], sizes = [16, 125], strides = [1, 1]} : vector<16x128xf32> to vector<16x125xf32>
    %72 = vector.extract_strided_slice %70 {offsets = [0, 0], sizes = [16, 3], strides = [1, 1]} : vector<16x128xf32> to vector<16x3xf32>
    %73 = tpu.concatenate %71, %72 in 1 : vector<16x125xf32>, vector<16x3xf32> -> vector<16x128xf32>
    %74 = vector.extract_strided_slice %60 {offsets = [0, 0], sizes = [16, 128], strides = [1, 1]} : vector<96x128xf32> to vector<16x128xf32>
    %75 = vector.extract_strided_slice %74 {offsets = [0, 4], sizes = [16, 124], strides = [1, 1]} : vector<16x128xf32> to vector<16x124xf32>
    %76 = vector.extract_strided_slice %74 {offsets = [0, 0], sizes = [16, 4], strides = [1, 1]} : vector<16x128xf32> to vector<16x4xf32>
    %77 = tpu.concatenate %75, %76 in 1 : vector<16x124xf32>, vector<16x4xf32> -> vector<16x128xf32>
    %78 = vector.extract_strided_slice %60 {offsets = [16, 0], sizes = [16, 128], strides = [1, 1]} : vector<96x128xf32> to vector<16x128xf32>
    %79 = vector.extract_strided_slice %60 {offsets = [16, 0], sizes = [16, 128], strides = [1, 1]} : vector<96x128xf32> to vector<16x128xf32>
    %80 = vector.extract_strided_slice %79 {offsets = [0, 1], sizes = [16, 127], strides = [1, 1]} : vector<16x128xf32> to vector<16x127xf32>
    %81 = vector.extract_strided_slice %79 {offsets = [0, 0], sizes = [16, 1], strides = [1, 1]} : vector<16x128xf32> to vector<16x1xf32>
    %82 = tpu.concatenate %80, %81 in 1 : vector<16x127xf32>, vector<16x1xf32> -> vector<16x128xf32>
    %83 = vector.extract_strided_slice %60 {offsets = [16, 0], sizes = [16, 128], strides = [1, 1]} : vector<96x128xf32> to vector<16x128xf32>
    %84 = vector.extract_strided_slice %83 {offsets = [0, 2], sizes = [16, 126], strides = [1, 1]} : vector<16x128xf32> to vector<16x126xf32>
    %85 = vector.extract_strided_slice %83 {offsets = [0, 0], sizes = [16, 2], strides = [1, 1]} : vector<16x128xf32> to vector<16x2xf32>
    %86 = tpu.concatenate %84, %85 in 1 : vector<16x126xf32>, vector<16x2xf32> -> vector<16x128xf32>
    %87 = vector.extract_strided_slice %60 {offsets = [16, 0], sizes = [16, 128], strides = [1, 1]} : vector<96x128xf32> to vector<16x128xf32>
    %88 = vector.extract_strided_slice %87 {offsets = [0, 3], sizes = [16, 125], strides = [1, 1]} : vector<16x128xf32> to vector<16x125xf32>
    %89 = vector.extract_strided_slice %87 {offsets = [0, 0], sizes = [16, 3], strides = [1, 1]} : vector<16x128xf32> to vector<16x3xf32>
    %90 = tpu.concatenate %88, %89 in 1 : vector<16x125xf32>, vector<16x3xf32> -> vector<16x128xf32>
    %91 = vector.extract_strided_slice %60 {offsets = [16, 0], sizes = [16, 128], strides = [1, 1]} : vector<96x128xf32> to vector<16x128xf32>
    %92 = vector.extract_strided_slice %91 {offsets = [0, 4], sizes = [16, 124], strides = [1, 1]} : vector<16x128xf32> to vector<16x124xf32>
    %93 = vector.extract_strided_slice %91 {offsets = [0, 0], sizes = [16, 4], strides = [1, 1]} : vector<16x128xf32> to vector<16x4xf32>
    %94 = tpu.concatenate %92, %93 in 1 : vector<16x124xf32>, vector<16x4xf32> -> vector<16x128xf32>
    %95 = vector.extract_strided_slice %60 {offsets = [32, 0], sizes = [16, 128], strides = [1, 1]} : vector<96x128xf32> to vector<16x128xf32>
    %96 = vector.extract_strided_slice %60 {offsets = [32, 0], sizes = [16, 128], strides = [1, 1]} : vector<96x128xf32> to vector<16x128xf32>
    %97 = vector.extract_strided_slice %96 {offsets = [0, 1], sizes = [16, 127], strides = [1, 1]} : vector<16x128xf32> to vector<16x127xf32>
    %98 = vector.extract_strided_slice %96 {offsets = [0, 0], sizes = [16, 1], strides = [1, 1]} : vector<16x128xf32> to vector<16x1xf32>
    %99 = tpu.concatenate %97, %98 in 1 : vector<16x127xf32>, vector<16x1xf32> -> vector<16x128xf32>
    %100 = vector.extract_strided_slice %60 {offsets = [32, 0], sizes = [16, 128], strides = [1, 1]} : vector<96x128xf32> to vector<16x128xf32>
    %101 = vector.extract_strided_slice %100 {offsets = [0, 2], sizes = [16, 126], strides = [1, 1]} : vector<16x128xf32> to vector<16x126xf32>
    %102 = vector.extract_strided_slice %100 {offsets = [0, 0], sizes = [16, 2], strides = [1, 1]} : vector<16x128xf32> to vector<16x2xf32>
    %103 = tpu.concatenate %101, %102 in 1 : vector<16x126xf32>, vector<16x2xf32> -> vector<16x128xf32>
    %104 = vector.extract_strided_slice %60 {offsets = [32, 0], sizes = [16, 128], strides = [1, 1]} : vector<96x128xf32> to vector<16x128xf32>
    %105 = vector.extract_strided_slice %104 {offsets = [0, 3], sizes = [16, 125], strides = [1, 1]} : vector<16x128xf32> to vector<16x125xf32>
    %106 = vector.extract_strided_slice %104 {offsets = [0, 0], sizes = [16, 3], strides = [1, 1]} : vector<16x128xf32> to vector<16x3xf32>
    %107 = tpu.concatenate %105, %106 in 1 : vector<16x125xf32>, vector<16x3xf32> -> vector<16x128xf32>
    %108 = vector.extract_strided_slice %60 {offsets = [32, 0], sizes = [16, 128], strides = [1, 1]} : vector<96x128xf32> to vector<16x128xf32>
    %109 = vector.extract_strided_slice %108 {offsets = [0, 4], sizes = [16, 124], strides = [1, 1]} : vector<16x128xf32> to vector<16x124xf32>
    %110 = vector.extract_strided_slice %108 {offsets = [0, 0], sizes = [16, 4], strides = [1, 1]} : vector<16x128xf32> to vector<16x4xf32>
    %111 = tpu.concatenate %109, %110 in 1 : vector<16x124xf32>, vector<16x4xf32> -> vector<16x128xf32>
    %112 = vector.extract_strided_slice %60 {offsets = [48, 0], sizes = [16, 128], strides = [1, 1]} : vector<96x128xf32> to vector<16x128xf32>
    %113 = vector.extract_strided_slice %60 {offsets = [48, 0], sizes = [16, 128], strides = [1, 1]} : vector<96x128xf32> to vector<16x128xf32>
    %114 = vector.extract_strided_slice %113 {offsets = [0, 1], sizes = [16, 127], strides = [1, 1]} : vector<16x128xf32> to vector<16x127xf32>
    %115 = vector.extract_strided_slice %113 {offsets = [0, 0], sizes = [16, 1], strides = [1, 1]} : vector<16x128xf32> to vector<16x1xf32>
    %116 = tpu.concatenate %114, %115 in 1 : vector<16x127xf32>, vector<16x1xf32> -> vector<16x128xf32>
    %117 = vector.extract_strided_slice %60 {offsets = [48, 0], sizes = [16, 128], strides = [1, 1]} : vector<96x128xf32> to vector<16x128xf32>
    %118 = vector.extract_strided_slice %117 {offsets = [0, 2], sizes = [16, 126], strides = [1, 1]} : vector<16x128xf32> to vector<16x126xf32>
    %119 = vector.extract_strided_slice %117 {offsets = [0, 0], sizes = [16, 2], strides = [1, 1]} : vector<16x128xf32> to vector<16x2xf32>
    %120 = tpu.concatenate %118, %119 in 1 : vector<16x126xf32>, vector<16x2xf32> -> vector<16x128xf32>
    %121 = vector.extract_strided_slice %60 {offsets = [48, 0], sizes = [16, 128], strides = [1, 1]} : vector<96x128xf32> to vector<16x128xf32>
    %122 = vector.extract_strided_slice %121 {offsets = [0, 3], sizes = [16, 125], strides = [1, 1]} : vector<16x128xf32> to vector<16x125xf32>
    %123 = vector.extract_strided_slice %121 {offsets = [0, 0], sizes = [16, 3], strides = [1, 1]} : vector<16x128xf32> to vector<16x3xf32>
    %124 = tpu.concatenate %122, %123 in 1 : vector<16x125xf32>, vector<16x3xf32> -> vector<16x128xf32>
    %125 = vector.extract_strided_slice %60 {offsets = [48, 0], sizes = [16, 128], strides = [1, 1]} : vector<96x128xf32> to vector<16x128xf32>
    %126 = vector.extract_strided_slice %125 {offsets = [0, 4], sizes = [16, 124], strides = [1, 1]} : vector<16x128xf32> to vector<16x124xf32>
    %127 = vector.extract_strided_slice %125 {offsets = [0, 0], sizes = [16, 4], strides = [1, 1]} : vector<16x128xf32> to vector<16x4xf32>
    %128 = tpu.concatenate %126, %127 in 1 : vector<16x124xf32>, vector<16x4xf32> -> vector<16x128xf32>
    %129 = vector.extract_strided_slice %60 {offsets = [64, 0], sizes = [16, 128], strides = [1, 1]} : vector<96x128xf32> to vector<16x128xf32>
    %130 = vector.extract_strided_slice %60 {offsets = [64, 0], sizes = [16, 128], strides = [1, 1]} : vector<96x128xf32> to vector<16x128xf32>
    %131 = vector.extract_strided_slice %130 {offsets = [0, 1], sizes = [16, 127], strides = [1, 1]} : vector<16x128xf32> to vector<16x127xf32>
    %132 = vector.extract_strided_slice %130 {offsets = [0, 0], sizes = [16, 1], strides = [1, 1]} : vector<16x128xf32> to vector<16x1xf32>
    %133 = tpu.concatenate %131, %132 in 1 : vector<16x127xf32>, vector<16x1xf32> -> vector<16x128xf32>
    %134 = vector.extract_strided_slice %60 {offsets = [64, 0], sizes = [16, 128], strides = [1, 1]} : vector<96x128xf32> to vector<16x128xf32>
    %135 = vector.extract_strided_slice %134 {offsets = [0, 2], sizes = [16, 126], strides = [1, 1]} : vector<16x128xf32> to vector<16x126xf32>
    %136 = vector.extract_strided_slice %134 {offsets = [0, 0], sizes = [16, 2], strides = [1, 1]} : vector<16x128xf32> to vector<16x2xf32>
    %137 = tpu.concatenate %135, %136 in 1 : vector<16x126xf32>, vector<16x2xf32> -> vector<16x128xf32>
    %138 = vector.extract_strided_slice %60 {offsets = [64, 0], sizes = [16, 128], strides = [1, 1]} : vector<96x128xf32> to vector<16x128xf32>
    %139 = vector.extract_strided_slice %138 {offsets = [0, 3], sizes = [16, 125], strides = [1, 1]} : vector<16x128xf32> to vector<16x125xf32>
    %140 = vector.extract_strided_slice %138 {offsets = [0, 0], sizes = [16, 3], strides = [1, 1]} : vector<16x128xf32> to vector<16x3xf32>
    %141 = tpu.concatenate %139, %140 in 1 : vector<16x125xf32>, vector<16x3xf32> -> vector<16x128xf32>
    %142 = vector.extract_strided_slice %60 {offsets = [64, 0], sizes = [16, 128], strides = [1, 1]} : vector<96x128xf32> to vector<16x128xf32>
    %143 = vector.extract_strided_slice %142 {offsets = [0, 4], sizes = [16, 124], strides = [1, 1]} : vector<16x128xf32> to vector<16x124xf32>
    %144 = vector.extract_strided_slice %142 {offsets = [0, 0], sizes = [16, 4], strides = [1, 1]} : vector<16x128xf32> to vector<16x4xf32>
    %145 = tpu.concatenate %143, %144 in 1 : vector<16x124xf32>, vector<16x4xf32> -> vector<16x128xf32>
    %146 = vector.extract_strided_slice %60 {offsets = [80, 0], sizes = [16, 128], strides = [1, 1]} : vector<96x128xf32> to vector<16x128xf32>
    %147 = vector.extract_strided_slice %60 {offsets = [80, 0], sizes = [16, 128], strides = [1, 1]} : vector<96x128xf32> to vector<16x128xf32>
    %148 = vector.extract_strided_slice %147 {offsets = [0, 1], sizes = [16, 127], strides = [1, 1]} : vector<16x128xf32> to vector<16x127xf32>
    %149 = vector.extract_strided_slice %147 {offsets = [0, 0], sizes = [16, 1], strides = [1, 1]} : vector<16x128xf32> to vector<16x1xf32>
    %150 = tpu.concatenate %148, %149 in 1 : vector<16x127xf32>, vector<16x1xf32> -> vector<16x128xf32>
    %151 = vector.extract_strided_slice %60 {offsets = [80, 0], sizes = [16, 128], strides = [1, 1]} : vector<96x128xf32> to vector<16x128xf32>
    %152 = vector.extract_strided_slice %151 {offsets = [0, 2], sizes = [16, 126], strides = [1, 1]} : vector<16x128xf32> to vector<16x126xf32>
    %153 = vector.extract_strided_slice %151 {offsets = [0, 0], sizes = [16, 2], strides = [1, 1]} : vector<16x128xf32> to vector<16x2xf32>
    %154 = tpu.concatenate %152, %153 in 1 : vector<16x126xf32>, vector<16x2xf32> -> vector<16x128xf32>
    %155 = vector.extract_strided_slice %60 {offsets = [80, 0], sizes = [16, 128], strides = [1, 1]} : vector<96x128xf32> to vector<16x128xf32>
    %156 = vector.extract_strided_slice %155 {offsets = [0, 3], sizes = [16, 125], strides = [1, 1]} : vector<16x128xf32> to vector<16x125xf32>
    %157 = vector.extract_strided_slice %155 {offsets = [0, 0], sizes = [16, 3], strides = [1, 1]} : vector<16x128xf32> to vector<16x3xf32>
    %158 = tpu.concatenate %156, %157 in 1 : vector<16x125xf32>, vector<16x3xf32> -> vector<16x128xf32>
    %159 = vector.extract_strided_slice %60 {offsets = [80, 0], sizes = [16, 128], strides = [1, 1]} : vector<96x128xf32> to vector<16x128xf32>
    %160 = vector.extract_strided_slice %159 {offsets = [0, 4], sizes = [16, 124], strides = [1, 1]} : vector<16x128xf32> to vector<16x124xf32>
    %161 = vector.extract_strided_slice %159 {offsets = [0, 0], sizes = [16, 4], strides = [1, 1]} : vector<16x128xf32> to vector<16x4xf32>
    %162 = tpu.concatenate %160, %161 in 1 : vector<16x124xf32>, vector<16x4xf32> -> vector<16x128xf32>
    %163 = tpu.concatenate %61, %65, %69, %73, %77, %78, %82, %86, %90, %94, %95, %99, %103, %107, %111, %112 in 0 : vector<16x128xf32>, vector<16x128xf32>, vector<16x128xf32>, vector<16x128xf32>, vector<16x128xf32>, vector<16x128xf32>, vector<16x128xf32>, vector<16x128xf32>, vector<16x128xf32>, vector<16x128xf32>, vector<16x128xf32>, vector<16x128xf32>, vector<16x128xf32>, vector<16x128xf32>, vector<16x128xf32>, vector<16x128xf32> -> vector<256x128xf32>
    %164 = tpu.concatenate %116, %120, %124, %128, %129, %133, %137, %141, %145, %146, %150, %154, %158, %162 in 0 : vector<16x128xf32>, vector<16x128xf32>, vector<16x128xf32>, vector<16x128xf32>, vector<16x128xf32>, vector<16x128xf32>, vector<16x128xf32>, vector<16x128xf32>, vector<16x128xf32>, vector<16x128xf32>, vector<16x128xf32>, vector<16x128xf32>, vector<16x128xf32>, vector<16x128xf32> -> vector<224x128xf32>
    %165 = tpu.concatenate %163, %164 in 0 : vector<256x128xf32>, vector<224x128xf32> -> vector<480x128xf32>
    %c0_19 = arith.constant 0 : index
    %c0_20 = arith.constant 0 : index
    %166 = vector.load %arg4[%c0_19, %c0_20] : memref<160x480xf32, #tpu.memory_space<vmem>>, vector<160x480xf32>
    %cst_21 = arith.constant dense<0.000000e+00> : vector<160x128xf32>
    %167 = tpu.matmul %166, %165, %cst_21 {dimension_numbers = #tpu.dot_dimension_numbers<[1], [0], [0], [1], [0, 0, 1, 1], [], []>} : vector<160x480xf32>, vector<480x128xf32>, vector<160x128xf32> -> vector<160x128xf32>
    %c0_22 = arith.constant 0 : index
    %c0_23 = arith.constant 0 : index
    %168 = vector.load %arg5[%c0_22, %c0_23] : memref<160x1xf32, #tpu.memory_space<vmem>>, vector<160x1xf32>
    %169 = vector.broadcast %168 : vector<160x1xf32> to vector<160x128xf32>
    %170 = arith.addf %167, %169 : vector<160x128xf32>
    %cst_24 = arith.constant 0.000000e+00 : f32
    %171 = vector.broadcast %cst_24 : f32 to vector<160x128xf32>
    %172 = arith.maximumf %170, %171 : vector<160x128xf32>
    %c0_25 = arith.constant 0 : index
    %c0_26 = arith.constant 0 : index
    %173 = vector.load %arg10[%c0_25, %c0_26] : memref<128x64xf32, #tpu.memory_space<vmem>>, vector<128x64xf32>
    %cst_27 = arith.constant dense<0.000000e+00> : vector<160x64xf32>
    %174 = tpu.matmul %172, %173, %cst_27 {dimension_numbers = #tpu.dot_dimension_numbers<[1], [0], [0], [1], [0, 0, 1, 1], [], []>} : vector<160x128xf32>, vector<128x64xf32>, vector<160x64xf32> -> vector<160x64xf32>
    %c0_28 = arith.constant 0 : index
    %c0_29 = arith.constant 0 : index
    %175 = vector.load %arg11[%c0_28, %c0_29] : memref<128x64xf32, #tpu.memory_space<vmem>>, vector<128x64xf32>
    %cst_30 = arith.constant dense<0.000000e+00> : vector<160x64xf32>
    %176 = tpu.matmul %172, %175, %cst_30 {dimension_numbers = #tpu.dot_dimension_numbers<[1], [0], [0], [1], [0, 0, 1, 1], [], []>} : vector<160x128xf32>, vector<128x64xf32>, vector<160x64xf32> -> vector<160x64xf32>
    %177 = arith.maximumf %174, %176 : vector<160x64xf32>
    %c0_31 = arith.constant 0 : index
    %c0_32 = arith.constant 0 : index
    %178 = vector.load %arg12[%c0_31, %c0_32] : memref<80x160xf32, #tpu.memory_space<vmem>>, vector<80x160xf32>
    %cst_33 = arith.constant dense<0.000000e+00> : vector<80x64xf32>
    %179 = tpu.matmul %178, %177, %cst_33 {dimension_numbers = #tpu.dot_dimension_numbers<[1], [0], [0], [1], [0, 0, 1, 1], [], []>} : vector<80x160xf32>, vector<160x64xf32>, vector<80x64xf32> -> vector<80x64xf32>
    %c0_34 = arith.constant 0 : index
    %c0_35 = arith.constant 0 : index
    %180 = vector.load %arg13[%c0_34, %c0_35] : memref<80x160xf32, #tpu.memory_space<vmem>>, vector<80x160xf32>
    %cst_36 = arith.constant dense<0.000000e+00> : vector<80x64xf32>
    %181 = tpu.matmul %180, %177, %cst_36 {dimension_numbers = #tpu.dot_dimension_numbers<[1], [0], [0], [1], [0, 0, 1, 1], [], []>} : vector<80x160xf32>, vector<160x64xf32>, vector<80x64xf32> -> vector<80x64xf32>
    %182 = arith.maximumf %179, %181 : vector<80x64xf32>
    %c0_37 = arith.constant 0 : index
    %c0_38 = arith.constant 0 : index
    %c0_39 = arith.constant 0 : index
    %183 = vector.load %arg14[%c0_37, %c0_38, %c0_39] : memref<5x64x8xf32, #tpu.memory_space<vmem>>, vector<5x64x8xf32>
    %184 = vector.extract_strided_slice %183 {offsets = [0, 0, 0], sizes = [1, 64, 8], strides = [1, 1, 1]} : vector<5x64x8xf32> to vector<1x64x8xf32>
    %185 = vector.shape_cast %184 : vector<1x64x8xf32> to vector<64x8xf32>
    %cst_40 = arith.constant dense<0.000000e+00> : vector<80x8xf32>
    %186 = tpu.matmul %182, %185, %cst_40 {dimension_numbers = #tpu.dot_dimension_numbers<[1], [0], [0], [1], [0, 0, 1, 1], [], []>} : vector<80x64xf32>, vector<64x8xf32>, vector<80x8xf32> -> vector<80x8xf32>
    %187 = vector.extract_strided_slice %183 {offsets = [1, 0, 0], sizes = [1, 64, 8], strides = [1, 1, 1]} : vector<5x64x8xf32> to vector<1x64x8xf32>
    %188 = vector.shape_cast %187 : vector<1x64x8xf32> to vector<64x8xf32>
    %cst_41 = arith.constant dense<0.000000e+00> : vector<80x8xf32>
    %189 = tpu.matmul %182, %188, %cst_41 {dimension_numbers = #tpu.dot_dimension_numbers<[1], [0], [0], [1], [0, 0, 1, 1], [], []>} : vector<80x64xf32>, vector<64x8xf32>, vector<80x8xf32> -> vector<80x8xf32>
    %190 = vector.extract_strided_slice %183 {offsets = [2, 0, 0], sizes = [1, 64, 8], strides = [1, 1, 1]} : vector<5x64x8xf32> to vector<1x64x8xf32>
    %191 = vector.shape_cast %190 : vector<1x64x8xf32> to vector<64x8xf32>
    %cst_42 = arith.constant dense<0.000000e+00> : vector<80x8xf32>
    %192 = tpu.matmul %182, %191, %cst_42 {dimension_numbers = #tpu.dot_dimension_numbers<[1], [0], [0], [1], [0, 0, 1, 1], [], []>} : vector<80x64xf32>, vector<64x8xf32>, vector<80x8xf32> -> vector<80x8xf32>
    %193 = vector.extract_strided_slice %183 {offsets = [3, 0, 0], sizes = [1, 64, 8], strides = [1, 1, 1]} : vector<5x64x8xf32> to vector<1x64x8xf32>
    %194 = vector.shape_cast %193 : vector<1x64x8xf32> to vector<64x8xf32>
    %cst_43 = arith.constant dense<0.000000e+00> : vector<80x8xf32>
    %195 = tpu.matmul %182, %194, %cst_43 {dimension_numbers = #tpu.dot_dimension_numbers<[1], [0], [0], [1], [0, 0, 1, 1], [], []>} : vector<80x64xf32>, vector<64x8xf32>, vector<80x8xf32> -> vector<80x8xf32>
    %196 = vector.extract_strided_slice %183 {offsets = [4, 0, 0], sizes = [1, 64, 8], strides = [1, 1, 1]} : vector<5x64x8xf32> to vector<1x64x8xf32>
    %197 = vector.shape_cast %196 : vector<1x64x8xf32> to vector<64x8xf32>
    %cst_44 = arith.constant dense<0.000000e+00> : vector<80x8xf32>
    %198 = tpu.matmul %182, %197, %cst_44 {dimension_numbers = #tpu.dot_dimension_numbers<[1], [0], [0], [1], [0, 0, 1, 1], [], []>} : vector<80x64xf32>, vector<64x8xf32>, vector<80x8xf32> -> vector<80x8xf32>
    %199 = tpu.concatenate %186, %189, %192, %195, %198 in 0 : vector<80x8xf32>, vector<80x8xf32>, vector<80x8xf32>, vector<80x8xf32>, vector<80x8xf32> -> vector<400x8xf32>
    %c0_45 = arith.constant 0 : index
    %c0_46 = arith.constant 0 : index
    %200 = vector.load %arg15[%c0_45, %c0_46] : memref<128x400xf32, #tpu.memory_space<vmem>>, vector<128x400xf32>
    %cst_47 = arith.constant dense<0.000000e+00> : vector<128x8xf32>
    %201 = tpu.matmul %200, %199, %cst_47 {dimension_numbers = #tpu.dot_dimension_numbers<[1], [0], [0], [1], [0, 0, 1, 1], [], []>} : vector<128x400xf32>, vector<400x8xf32>, vector<128x8xf32> -> vector<128x8xf32>
    %c0_48 = arith.constant 0 : index
    %c0_49 = arith.constant 0 : index
    %202 = vector.load %arg16[%c0_48, %c0_49] : memref<128x1xf32, #tpu.memory_space<vmem>>, vector<128x1xf32>
    %203 = vector.broadcast %202 : vector<128x1xf32> to vector<128x8xf32>
    %204 = arith.addf %201, %203 : vector<128x8xf32>
    %cst_50 = arith.constant 0.000000e+00 : f32
    %205 = vector.broadcast %cst_50 : f32 to vector<128x8xf32>
    %206 = arith.maximumf %204, %205 : vector<128x8xf32>
    %c0_51 = arith.constant 0 : index
    %c0_52 = arith.constant 0 : index
    %207 = vector.load %arg17[%c0_51, %c0_52] : memref<128x128xf32, #tpu.memory_space<vmem>>, vector<128x128xf32>
    %cst_53 = arith.constant dense<0.000000e+00> : vector<128x8xf32>
    %208 = tpu.matmul %207, %206, %cst_53 {dimension_numbers = #tpu.dot_dimension_numbers<[1], [0], [0], [1], [0, 0, 1, 1], [], []>} : vector<128x128xf32>, vector<128x8xf32>, vector<128x8xf32> -> vector<128x8xf32>
    %c0_54 = arith.constant 0 : index
    %c0_55 = arith.constant 0 : index
    %209 = vector.load %arg18[%c0_54, %c0_55] : memref<128x1xf32, #tpu.memory_space<vmem>>, vector<128x1xf32>
    %210 = vector.broadcast %209 : vector<128x1xf32> to vector<128x8xf32>
    %211 = arith.addf %208, %210 : vector<128x8xf32>
    %cst_56 = arith.constant 0.000000e+00 : f32
    %212 = vector.broadcast %cst_56 : f32 to vector<128x8xf32>
    %213 = arith.maximumf %211, %212 : vector<128x8xf32>
    %c0_57 = arith.constant 0 : index
    %c0_58 = arith.constant 0 : index
    %214 = vector.load %arg19[%c0_57, %c0_58] : memref<128x128xf32, #tpu.memory_space<vmem>>, vector<128x128xf32>
    %cst_59 = arith.constant dense<0.000000e+00> : vector<128x8xf32>
    %215 = tpu.matmul %214, %213, %cst_59 {dimension_numbers = #tpu.dot_dimension_numbers<[1], [0], [0], [1], [0, 0, 1, 1], [], []>} : vector<128x128xf32>, vector<128x8xf32>, vector<128x8xf32> -> vector<128x8xf32>
    %c0_60 = arith.constant 0 : index
    %c0_61 = arith.constant 0 : index
    %216 = vector.load %arg20[%c0_60, %c0_61] : memref<128x1xf32, #tpu.memory_space<vmem>>, vector<128x1xf32>
    %217 = vector.broadcast %216 : vector<128x1xf32> to vector<128x8xf32>
    %218 = arith.addf %215, %217 : vector<128x8xf32>
    %c0_62 = arith.constant 0 : index
    %c0_63 = arith.constant 0 : index
    %c0_64 = arith.constant 0 : index
    %219 = vector.load %arg21[%c0_62, %c0_63, %c0_64] : memref<1x128x8xf32, #tpu.memory_space<vmem>>, vector<1x128x8xf32>
    %220 = vector.shape_cast %219 : vector<1x128x8xf32> to vector<128x8xf32>
    %221 = vector.shape_cast %218 : vector<128x8xf32> to vector<1x128x8xf32>
    tpu.vector_store %arg21[%c0_62, %c0_63, %c0_64], %221 {strides = array<i32>} : memref<1x128x8xf32, #tpu.memory_space<vmem>>, vector<1x128x8xf32>,
    return
  }
  func.func @transform_0(%arg0: i32) -> (i32, i32, i32) {
    %c0_i32 = arith.constant 0 : i32
    %c0_i32_0 = arith.constant 0 : i32
    %c0_i32_1 = arith.constant 0 : i32
    return %c0_i32, %c0_i32_0, %arg0 : i32, i32, i32
  }
  func.func @transform_1(%arg0: i32) -> (i32, i32) {
    %c0_i32 = arith.constant 0 : i32
    %c0_i32_0 = arith.constant 0 : i32
    %c0_i32_1 = arith.constant 0 : i32
    return %c0_i32, %c0_i32_0 : i32, i32
  }
  func.func @transform_2(%arg0: i32) -> (i32, i32) {
    %c0_i32 = arith.constant 0 : i32
    %c0_i32_0 = arith.constant 0 : i32
    %c0_i32_1 = arith.constant 0 : i32
    return %c0_i32, %c0_i32_0 : i32, i32
  }
  func.func @transform_3(%arg0: i32) -> (i32, i32) {
    %c0_i32 = arith.constant 0 : i32
    %c0_i32_0 = arith.constant 0 : i32
    %c0_i32_1 = arith.constant 0 : i32
    return %c0_i32, %c0_i32_0 : i32, i32
  }
  func.func @transform_4(%arg0: i32) -> (i32, i32) {
    %c0_i32 = arith.constant 0 : i32
    %c0_i32_0 = arith.constant 0 : i32
    %c0_i32_1 = arith.constant 0 : i32
    return %c0_i32, %c0_i32_0 : i32, i32
  }
  func.func @transform_5(%arg0: i32) -> (i32, i32) {
    %c0_i32 = arith.constant 0 : i32
    %c0_i32_0 = arith.constant 0 : i32
    %c0_i32_1 = arith.constant 0 : i32
    return %c0_i32, %c0_i32_0 : i32, i32
  }
  func.func @transform_6(%arg0: i32) -> (i32, i32) {
    %c0_i32 = arith.constant 0 : i32
    %c0_i32_0 = arith.constant 0 : i32
    %c0_i32_1 = arith.constant 0 : i32
    return %c0_i32, %c0_i32_0 : i32, i32
  }
  func.func @transform_7(%arg0: i32) -> (i32, i32) {
    %c0_i32 = arith.constant 0 : i32
    %c0_i32_0 = arith.constant 0 : i32
    %c0_i32_1 = arith.constant 0 : i32
    return %c0_i32, %c0_i32_0 : i32, i32
  }
  func.func @transform_8(%arg0: i32) -> (i32, i32) {
    %c0_i32 = arith.constant 0 : i32
    %c0_i32_0 = arith.constant 0 : i32
    %c0_i32_1 = arith.constant 0 : i32
    return %c0_i32, %c0_i32_0 : i32, i32
  }
  func.func @transform_9(%arg0: i32) -> (i32, i32) {
    %c0_i32 = arith.constant 0 : i32
    %c0_i32_0 = arith.constant 0 : i32
    %c0_i32_1 = arith.constant 0 : i32
    return %c0_i32, %c0_i32_0 : i32, i32
  }
  func.func @transform_10(%arg0: i32) -> (i32, i32) {
    %c0_i32 = arith.constant 0 : i32
    %c0_i32_0 = arith.constant 0 : i32
    %c0_i32_1 = arith.constant 0 : i32
    return %c0_i32, %c0_i32_0 : i32, i32
  }
  func.func @transform_11(%arg0: i32) -> (i32, i32) {
    %c0_i32 = arith.constant 0 : i32
    %c0_i32_0 = arith.constant 0 : i32
    %c0_i32_1 = arith.constant 0 : i32
    return %c0_i32, %c0_i32_0 : i32, i32
  }
  func.func @transform_12(%arg0: i32) -> (i32, i32) {
    %c0_i32 = arith.constant 0 : i32
    %c0_i32_0 = arith.constant 0 : i32
    %c0_i32_1 = arith.constant 0 : i32
    return %c0_i32, %c0_i32_0 : i32, i32
  }
  func.func @transform_13(%arg0: i32) -> (i32, i32, i32) {
    %c0_i32 = arith.constant 0 : i32
    %c0_i32_0 = arith.constant 0 : i32
    %c0_i32_1 = arith.constant 0 : i32
    %c0_i32_2 = arith.constant 0 : i32
    return %c0_i32, %c0_i32_0, %c0_i32_1 : i32, i32, i32
  }
  func.func @transform_14(%arg0: i32) -> (i32, i32) {
    %c0_i32 = arith.constant 0 : i32
    %c0_i32_0 = arith.constant 0 : i32
    %c0_i32_1 = arith.constant 0 : i32
    return %c0_i32, %c0_i32_0 : i32, i32
  }
  func.func @transform_15(%arg0: i32) -> (i32, i32) {
    %c0_i32 = arith.constant 0 : i32
    %c0_i32_0 = arith.constant 0 : i32
    %c0_i32_1 = arith.constant 0 : i32
    return %c0_i32, %c0_i32_0 : i32, i32
  }
  func.func @transform_16(%arg0: i32) -> (i32, i32) {
    %c0_i32 = arith.constant 0 : i32
    %c0_i32_0 = arith.constant 0 : i32
    %c0_i32_1 = arith.constant 0 : i32
    return %c0_i32, %c0_i32_0 : i32, i32
  }
  func.func @transform_17(%arg0: i32) -> (i32, i32) {
    %c0_i32 = arith.constant 0 : i32
    %c0_i32_0 = arith.constant 0 : i32
    %c0_i32_1 = arith.constant 0 : i32
    return %c0_i32, %c0_i32_0 : i32, i32
  }
  func.func @transform_18(%arg0: i32) -> (i32, i32) {
    %c0_i32 = arith.constant 0 : i32
    %c0_i32_0 = arith.constant 0 : i32
    %c0_i32_1 = arith.constant 0 : i32
    return %c0_i32, %c0_i32_0 : i32, i32
  }
  func.func @transform_19(%arg0: i32) -> (i32, i32) {
    %c0_i32 = arith.constant 0 : i32
    %c0_i32_0 = arith.constant 0 : i32
    %c0_i32_1 = arith.constant 0 : i32
    return %c0_i32, %c0_i32_0 : i32, i32
  }
  func.func @transform_20(%arg0: i32) -> (i32, i32, i32) {
    %c0_i32 = arith.constant 0 : i32
    %c0_i32_0 = arith.constant 0 : i32
    %c0_i32_1 = arith.constant 0 : i32
    return %arg0, %c0_i32, %c0_i32_0 : i32, i32, i32
  }
}

</mosaic_0001>

<llo_original>
// kernel: net_forward.1
$region0: #{net_forward.1}
  #allocation0 [shape = 'u32[]', space=smem, size = 0x4, offset = 0x4, fixed_abs, tag = 'smem constant byte address 0x4 - core index']
  #allocation1 [shape = 'u32[72,128]{1,0:T(1,128)}', space=vmem, size = 0x9000, scoped, tag = 'internal scratch']
  %s0 = inlined_call_operand.vmem [shape: f32[3,32,512], index: 0, kind: input, shape index: {}]
  %s1 = inlined_call_operand.vmem [shape: f32[168,480], index: 1, kind: input, shape index: {}]
  %s2 = inlined_call_operand.vmem [shape: f32[168,1], index: 2, kind: input, shape index: {}]
  %s3 = inlined_call_operand.vmem [shape: f32[160,480], index: 3, kind: input, shape index: {}]
  %s4 = inlined_call_operand.vmem [shape: f32[160,1], index: 4, kind: input, shape index: {}]
  %s5 = inlined_call_operand.vmem [shape: f32[256,128], index: 5, kind: input, shape index: {}]
  %s6 = inlined_call_operand.vmem [shape: f32[256,128], index: 6, kind: input, shape index: {}]
  %s7 = inlined_call_operand.vmem [shape: f32[96,168], index: 7, kind: input, shape index: {}]
  %s8 = inlined_call_operand.vmem [shape: f32[96,168], index: 8, kind: input, shape index: {}]
  %s9 = inlined_call_operand.vmem [shape: f32[128,64], index: 9, kind: input, shape index: {}]
  %s10 = inlined_call_operand.vmem [shape: f32[128,64], index: 10, kind: input, shape index: {}]
  %s11 = inlined_call_operand.vmem [shape: f32[80,160], index: 11, kind: input, shape index: {}]
  %s12 = inlined_call_operand.vmem [shape: f32[80,160], index: 12, kind: input, shape index: {}]
  %s13 = inlined_call_operand.vmem [shape: f32[5,64,8], index: 13, kind: input, shape index: {}]
  %s14 = inlined_call_operand.vmem [shape: f32[128,400], index: 14, kind: input, shape index: {}]
  %s15 = inlined_call_operand.vmem [shape: f32[128,1], index: 15, kind: input, shape index: {}]
  %s16 = inlined_call_operand.vmem [shape: f32[128,128], index: 16, kind: input, shape index: {}]
  %s17 = inlined_call_operand.vmem [shape: f32[128,1], index: 17, kind: input, shape index: {}]
  %s18 = inlined_call_operand.vmem [shape: f32[128,128], index: 18, kind: input, shape index: {}]
  %s19 = inlined_call_operand.vmem [shape: f32[128,1], index: 19, kind: input, shape index: {}]
  %s20 = inlined_call_operand.vmem [shape: f32[2,128,8], index: 20, kind: output, shape index: {}]
  %s21 = sld [smem:[#allocation0]]
  $region136: #{net_forward.1} parent=0
    _
  %s23 = ssub.s32 1, %s21
  %s24 = scalar_select 0, %s23, %s21
  $region1: #{net_forward.1} parent=0
    #allocation2 [shape = 'u8[196608]{0}', space=vmem, size = 0x30000, scoped, tag = 'input window, operand 0']
    loop: start=0, step=1, limit=4
    $region2: #{net_forward.1} parent=1 // loop_pre_header
      _
    $region3: #{net_forward.1} parent=1 // loop_header
      %s26 = sphi 0, %s30
      %p27 = scmp.ge.s32.totalorder %s26, 4
      %s36 = sphi 0, %s38
      %s39 = sphi 0, %s36
      %s40 = sphi 0, %s39
      %s56 = sphi 0, %s40
      %s60 = sphi 0, %s60
      %s62 = sphi 0, %s60
      %s63 = sphi 0, %s62
      %s77 = sphi 0, %s63
      %s81 = sphi 0, %s81
      %s83 = sphi 0, %s81
      %s84 = sphi 0, %s83
      %s98 = sphi 0, %s84
      %s102 = sphi 0, %s102
      %s104 = sphi 0, %s102
      %s105 = sphi 0, %s104
      %s119 = sphi 0, %s105
      %s123 = sphi 0, %s123
      %s125 = sphi 0, %s123
      %s126 = sphi 0, %s125
      %s140 = sphi 0, %s126
      %s144 = sphi 0, %s144
      %s146 = sphi 0, %s144
      %s147 = sphi 0, %s146
      %s161 = sphi 0, %s147
      %s165 = sphi 0, %s165
      %s167 = sphi 0, %s165
      %s168 = sphi 0, %s167
      %s182 = sphi 0, %s168
      %s186 = sphi 0, %s186
      %s188 = sphi 0, %s186
      %s189 = sphi 0, %s188
      %s203 = sphi 0, %s189
      %s207 = sphi 0, %s207
      %s209 = sphi 0, %s207
      %s210 = sphi 0, %s209
      %s224 = sphi 0, %s210
      %s228 = sphi 0, %s228
      %s230 = sphi 0, %s228
      %s231 = sphi 0, %s230
      %s245 = sphi 0, %s231
      %s249 = sphi 0, %s249
      %s251 = sphi 0, %s249
      %s252 = sphi 0, %s251
      %s266 = sphi 0, %s252
      %s270 = sphi 0, %s270
      %s272 = sphi 0, %s270
      %s273 = sphi 0, %s272
      %s287 = sphi 0, %s273
      %s291 = sphi 0, %s291
      %s293 = sphi 0, %s291
      %s294 = sphi 0, %s293
      %s308 = sphi 0, %s294
      %s312 = sphi 0, %s312
      %s314 = sphi 0, %s312
      %s315 = sphi 0, %s314
      %s329 = sphi 0, %s315
      %s333 = sphi 0, %s333
      %s335 = sphi 0, %s333
      %s336 = sphi 0, %s335
      %s350 = sphi 0, %s336
      %s354 = sphi 0, %s354
      %s356 = sphi 0, %s354
      %s357 = sphi 0, %s356
      %s371 = sphi 0, %s357
      %s375 = sphi 0, %s375
      %s377 = sphi 0, %s375
      %s378 = sphi 0, %s377
      %s392 = sphi 0, %s378
      %s396 = sphi 0, %s396
      %s398 = sphi 0, %s396
      %s399 = sphi 0, %s398
      %s413 = sphi 0, %s399
      %s417 = sphi 0, %s417
      %s419 = sphi 0, %s417
      %s420 = sphi 0, %s419
      %s434 = sphi 0, %s420
      %s438 = sphi 0, %s438
      %s440 = sphi 0, %s438
      %s441 = sphi 0, %s440
      %s455 = sphi 0, %s441
      %s461 = sphi 0, %s463
      %s464 = sphi 0, %s461
      %s465 = sphi 0, %s464
      %s481 = sphi 0, %s465
    $region4: #{net_forward.1} parent=1 // loop_header_branch
      %29 = sbr.rel (%p27) target = $region8
    $region5: #{net_forward.1} parent=1 // loop_body
      %s31 = ssub.s32 %s26, 1
      %s32 = ssub.s32 %s26, 2
      %s33 = sadd.s32 %s26, 1
      %s34 = ssub.s32 %s26, %s33
      %p35 = scmp.eq.s32.totalorder %s34, 0
      %s37 = sadd.s32 %s36, 1
      %s38 = scalar_select %p35, %s36, %s37
      %p41 = pneg %p35
      %p42 = scmp.eq.s32.totalorder %s26, 1
      %p43 = por %p41, %p42
      %p44 = scmp.ne.s32.totalorder %s36, %s39
      %p45 = scmp.eq.s32.totalorder %s26, 0
      %p46 = por %p44, %p45
      %p47 = scmp.ne.s32.totalorder %s36, %s39
      %p48 = scmp.eq.s32.totalorder %s31, 1
      %p49 = por %p47, %p48
      %p50 = scmp.ne.s32.totalorder %s39, %s40
      %p51 = scmp.eq.s32.totalorder %s31, 0
      %p52 = por %p50, %p51
      %p53 = scmp.ne.s32.totalorder %s39, %s40
      %p54 = scmp.eq.s32.totalorder %s32, 1
      %p55 = por %p53, %p54
      %p57 = scmp.ne.s32.totalorder %s40, %s56
      %p58 = scmp.eq.s32.totalorder %s32, 0
      %p59 = por %p57, %p58
      %s61 = sadd.s32 %s60, 1
      %p64 = scmp.eq.s32.totalorder %s26, 1
      %p65 = scmp.ne.s32.totalorder %s60, %s62
      %p66 = scmp.eq.s32.totalorder %s26, 0
      %p67 = por %p65, %p66
      %p68 = scmp.ne.s32.totalorder %s60, %s62
      %p69 = scmp.eq.s32.totalorder %s31, 1
      %p70 = por %p68, %p69
      %p71 = scmp.ne.s32.totalorder %s62, %s63
      %p72 = scmp.eq.s32.totalorder %s31, 0
      %p73 = por %p71, %p72
      %p74 = scmp.ne.s32.totalorder %s62, %s63
      %p75 = scmp.eq.s32.totalorder %s32, 1
      %p76 = por %p74, %p75
      %p78 = scmp.ne.s32.totalorder %s63, %s77
      %p79 = scmp.eq.s32.totalorder %s32, 0
      %p80 = por %p78, %p79
      %s82 = sadd.s32 %s81, 1
      %p85 = scmp.eq.s32.totalorder %s26, 1
      %p86 = scmp.ne.s32.totalorder %s81, %s83
      %p87 = scmp.eq.s32.totalorder %s26, 0
      %p88 = por %p86, %p87
      %p89 = scmp.ne.s32.totalorder %s81, %s83
      %p90 = scmp.eq.s32.totalorder %s31, 1
      %p91 = por %p89, %p90
      %p92 = scmp.ne.s32.totalorder %s83, %s84
      %p93 = scmp.eq.s32.totalorder %s31, 0
      %p94 = por %p92, %p93
      %p95 = scmp.ne.s32.totalorder %s83, %s84
      %p96 = scmp.eq.s32.totalorder %s32, 1
      %p97 = por %p95, %p96
      %p99 = scmp.ne.s32.totalorder %s84, %s98
      %p100 = scmp.eq.s32.totalorder %s32, 0
      %p101 = por %p99, %p100
      %s103 = sadd.s32 %s102, 1
      %p106 = scmp.eq.s32.totalorder %s26, 1
      %p107 = scmp.ne.s32.totalorder %s102, %s104
      %p108 = scmp.eq.s32.totalorder %s26, 0
      %p109 = por %p107, %p108
      %p110 = scmp.ne.s32.totalorder %s102, %s104
      %p111 = scmp.eq.s32.totalorder %s31, 1
      %p112 = por %p110, %p111
      %p113 = scmp.ne.s32.totalorder %s104, %s105
      %p114 = scmp.eq.s32.totalorder %s31, 0
      %p115 = por %p113, %p114
      %p116 = scmp.ne.s32.totalorder %s104, %s105
      %p117 = scmp.eq.s32.totalorder %s32, 1
      %p118 = por %p116, %p117
      %p120 = scmp.ne.s32.totalorder %s105, %s119
      %p121 = scmp.eq.s32.totalorder %s32, 0
      %p122 = por %p120, %p121
      %s124 = sadd.s32 %s123, 1
      %p127 = scmp.eq.s32.totalorder %s26, 1
      %p128 = scmp.ne.s32.totalorder %s123, %s125
      %p129 = scmp.eq.s32.totalorder %s26, 0
      %p130 = por %p128, %p129
      %p131 = scmp.ne.s32.totalorder %s123, %s125
      %p132 = scmp.eq.s32.totalorder %s31, 1
      %p133 = por %p131, %p132
      %p134 = scmp.ne.s32.totalorder %s125, %s126
      %p135 = scmp.eq.s32.totalorder %s31, 0
      %p136 = por %p134, %p135
      %p137 = scmp.ne.s32.totalorder %s125, %s126
      %p138 = scmp.eq.s32.totalorder %s32, 1
      %p139 = por %p137, %p138
      %p141 = scmp.ne.s32.totalorder %s126, %s140
      %p142 = scmp.eq.s32.totalorder %s32, 0
      %p143 = por %p141, %p142
      %s145 = sadd.s32 %s144, 1
      %p148 = scmp.eq.s32.totalorder %s26, 1
      %p149 = scmp.ne.s32.totalorder %s144, %s146
      %p150 = scmp.eq.s32.totalorder %s26, 0
      %p151 = por %p149, %p150
      %p152 = scmp.ne.s32.totalorder %s144, %s146
      %p153 = scmp.eq.s32.totalorder %s31, 1
      %p154 = por %p152, %p153
      %p155 = scmp.ne.s32.totalorder %s146, %s147
      %p156 = scmp.eq.s32.totalorder %s31, 0
      %p157 = por %p155, %p156
      %p158 = scmp.ne.s32.totalorder %s146, %s147
      %p159 = scmp.eq.s32.totalorder %s32, 1
      %p160 = por %p158, %p159
      %p162 = scmp.ne.s32.totalorder %s147, %s161
      %p163 = scmp.eq.s32.totalorder %s32, 0
      %p164 = por %p162, %p163
      %s166 = sadd.s32 %s165, 1
      %p169 = scmp.eq.s32.totalorder %s26, 1
      %p170 = scmp.ne.s32.totalorder %s165, %s167
      %p171 = scmp.eq.s32.totalorder %s26, 0
      %p172 = por %p170, %p171
      %p173 = scmp.ne.s32.totalorder %s165, %s167
      %p174 = scmp.eq.s32.totalorder %s31, 1
      %p175 = por %p173, %p174
      %p176 = scmp.ne.s32.totalorder %s167, %s168
      %p177 = scmp.eq.s32.totalorder %s31, 0
      %p178 = por %p176, %p177
      %p179 = scmp.ne.s32.totalorder %s167, %s168
      %p180 = scmp.eq.s32.totalorder %s32, 1
      %p181 = por %p179, %p180
      %p183 = scmp.ne.s32.totalorder %s168, %s182
      %p184 = scmp.eq.s32.totalorder %s32, 0
      %p185 = por %p183, %p184
      %s187 = sadd.s32 %s186, 1
      %p190 = scmp.eq.s32.totalorder %s26, 1
      %p191 = scmp.ne.s32.totalorder %s186, %s188
      %p192 = scmp.eq.s32.totalorder %s26, 0
      %p193 = por %p191, %p192
      %p194 = scmp.ne.s32.totalorder %s186, %s188
      %p195 = scmp.eq.s32.totalorder %s31, 1
      %p196 = por %p194, %p195
      %p197 = scmp.ne.s32.totalorder %s188, %s189
      %p198 = scmp.eq.s32.totalorder %s31, 0
      %p199 = por %p197, %p198
      %p200 = scmp.ne.s32.totalorder %s188, %s189
      %p201 = scmp.eq.s32.totalorder %s32, 1
      %p202 = por %p200, %p201
      %p204 = scmp.ne.s32.totalorder %s189, %s203
      %p205 = scmp.eq.s32.totalorder %s32, 0
      %p206 = por %p204, %p205
      %s208 = sadd.s32 %s207, 1
      %p211 = scmp.eq.s32.totalorder %s26, 1
      %p212 = scmp.ne.s32.totalorder %s207, %s209
      %p213 = scmp.eq.s32.totalorder %s26, 0
      %p214 = por %p212, %p213
      %p215 = scmp.ne.s32.totalorder %s207, %s209
      %p216 = scmp.eq.s32.totalorder %s31, 1
      %p217 = por %p215, %p216
      %p218 = scmp.ne.s32.totalorder %s209, %s210
      %p219 = scmp.eq.s32.totalorder %s31, 0
      %p220 = por %p218, %p219
      %p221 = scmp.ne.s32.totalorder %s209, %s210
      %p222 = scmp.eq.s32.totalorder %s32, 1
      %p223 = por %p221, %p222
      %p225 = scmp.ne.s32.totalorder %s210, %s224
      %p226 = scmp.eq.s32.totalorder %s32, 0
      %p227 = por %p225, %p226
      %s229 = sadd.s32 %s228, 1
      %p232 = scmp.eq.s32.totalorder %s26, 1
      %p233 = scmp.ne.s32.totalorder %s228, %s230
      %p234 = scmp.eq.s32.totalorder %s26, 0
      %p235 = por %p233, %p234
      %p236 = scmp.ne.s32.totalorder %s228, %s230
      %p237 = scmp.eq.s32.totalorder %s31, 1
      %p238 = por %p236, %p237
      %p239 = scmp.ne.s32.totalorder %s230, %s231
      %p240 = scmp.eq.s32.totalorder %s31, 0
      %p241 = por %p239, %p240
      %p242 = scmp.ne.s32.totalorder %s230, %s231
      %p243 = scmp.eq.s32.totalorder %s32, 1
      %p244 = por %p242, %p243
      %p246 = scmp.ne.s32.totalorder %s231, %s245
      %p247 = scmp.eq.s32.totalorder %s32, 0
      %p248 = por %p246, %p247
      %s250 = sadd.s32 %s249, 1
      %p253 = scmp.eq.s32.totalorder %s26, 1
      %p254 = scmp.ne.s32.totalorder %s249, %s251
      %p255 = scmp.eq.s32.totalorder %s26, 0
      %p256 = por %p254, %p255
      %p257 = scmp.ne.s32.totalorder %s249, %s251
      %p258 = scmp.eq.s32.totalorder %s31, 1
      %p259 = por %p257, %p258
      %p260 = scmp.ne.s32.totalorder %s251, %s252
      %p261 = scmp.eq.s32.totalorder %s31, 0
      %p262 = por %p260, %p261
      %p263 = scmp.ne.s32.totalorder %s251, %s252
      %p264 = scmp.eq.s32.totalorder %s32, 1
      %p265 = por %p263, %p264
      %p267 = scmp.ne.s32.totalorder %s252, %s266
      %p268 = scmp.eq.s32.totalorder %s32, 0
      %p269 = por %p267, %p268
      %s271 = sadd.s32 %s270, 1
      %p274 = scmp.eq.s32.totalorder %s26, 1
      %p275 = scmp.ne.s32.totalorder %s270, %s272
      %p276 = scmp.eq.s32.totalorder %s26, 0
      %p277 = por %p275, %p276
      %p278 = scmp.ne.s32.totalorder %s270, %s272
      %p279 = scmp.eq.s32.totalorder %s31, 1
      %p280 = por %p278, %p279
      %p281 = scmp.ne.s32.totalorder %s272, %s273
      %p282 = scmp.eq.s32.totalorder %s31, 0
      %p283 = por %p281, %p282
      %p284 = scmp.ne.s32.totalorder %s272, %s273
      %p285 = scmp.eq.s32.totalorder %s32, 1
      %p286 = por %p284, %p285
      %p288 = scmp.ne.s32.totalorder %s273, %s287
      %p289 = scmp.eq.s32.totalorder %s32, 0
      %p290 = por %p288, %p289
      %s292 = sadd.s32 %s291, 1
      %p295 = scmp.eq.s32.totalorder %s26, 1
      %p296 = scmp.ne.s32.totalorder %s291, %s293
      %p297 = scmp.eq.s32.totalorder %s26, 0
      %p298 = por %p296, %p297
      %p299 = scmp.ne.s32.totalorder %s291, %s293
      %p300 = scmp.eq.s32.totalorder %s31, 1
      %p301 = por %p299, %p300
      %p302 = scmp.ne.s32.totalorder %s293, %s294
      %p303 = scmp.eq.s32.totalorder %s31, 0
      %p304 = por %p302, %p303
      %p305 = scmp.ne.s32.totalorder %s293, %s294
      %p306 = scmp.eq.s32.totalorder %s32, 1
      %p307 = por %p305, %p306
      %p309 = scmp.ne.s32.totalorder %s294, %s308
      %p310 = scmp.eq.s32.totalorder %s32, 0
      %p311 = por %p309, %p310
      %s313 = sadd.s32 %s312, 1
      %p316 = scmp.eq.s32.totalorder %s26, 1
      %p317 = scmp.ne.s32.totalorder %s312, %s314
      %p318 = scmp.eq.s32.totalorder %s26, 0
      %p319 = por %p317, %p318
      %p320 = scmp.ne.s32.totalorder %s312, %s314
      %p321 = scmp.eq.s32.totalorder %s31, 1
      %p322 = por %p320, %p321
      %p323 = scmp.ne.s32.totalorder %s314, %s315
      %p324 = scmp.eq.s32.totalorder %s31, 0
      %p325 = por %p323, %p324
      %p326 = scmp.ne.s32.totalorder %s314, %s315
      %p327 = scmp.eq.s32.totalorder %s32, 1
      %p328 = por %p326, %p327
      %p330 = scmp.ne.s32.totalorder %s315, %s329
      %p331 = scmp.eq.s32.totalorder %s32, 0
      %p332 = por %p330, %p331
      %s334 = sadd.s32 %s333, 1
      %p337 = scmp.eq.s32.totalorder %s26, 1
      %p338 = scmp.ne.s32.totalorder %s333, %s335
      %p339 = scmp.eq.s32.totalorder %s26, 0
      %p340 = por %p338, %p339
      %p341 = scmp.ne.s32.totalorder %s333, %s335
      %p342 = scmp.eq.s32.totalorder %s31, 1
      %p343 = por %p341, %p342
      %p344 = scmp.ne.s32.totalorder %s335, %s336
      %p345 = scmp.eq.s32.totalorder %s31, 0
      %p346 = por %p344, %p345
      %p347 = scmp.ne.s32.totalorder %s335, %s336
      %p348 = scmp.eq.s32.totalorder %s32, 1
      %p349 = por %p347, %p348
      %p351 = scmp.ne.s32.totalorder %s336, %s350
      %p352 = scmp.eq.s32.totalorder %s32, 0
      %p353 = por %p351, %p352
      %s355 = sadd.s32 %s354, 1
      %p358 = scmp.eq.s32.totalorder %s26, 1
      %p359 = scmp.ne.s32.totalorder %s354, %s356
      %p360 = scmp.eq.s32.totalorder %s26, 0
      %p361 = por %p359, %p360
      %p362 = scmp.ne.s32.totalorder %s354, %s356
      %p363 = scmp.eq.s32.totalorder %s31, 1
      %p364 = por %p362, %p363
      %p365 = scmp.ne.s32.totalorder %s356, %s357
      %p366 = scmp.eq.s32.totalorder %s31, 0
      %p367 = por %p365, %p366
      %p368 = scmp.ne.s32.totalorder %s356, %s357
      %p369 = scmp.eq.s32.totalorder %s32, 1
      %p370 = por %p368, %p369
      %p372 = scmp.ne.s32.totalorder %s357, %s371
      %p373 = scmp.eq.s32.totalorder %s32, 0
      %p374 = por %p372, %p373
      %s376 = sadd.s32 %s375, 1
      %p379 = scmp.eq.s32.totalorder %s26, 1
      %p380 = scmp.ne.s32.totalorder %s375, %s377
      %p381 = scmp.eq.s32.totalorder %s26, 0
      %p382 = por %p380, %p381
      %p383 = scmp.ne.s32.totalorder %s375, %s377
      %p384 = scmp.eq.s32.totalorder %s31, 1
      %p385 = por %p383, %p384
      %p386 = scmp.ne.s32.totalorder %s377, %s378
      %p387 = scmp.eq.s32.totalorder %s31, 0
      %p388 = por %p386, %p387
      %p389 = scmp.ne.s32.totalorder %s377, %s378
      %p390 = scmp.eq.s32.totalorder %s32, 1
      %p391 = por %p389, %p390
      %p393 = scmp.ne.s32.totalorder %s378, %s392
      %p394 = scmp.eq.s32.totalorder %s32, 0
      %p395 = por %p393, %p394
      %s397 = sadd.s32 %s396, 1
      %p400 = scmp.eq.s32.totalorder %s26, 1
      %p401 = scmp.ne.s32.totalorder %s396, %s398
      %p402 = scmp.eq.s32.totalorder %s26, 0
      %p403 = por %p401, %p402
      %p404 = scmp.ne.s32.totalorder %s396, %s398
      %p405 = scmp.eq.s32.totalorder %s31, 1
      %p406 = por %p404, %p405
      %p407 = scmp.ne.s32.totalorder %s398, %s399
      %p408 = scmp.eq.s32.totalorder %s31, 0
      %p409 = por %p407, %p408
      %p410 = scmp.ne.s32.totalorder %s398, %s399
      %p411 = scmp.eq.s32.totalorder %s32, 1
      %p412 = por %p410, %p411
      %p414 = scmp.ne.s32.totalorder %s399, %s413
      %p415 = scmp.eq.s32.totalorder %s32, 0
      %p416 = por %p414, %p415
      %s418 = sadd.s32 %s417, 1
      %p421 = scmp.eq.s32.totalorder %s26, 1
      %p422 = scmp.ne.s32.totalorder %s417, %s419
      %p423 = scmp.eq.s32.totalorder %s26, 0
      %p424 = por %p422, %p423
      %p425 = scmp.ne.s32.totalorder %s417, %s419
      %p426 = scmp.eq.s32.totalorder %s31, 1
      %p427 = por %p425, %p426
      %p428 = scmp.ne.s32.totalorder %s419, %s420
      %p429 = scmp.eq.s32.totalorder %s31, 0
      %p430 = por %p428, %p429
      %p431 = scmp.ne.s32.totalorder %s419, %s420
      %p432 = scmp.eq.s32.totalorder %s32, 1
      %p433 = por %p431, %p432
      %p435 = scmp.ne.s32.totalorder %s420, %s434
      %p436 = scmp.eq.s32.totalorder %s32, 0
      %p437 = por %p435, %p436
      %s439 = sadd.s32 %s438, 1
      %p442 = scmp.eq.s32.totalorder %s26, 1
      %p443 = scmp.ne.s32.totalorder %s438, %s440
      %p444 = scmp.eq.s32.totalorder %s26, 0
      %p445 = por %p443, %p444
      %p446 = scmp.ne.s32.totalorder %s438, %s440
      %p447 = scmp.eq.s32.totalorder %s31, 1
      %p448 = por %p446, %p447
      %p449 = scmp.ne.s32.totalorder %s440, %s441
      %p450 = scmp.eq.s32.totalorder %s31, 0
      %p451 = por %p449, %p450
      %p452 = scmp.ne.s32.totalorder %s440, %s441
      %p453 = scmp.eq.s32.totalorder %s32, 1
      %p454 = por %p452, %p453
      %p456 = scmp.ne.s32.totalorder %s441, %s455
      %p457 = scmp.eq.s32.totalorder %s32, 0
      %p458 = por %p456, %p457
      %s459 = ssub.s32 %s26, %s33
      %p460 = scmp.eq.s32.totalorder %s459, 0
      %s462 = sadd.s32 %s461, 1
      %s463 = scalar_select %p460, %s461, %s462
      %p466 = pneg %p460
      %p467 = scmp.eq.s32.totalorder %s26, 1
      %p468 = por %p466, %p467
      %p469 = scmp.ne.s32.totalorder %s461, %s464
      %p470 = scmp.eq.s32.totalorder %s26, 0
      %p471 = por %p469, %p470
      %p472 = scmp.ne.s32.totalorder %s461, %s464
      %p473 = scmp.eq.s32.totalorder %s31, 1
      %p474 = por %p472, %p473
      %p475 = scmp.ne.s32.totalorder %s464, %s465
      %p476 = scmp.eq.s32.totalorder %s31, 0
      %p477 = por %p475, %p476
      %p478 = scmp.ne.s32.totalorder %s464, %s465
      %p479 = scmp.eq.s32.totalorder %s32, 1
      %p480 = por %p478, %p479
      %p482 = scmp.ne.s32.totalorder %s465, %s481
      %p483 = scmp.eq.s32.totalorder %s32, 0
      %p484 = por %p482, %p483
      %p485 = scmp.le.s32.totalorder 1, %s26
      %p486 = scmp.lt.s32.totalorder %s26, 3
      %p487 = pnand %p485, %p486
      %p488 = pneg %p487
      // Predicated region
      $region9: #{net_forward.1} parent=5 // pred_check
        _
      $region10: #{net_forward.1} parent=5 // pred_check_branch
        %490 = sbr.rel (%p487) target = $region12
      $region11: #{net_forward.1} parent=5 // pred_region
        %s491 = ssub.s32 %s26, 1
        // Predicated region
        $region13: #{net_forward.1} parent=11 // pred_check
          %p492 = pneg %p73
        $region14: #{net_forward.1} parent=11 // pred_check_branch
          %494 = sbr.rel (%p492) target = $region16
        $region15: #{net_forward.1} parent=11 // pred_region
          _
        $region16: #{net_forward.1} parent=11 // pred_fallthru
          _
        // Predicated region
        $region17: #{net_forward.1} parent=11 // pred_check
          %p495 = pneg %p94
        $region18: #{net_forward.1} parent=11 // pred_check_branch
          %497 = sbr.rel (%p495) target = $region20
        $region19: #{net_forward.1} parent=11 // pred_region
          _
        $region20: #{net_forward.1} parent=11 // pred_fallthru
          _
        // Predicated region
        $region21: #{net_forward.1} parent=11 // pred_check
          %p498 = pneg %p115
        $region22: #{net_forward.1} parent=11 // pred_check_branch
          %500 = sbr.rel (%p498) target = $region24
        $region23: #{net_forward.1} parent=11 // pred_region
          _
        $region24: #{net_forward.1} parent=11 // pred_fallthru
          _
        // Predicated region
        $region25: #{net_forward.1} parent=11 // pred_check
          %p501 = pneg %p136
        $region26: #{net_forward.1} parent=11 // pred_check_branch
          %503 = sbr.rel (%p501) target = $region28
        $region27: #{net_forward.1} parent=11 // pred_region
          _
        $region28: #{net_forward.1} parent=11 // pred_fallthru
          _
        // Predicated region
        $region29: #{net_forward.1} parent=11 // pred_check
          %p504 = pneg %p157
        $region30: #{net_forward.1} parent=11 // pred_check_branch
          %506 = sbr.rel (%p504) target = $region32
        $region31: #{net_forward.1} parent=11 // pred_region
          _
        $region32: #{net_forward.1} parent=11 // pred_fallthru
          _
        // Predicated region
        $region33: #{net_forward.1} parent=11 // pred_check
          %p507 = pneg %p178
        $region34: #{net_forward.1} parent=11 // pred_check_branch
          %509 = sbr.rel (%p507) target = $region36
        $region35: #{net_forward.1} parent=11 // pred_region
          _
        $region36: #{net_forward.1} parent=11 // pred_fallthru
          _
        // Predicated region
        $region37: #{net_forward.1} parent=11 // pred_check
          %p510 = pneg %p199
        $region38: #{net_forward.1} parent=11 // pred_check_branch
          %512 = sbr.rel (%p510) target = $region40
        $region39: #{net_forward.1} parent=11 // pred_region
          _
        $region40: #{net_forward.1} parent=11 // pred_fallthru
          _
        // Predicated region
        $region41: #{net_forward.1} parent=11 // pred_check
          %p513 = pneg %p220
        $region42: #{net_forward.1} parent=11 // pred_check_branch
          %515 = sbr.rel (%p513) target = $region44
        $region43: #{net_forward.1} parent=11 // pred_region
          _
        $region44: #{net_forward.1} parent=11 // pred_fallthru
          _
        // Predicated region
        $region45: #{net_forward.1} parent=11 // pred_check
          %p516 = pneg %p241
        $region46: #{net_forward.1} parent=11 // pred_check_branch
          %518 = sbr.rel (%p516) target = $region48
        $region47: #{net_forward.1} parent=11 // pred_region
          _
        $region48: #{net_forward.1} parent=11 // pred_fallthru
          _
        // Predicated region
        $region49: #{net_forward.1} parent=11 // pred_check
          %p519 = pneg %p262
        $region50: #{net_forward.1} parent=11 // pred_check_branch
          %521 = sbr.rel (%p519) target = $region52
        $region51: #{net_forward.1} parent=11 // pred_region
          _
        $region52: #{net_forward.1} parent=11 // pred_fallthru
          _
        // Predicated region
        $region53: #{net_forward.1} parent=11 // pred_check
          %p522 = pneg %p283
        $region54: #{net_forward.1} parent=11 // pred_check_branch
          %524 = sbr.rel (%p522) target = $region56
        $region55: #{net_forward.1} parent=11 // pred_region
          _
        $region56: #{net_forward.1} parent=11 // pred_fallthru
          _
        // Predicated region
        $region57: #{net_forward.1} parent=11 // pred_check
          %p525 = pneg %p304
        $region58: #{net_forward.1} parent=11 // pred_check_branch
          %527 = sbr.rel (%p525) target = $region60
        $region59: #{net_forward.1} parent=11 // pred_region
          _
        $region60: #{net_forward.1} parent=11 // pred_fallthru
          _
        // Predicated region
        $region61: #{net_forward.1} parent=11 // pred_check
          %p528 = pneg %p325
        $region62: #{net_forward.1} parent=11 // pred_check_branch
          %530 = sbr.rel (%p528) target = $region64
        $region63: #{net_forward.1} parent=11 // pred_region
          _
        $region64: #{net_forward.1} parent=11 // pred_fallthru
          _
        // Predicated region
        $region65: #{net_forward.1} parent=11 // pred_check
          %p531 = pneg %p346
        $region66: #{net_forward.1} parent=11 // pred_check_branch
          %533 = sbr.rel (%p531) target = $region68
        $region67: #{net_forward.1} parent=11 // pred_region
          _
        $region68: #{net_forward.1} parent=11 // pred_fallthru
          _
        // Predicated region
        $region69: #{net_forward.1} parent=11 // pred_check
          %p534 = pneg %p367
        $region70: #{net_forward.1} parent=11 // pred_check_branch
          %536 = sbr.rel (%p534) target = $region72
        $region71: #{net_forward.1} parent=11 // pred_region
          _
        $region72: #{net_forward.1} parent=11 // pred_fallthru
          _
        // Predicated region
        $region73: #{net_forward.1} parent=11 // pred_check
          %p537 = pneg %p388
        $region74: #{net_forward.1} parent=11 // pred_check_branch
          %539 = sbr.rel (%p537) target = $region76
        $region75: #{net_forward.1} parent=11 // pred_region
          _
        $region76: #{net_forward.1} parent=11 // pred_fallthru
          _
        // Predicated region
        $region77: #{net_forward.1} parent=11 // pred_check
          %p540 = pneg %p409
        $region78: #{net_forward.1} parent=11 // pred_check_branch
          %542 = sbr.rel (%p540) target = $region80
        $region79: #{net_forward.1} parent=11 // pred_region
          _
        $region80: #{net_forward.1} parent=11 // pred_fallthru
          _
        // Predicated region
        $region81: #{net_forward.1} parent=11 // pred_check
          %p543 = pneg %p430
        $region82: #{net_forward.1} parent=11 // pred_check_branch
          %545 = sbr.rel (%p543) target = $region84
        $region83: #{net_forward.1} parent=11 // pred_region
          _
        $region84: #{net_forward.1} parent=11 // pred_fallthru
          _
        // Predicated region
        $region85: #{net_forward.1} parent=11 // pred_check
          %p546 = pneg %p451
        $region86: #{net_forward.1} parent=11 // pred_check_branch
          %548 = sbr.rel (%p546) target = $region88
        $region87: #{net_forward.1} parent=11 // pred_region
          _
        $region88: #{net_forward.1} parent=11 // pred_fallthru
          _
      $region12: #{net_forward.1} parent=5 // pred_fallthru
        _
      %p549 = scmp.lt.s32.totalorder %s26, 2
      // Predicated region
      $region89: #{net_forward.1} parent=5 // pred_check
        %p550 = pneg %p549
      $region90: #{net_forward.1} parent=5 // pred_check_branch
        %552 = sbr.rel (%p550) target = $region92
      $region91: #{net_forward.1} parent=5 // pred_region
        // Predicated region
        $region93: #{net_forward.1} parent=91 // pred_check
          %p553 = pneg %p46
        $region94: #{net_forward.1} parent=91 // pred_check_branch
          %555 = sbr.rel (%p553) target = $region96
        $region95: #{net_forward.1} parent=91 // pred_region
          %s556 = sand.u32 %s36, 1
          %s557 = sand.u32 %s36, 1
          %s558 = smul.addr %s557, 192
          %s559 = scalar_lea.vmem [#allocation2], %s558
          %s560 = smul.u32 2, %s26
          %s561 = smul.addr %s560, 8
          %s562 = scalar_lea.vmem %s0, %s561
          // Predicated region
          $region97: #{net_forward.1} parent=95 // pred_check
            _
          $region98: #{net_forward.1} parent=95 // pred_check_branch
            %564 = sbr.rel (0) target = $region100
          $region99: #{net_forward.1} parent=95 // pred_region
            // Predicated region
            $region101: #{net_forward.1} parent=99 // pred_check
              _
            $region102: #{net_forward.1} parent=99 // pred_check_branch
              %566 = sbr.rel (0) target = $region104
            $region103: #{net_forward.1} parent=99 // pred_region
              loop: start=0, step=1, limit=1
              $region105: #{net_forward.1} parent=103 // loop_pre_header
                _
              $region106: #{net_forward.1} parent=103 // loop_header
                %s568 = sphi 0, %s572
                %p569 = scmp.ge.s32.totalorder %s568, 1
                %s573 = sphi %s562, %s562
                %s574 = sphi %s559, %s559
              $region107: #{net_forward.1} parent=103 // loop_header_branch
                %571 = sbr.rel (%p569) target = $region111
              $region108: #{net_forward.1} parent=103 // loop_body
                %v575 = vld [vmem:[%s573] sm:$0xff]
                %576 = vst [vmem:[%s574] sm:$0xff] %v575
                %v577 = vld [vmem:[%s573 + $0x8] sm:$0xff]
                %578 = vst [vmem:[%s574 + $0x8] sm:$0xff] %v577
                %v579 = vld [vmem:[%s573 + $0x20] sm:$0xff]
                %580 = vst [vmem:[%s574 + $0x10] sm:$0xff] %v579
                %v581 = vld [vmem:[%s573 + $0x28] sm:$0xff]
                %582 = vst [vmem:[%s574 + $0x18] sm:$0xff] %v581
                %v583 = vld [vmem:[%s573 + $0x40] sm:$0xff]
                %584 = vst [vmem:[%s574 + $0x20] sm:$0xff] %v583
                %v585 = vld [vmem:[%s573 + $0x48] sm:$0xff]
                %586 = vst [vmem:[%s574 + $0x28] sm:$0xff] %v585
                %v587 = vld [vmem:[%s573 + $0x60] sm:$0xff]
                %588 = vst [vmem:[%s574 + $0x30] sm:$0xff] %v587
                %v589 = vld [vmem:[%s573 + $0x68] sm:$0xff]
                %590 = vst [vmem:[%s574 + $0x38] sm:$0xff] %v589
                %v591 = vld [vmem:[%s573 + $0x80] sm:$0xff]
                %592 = vst [vmem:[%s574 + $0x40] sm:$0xff] %v591
                %v593 = vld [vmem:[%s573 + $0x88] sm:$0xff]
                %594 = vst [vmem:[%s574 + $0x48] sm:$0xff] %v593
                %v595 = vld [vmem:[%s573 + $0xa0] sm:$0xff]
                %596 = vst [vmem:[%s574 + $0x50] sm:$0xff] %v595
                %v597 = vld [vmem:[%s573 + $0xa8] sm:$0xff]
                %598 = vst [vmem:[%s574 + $0x58] sm:$0xff] %v597
                %v599 = vld [vmem:[%s573 + $0xc0] sm:$0xff]
                %600 = vst [vmem:[%s574 + $0x60] sm:$0xff] %v599
                %v601 = vld [vmem:[%s573 + $0xc8] sm:$0xff]
                %602 = vst [vmem:[%s574 + $0x68] sm:$0xff] %v601
                %v603 = vld [vmem:[%s573 + $0xe0] sm:$0xff]
                %604 = vst [vmem:[%s574 + $0x70] sm:$0xff] %v603
                %v605 = vld [vmem:[%s573 + $0xe8] sm:$0xff]
                %606 = vst [vmem:[%s574 + $0x78] sm:$0xff] %v605
                %v607 = vld [vmem:[%s573 + $0x100] sm:$0xff]
                %608 = vst [vmem:[%s574 + $0x80] sm:$0xff] %v607
                %v609 = vld [vmem:[%s573 + $0x108] sm:$0xff]
                %610 = vst [vmem:[%s574 + $0x88] sm:$0xff] %v609
                %v611 = vld [vmem:[%s573 + $0x120] sm:$0xff]
                %612 = vst [vmem:[%s574 + $0x90] sm:$0xff] %v611
                %v613 = vld [vmem:[%s573 + $0x128] sm:$0xff]
                %614 = vst [vmem:[%s574 + $0x98] sm:$0xff] %v613
                %v615 = vld [vmem:[%s573 + $0x140] sm:$0xff]
                %616 = vst [vmem:[%s574 + $0xa0] sm:$0xff] %v615
                %v617 = vld [vmem:[%s573 + $0x148] sm:$0xff]
                %618 = vst [vmem:[%s574 + $0xa8] sm:$0xff] %v617
                %v619 = vld [vmem:[%s573 + $0x160] sm:$0xff]
                %620 = vst [vmem:[%s574 + $0xb0] sm:$0xff] %v619
                %v621 = vld [vmem:[%s573 + $0x168] sm:$0xff]
                %622 = vst [vmem:[%s574 + $0xb8] sm:$0xff] %v621
              $region109: #{net_forward.1} parent=103 // loop_footer
                %s572 = sadd.s32 1, %s568
              $region110: #{net_forward.1} parent=103 // loop_footer_branch
                %567 = sbr.rel target = $region106
              $region111: #{net_forward.1} parent=103 // loop_exit
                _
            $region104: #{net_forward.1} parent=99 // pred_fallthru
              _
            // Predicated region
            $region112: #{net_forward.1} parent=99 // pred_check
              _
            $region113: #{net_forward.1} parent=99 // pred_check_branch
              %624 = sbr.rel target = $region115
            $region114: #{net_forward.1} parent=99 // pred_region
              _
            $region115: #{net_forward.1} parent=99 // pred_fallthru
              _
          $region100: #{net_forward.1} parent=95 // pred_fallthru
            _
          %625 = vnop
        $region96: #{net_forward.1} parent=91 // pred_fallthru
          _
      $region92: #{net_forward.1} parent=5 // pred_fallthru
        _
      %p626 = scmp.le.s32.totalorder 1, %s26
      %p627 = scmp.lt.s32.totalorder %s26, 3
      %p628 = pnand %p626, %p627
      %p629 = pneg %p628
      // Predicated region
      $region116: #{net_forward.1} parent=5 // pred_check
        _
      $region117: #{net_forward.1} parent=5 // pred_check_branch
        %631 = sbr.rel (%p628) target = $region119
      $region118: #{net_forward.1} parent=5 // pred_region
        %s632 = ssub.s32 %s26, 1
        %s633 = sand.u32 %s39, 1
        %s634 = sand.u32 %s39, 1
        %s635 = smul.addr %s634, 192
        %s636 = scalar_lea.vmem [#allocation2], %s635
        // Predicated region
        $region120: #{net_forward.1} parent=118 // pred_check
          %p637 = pneg %p52
        $region121: #{net_forward.1} parent=118 // pred_check_branch
          %639 = sbr.rel (%p637) target = $region123
        $region122: #{net_forward.1} parent=118 // pred_region
          _
        $region123: #{net_forward.1} parent=118 // pred_fallthru
          _
        %s640 = sand.u32 %s39, 1
        %s641 = sand.u32 %s39, 1
        %s642 = smul.addr %s641, 192
        %s643 = scalar_lea.vmem [#allocation2], %s642
        %p644 = pneg %p52
        %p645 = pneg %p49
        %p646 = pneg %p73
        %p647 = pneg %p70
        %p648 = pneg %p94
        %p649 = pneg %p91
        %p650 = pneg %p115
        %p651 = pneg %p112
        %p652 = pneg %p136
        %p653 = pneg %p133
        %p654 = pneg %p157
        %p655 = pneg %p154
        %p656 = pneg %p178
        %p657 = pneg %p175
        %p658 = pneg %p199
        %p659 = pneg %p196
        %p660 = pneg %p220
        %p661 = pneg %p217
        %p662 = pneg %p241
        %p663 = pneg %p238
        %p664 = pneg %p262
        %p665 = pneg %p259
        %p666 = pneg %p283
        %p667 = pneg %p280
        %p668 = pneg %p304
        %p669 = pneg %p301
        %p670 = pneg %p325
        %p671 = pneg %p322
        %p672 = pneg %p346
        %p673 = pneg %p343
        %p674 = pneg %p367
        %p675 = pneg %p364
        %p676 = pneg %p388
        %p677 = pneg %p385
        %p678 = pneg %p409
        %p679 = pneg %p406
        %p680 = pneg %p430
        %p681 = pneg %p427
        %p682 = pneg %p451
        %p683 = pneg %p448
        %p684 = pneg %p477
        %p685 = pneg %p474
        %p686 = scmp.lt.s32.totalorder %s31, 1
        %s687 = scalar_select %p686, %s31, 1
        %s688 = smul.addr %s687, 16
        %s689 = smul.addr %s688, 8
        %s690 = scalar_lea.vmem %s20, %s689
        %s691 = smul.u32 2, %s31
        %p692 = scmp.lt.s32.totalorder %s31, 1
        %s693 = scalar_select %p692, %s31, 1
        %s694 = smul.addr %s693, 16
        %s695 = smul.addr %s694, 8
        %s696 = scalar_lea.vmem %s20, %s695
        %v697 = vld [vmem:[%s636] sm:$0xff]
        %v698 = vld [vmem:[%s636 + $0x8] sm:$0xff]
        %v699 = vld [vmem:[%s636 + $0x10] sm:$0xff]
        %v700 = vld [vmem:[%s636 + $0x18] sm:$0xff]
        %v701 = vld [vmem:[%s636 + $0x20] sm:$0xff]
        %v702 = vld [vmem:[%s636 + $0x28] sm:$0xff]
        %v703 = vld [vmem:[%s636 + $0x30] sm:$0xff]
        %v704 = vld [vmem:[%s636 + $0x38] sm:$0xff]
        %v705 = vld [vmem:[%s636 + $0x40] sm:$0xff]
        %v706 = vld [vmem:[%s636 + $0x48] sm:$0xff]
        %v707 = vld [vmem:[%s636 + $0x50] sm:$0xff]
        %v708 = vld [vmem:[%s636 + $0x58] sm:$0xff]
        %v709 = vld [vmem:[%s636 + $0x60] sm:$0xff]
        %v710 = vld [vmem:[%s636 + $0x68] sm:$0xff]
        %v711 = vld [vmem:[%s636 + $0x70] sm:$0xff]
        %v712 = vld [vmem:[%s636 + $0x78] sm:$0xff]
        %v713 = vld [vmem:[%s636 + $0x80] sm:$0xff]
        %v714 = vld [vmem:[%s636 + $0x88] sm:$0xff]
        %v715 = vld [vmem:[%s636 + $0x90] sm:$0xff]
        %v716 = vld [vmem:[%s636 + $0x98] sm:$0xff]
        %v717 = vld [vmem:[%s636 + $0xa0] sm:$0xff]
        %v718 = vld [vmem:[%s636 + $0xa8] sm:$0xff]
        %v719 = vld [vmem:[%s636 + $0xb0] sm:$0xff]
        %v720 = vld [vmem:[%s636 + $0xb8] sm:$0xff]
        %729 = vrot.lane.b32.xlu0 %v697, 127
        %v730 = vpop.permute.xlu0 %729
        %731 = vrot.lane.b32.xlu0 %v698, 127
        %v732 = vpop.permute.xlu0 %731
        %733 = vrot.lane.b32.xlu0 %v699, 127
        %v734 = vpop.permute.xlu0 %733
        %735 = vrot.lane.b32.xlu0 %v700, 127
        %v736 = vpop.permute.xlu0 %735
        %737 = vrot.lane.b32.xlu0 %v701, 127
        %v738 = vpop.permute.xlu0 %737
        %739 = vrot.lane.b32.xlu0 %v702, 127
        %v740 = vpop.permute.xlu0 %739
        %741 = vrot.lane.b32.xlu0 %v703, 127
        %v742 = vpop.permute.xlu0 %741
        %743 = vrot.lane.b32.xlu0 %v704, 127
        %v744 = vpop.permute.xlu0 %743
        %vm745 = vcmask 1039360
        %v746 = vsel %vm745, %v730, %v732
        %v747 = vsel %vm745, %v734, %v736
        %v748 = vsel %vm745, %v738, %v740
        %v749 = vsel %vm745, %v742, %v744
        %v762 = vsel %vm745, %v732, %v730
        %v763 = vsel %vm745, %v736, %v734
        %v764 = vsel %vm745, %v740, %v738
        %v765 = vsel %vm745, %v744, %v742
        %766 = vrot.lane.b32.xlu0 %v697, 126
        %v767 = vpop.permute.xlu0 %766
        %768 = vrot.lane.b32.xlu0 %v698, 126
        %v769 = vpop.permute.xlu0 %768
        %770 = vrot.lane.b32.xlu0 %v699, 126
        %v771 = vpop.permute.xlu0 %770
        %772 = vrot.lane.b32.xlu0 %v700, 126
        %v773 = vpop.permute.xlu0 %772
        %774 = vrot.lane.b32.xlu0 %v701, 126
        %v775 = vpop.permute.xlu0 %774
        %776 = vrot.lane.b32.xlu0 %v702, 126
        %v777 = vpop.permute.xlu0 %776
        %778 = vrot.lane.b32.xlu0 %v703, 126
        %v779 = vpop.permute.xlu0 %778
        %780 = vrot.lane.b32.xlu0 %v704, 126
        %v781 = vpop.permute.xlu0 %780
        %vm782 = vcmask 1031168
        %v783 = vsel %vm782, %v767, %v769
        %v784 = vsel %vm782, %v771, %v773
        %v785 = vsel %vm782, %v775, %v777
        %v786 = vsel %vm782, %v779, %v781
        %v799 = vsel %vm782, %v769, %v767
        %v800 = vsel %vm782, %v773, %v771
        %v801 = vsel %vm782, %v777, %v775
        %v802 = vsel %vm782, %v781, %v779
        %803 = vrot.lane.b32.xlu0 %v697, 125
        %v804 = vpop.permute.xlu0 %803
        %805 = vrot.lane.b32.xlu0 %v698, 125
        %v806 = vpop.permute.xlu0 %805
        %807 = vrot.lane.b32.xlu0 %v699, 125
        %v808 = vpop.permute.xlu0 %807
        %809 = vrot.lane.b32.xlu0 %v700, 125
        %v810 = vpop.permute.xlu0 %809
        %811 = vrot.lane.b32.xlu0 %v701, 125
        %v812 = vpop.permute.xlu0 %811
        %813 = vrot.lane.b32.xlu0 %v702, 125
        %v814 = vpop.permute.xlu0 %813
        %815 = vrot.lane.b32.xlu0 %v703, 125
        %v816 = vpop.permute.xlu0 %815
        %817 = vrot.lane.b32.xlu0 %v704, 125
        %v818 = vpop.permute.xlu0 %817
        %vm819 = vcmask 1022976
        %v820 = vsel %vm819, %v804, %v806
        %v821 = vsel %vm819, %v808, %v810
        %v822 = vsel %vm819, %v812, %v814
        %v823 = vsel %vm819, %v816, %v818
        %v836 = vsel %vm819, %v806, %v804
        %v837 = vsel %vm819, %v810, %v808
        %v838 = vsel %vm819, %v814, %v812
        %v839 = vsel %vm819, %v818, %v816
        %840 = vrot.lane.b32.xlu0 %v697, 124
        %v841 = vpop.permute.xlu0 %840
        %842 = vrot.lane.b32.xlu0 %v698, 124
        %v843 = vpop.permute.xlu0 %842
        %844 = vrot.lane.b32.xlu0 %v699, 124
        %v845 = vpop.permute.xlu0 %844
        %846 = vrot.lane.b32.xlu0 %v700, 124
        %v847 = vpop.permute.xlu0 %846
        %848 = vrot.lane.b32.xlu0 %v701, 124
        %v849 = vpop.permute.xlu0 %848
        %850 = vrot.lane.b32.xlu0 %v702, 124
        %v851 = vpop.permute.xlu0 %850
        %852 = vrot.lane.b32.xlu0 %v703, 124
        %v853 = vpop.permute.xlu0 %852
        %854 = vrot.lane.b32.xlu0 %v704, 124
        %v855 = vpop.permute.xlu0 %854
        %vm856 = vcmask 1014784
        %v857 = vsel %vm856, %v841, %v843
        %v858 = vsel %vm856, %v845, %v847
        %v859 = vsel %vm856, %v849, %v851
        %v860 = vsel %vm856, %v853, %v855
        %v873 = vsel %vm856, %v843, %v841
        %v874 = vsel %vm856, %v847, %v845
        %v875 = vsel %vm856, %v851, %v849
        %v876 = vsel %vm856, %v855, %v853
        %885 = vrot.lane.b32.xlu0 %v705, 127
        %v886 = vpop.permute.xlu0 %885
        %887 = vrot.lane.b32.xlu0 %v706, 127
        %v888 = vpop.permute.xlu0 %887
        %889 = vrot.lane.b32.xlu0 %v707, 127
        %v890 = vpop.permute.xlu0 %889
        %891 = vrot.lane.b32.xlu0 %v708, 127
        %v892 = vpop.permute.xlu0 %891
        %893 = vrot.lane.b32.xlu0 %v709, 127
        %v894 = vpop.permute.xlu0 %893
        %895 = vrot.lane.b32.xlu0 %v710, 127
        %v896 = vpop.permute.xlu0 %895
        %897 = vrot.lane.b32.xlu0 %v711, 127
        %v898 = vpop.permute.xlu0 %897
        %899 = vrot.lane.b32.xlu0 %v712, 127
        %v900 = vpop.permute.xlu0 %899
        %v901 = vsel %vm745, %v886, %v888
        %v902 = vsel %vm745, %v890, %v892
        %v903 = vsel %vm745, %v894, %v896
        %v904 = vsel %vm745, %v898, %v900
        %v917 = vsel %vm745, %v888, %v886
        %v918 = vsel %vm745, %v892, %v890
        %v919 = vsel %vm745, %v896, %v894
        %v920 = vsel %vm745, %v900, %v898
        %921 = vrot.lane.b32.xlu0 %v705, 126
        %v922 = vpop.permute.xlu0 %921
        %923 = vrot.lane.b32.xlu0 %v706, 126
        %v924 = vpop.permute.xlu0 %923
        %925 = vrot.lane.b32.xlu0 %v707, 126
        %v926 = vpop.permute.xlu0 %925
        %927 = vrot.lane.b32.xlu0 %v708, 126
        %v928 = vpop.permute.xlu0 %927
        %929 = vrot.lane.b32.xlu0 %v709, 126
        %v930 = vpop.permute.xlu0 %929
        %931 = vrot.lane.b32.xlu0 %v710, 126
        %v932 = vpop.permute.xlu0 %931
        %933 = vrot.lane.b32.xlu0 %v711, 126
        %v934 = vpop.permute.xlu0 %933
        %935 = vrot.lane.b32.xlu0 %v712, 126
        %v936 = vpop.permute.xlu0 %935
        %v937 = vsel %vm782, %v922, %v924
        %v938 = vsel %vm782, %v926, %v928
        %v939 = vsel %vm782, %v930, %v932
        %v940 = vsel %vm782, %v934, %v936
        %v953 = vsel %vm782, %v924, %v922
        %v954 = vsel %vm782, %v928, %v926
        %v955 = vsel %vm782, %v932, %v930
        %v956 = vsel %vm782, %v936, %v934
        %957 = vrot.lane.b32.xlu0 %v705, 125
        %v958 = vpop.permute.xlu0 %957
        %959 = vrot.lane.b32.xlu0 %v706, 125
        %v960 = vpop.permute.xlu0 %959
        %961 = vrot.lane.b32.xlu0 %v707, 125
        %v962 = vpop.permute.xlu0 %961
        %963 = vrot.lane.b32.xlu0 %v708, 125
        %v964 = vpop.permute.xlu0 %963
        %965 = vrot.lane.b32.xlu0 %v709, 125
        %v966 = vpop.permute.xlu0 %965
        %967 = vrot.lane.b32.xlu0 %v710, 125
        %v968 = vpop.permute.xlu0 %967
        %969 = vrot.lane.b32.xlu0 %v711, 125
        %v970 = vpop.permute.xlu0 %969
        %971 = vrot.lane.b32.xlu0 %v712, 125
        %v972 = vpop.permute.xlu0 %971
        %v973 = vsel %vm819, %v958, %v960
        %v974 = vsel %vm819, %v962, %v964
        %v975 = vsel %vm819, %v966, %v968
        %v976 = vsel %vm819, %v970, %v972
        %v989 = vsel %vm819, %v960, %v958
        %v990 = vsel %vm819, %v964, %v962
        %v991 = vsel %vm819, %v968, %v966
        %v992 = vsel %vm819, %v972, %v970
        %993 = vrot.lane.b32.xlu0 %v705, 124
        %v994 = vpop.permute.xlu0 %993
        %995 = vrot.lane.b32.xlu0 %v706, 124
        %v996 = vpop.permute.xlu0 %995
        %997 = vrot.lane.b32.xlu0 %v707, 124
        %v998 = vpop.permute.xlu0 %997
        %999 = vrot.lane.b32.xlu0 %v708, 124
        %v1000 = vpop.permute.xlu0 %999
        %1001 = vrot.lane.b32.xlu0 %v709, 124
        %v1002 = vpop.permute.xlu0 %1001
        %1003 = vrot.lane.b32.xlu0 %v710, 124
        %v1004 = vpop.permute.xlu0 %1003
        %1005 = vrot.lane.b32.xlu0 %v711, 124
        %v1006 = vpop.permute.xlu0 %1005
        %1007 = vrot.lane.b32.xlu0 %v712, 124
        %v1008 = vpop.permute.xlu0 %1007
        %v1009 = vsel %vm856, %v994, %v996
        %v1010 = vsel %vm856, %v998, %v1000
        %v1011 = vsel %vm856, %v1002, %v1004
        %v1012 = vsel %vm856, %v1006, %v1008
        %v1025 = vsel %vm856, %v996, %v994
        %v1026 = vsel %vm856, %v1000, %v998
        %v1027 = vsel %vm856, %v1004, %v1002
        %v1028 = vsel %vm856, %v1008, %v1006
        %1037 = vrot.lane.b32.xlu0 %v713, 127
        %v1038 = vpop.permute.xlu0 %1037
        %1039 = vrot.lane.b32.xlu0 %v714, 127
        %v1040 = vpop.permute.xlu0 %1039
        %1041 = vrot.lane.b32.xlu0 %v715, 127
        %v1042 = vpop.permute.xlu0 %1041
        %1043 = vrot.lane.b32.xlu0 %v716, 127
        %v1044 = vpop.permute.xlu0 %1043
        %1045 = vrot.lane.b32.xlu0 %v717, 127
        %v1046 = vpop.permute.xlu0 %1045
        %1047 = vrot.lane.b32.xlu0 %v718, 127
        %v1048 = vpop.permute.xlu0 %1047
        %1049 = vrot.lane.b32.xlu0 %v719, 127
        %v1050 = vpop.permute.xlu0 %1049
        %1051 = vrot.lane.b32.xlu0 %v720, 127
        %v1052 = vpop.permute.xlu0 %1051
        %v1053 = vsel %vm745, %v1038, %v1040
        %v1054 = vsel %vm745, %v1042, %v1044
        %v1055 = vsel %vm745, %v1046, %v1048
        %v1056 = vsel %vm745, %v1050, %v1052
        %v1069 = vsel %vm745, %v1040, %v1038
        %v1070 = vsel %vm745, %v1044, %v1042
        %v1071 = vsel %vm745, %v1048, %v1046
        %v1072 = vsel %vm745, %v1052, %v1050
        %1073 = vrot.lane.b32.xlu0 %v713, 126
        %v1074 = vpop.permute.xlu0 %1073
        %1075 = vrot.lane.b32.xlu0 %v714, 126
        %v1076 = vpop.permute.xlu0 %1075
        %1077 = vrot.lane.b32.xlu0 %v715, 126
        %v1078 = vpop.permute.xlu0 %1077
        %1079 = vrot.lane.b32.xlu0 %v716, 126
        %v1080 = vpop.permute.xlu0 %1079
        %1081 = vrot.lane.b32.xlu0 %v717, 126
        %v1082 = vpop.permute.xlu0 %1081
        %1083 = vrot.lane.b32.xlu0 %v718, 126
        %v1084 = vpop.permute.xlu0 %1083
        %1085 = vrot.lane.b32.xlu0 %v719, 126
        %v1086 = vpop.permute.xlu0 %1085
        %1087 = vrot.lane.b32.xlu0 %v720, 126
        %v1088 = vpop.permute.xlu0 %1087
        %v1089 = vsel %vm782, %v1074, %v1076
        %v1090 = vsel %vm782, %v1078, %v1080
        %v1091 = vsel %vm782, %v1082, %v1084
        %v1092 = vsel %vm782, %v1086, %v1088
        %v1105 = vsel %vm782, %v1076, %v1074
        %v1106 = vsel %vm782, %v1080, %v1078
        %v1107 = vsel %vm782, %v1084, %v1082
        %v1108 = vsel %vm782, %v1088, %v1086
        %1109 = vrot.lane.b32.xlu0 %v713, 125
        %v1110 = vpop.permute.xlu0 %1109
        %1111 = vrot.lane.b32.xlu0 %v714, 125
        %v1112 = vpop.permute.xlu0 %1111
        %1113 = vrot.lane.b32.xlu0 %v715, 125
        %v1114 = vpop.permute.xlu0 %1113
        %1115 = vrot.lane.b32.xlu0 %v716, 125
        %v1116 = vpop.permute.xlu0 %1115
        %1117 = vrot.lane.b32.xlu0 %v717, 125
        %v1118 = vpop.permute.xlu0 %1117
        %1119 = vrot.lane.b32.xlu0 %v718, 125
        %v1120 = vpop.permute.xlu0 %1119
        %1121 = vrot.lane.b32.xlu0 %v719, 125
        %v1122 = vpop.permute.xlu0 %1121
        %1123 = vrot.lane.b32.xlu0 %v720, 125
        %v1124 = vpop.permute.xlu0 %1123
        %v1125 = vsel %vm819, %v1110, %v1112
        %v1126 = vsel %vm819, %v1114, %v1116
        %v1127 = vsel %vm819, %v1118, %v1120
        %v1128 = vsel %vm819, %v1122, %v1124
        %v1141 = vsel %vm819, %v1112, %v1110
        %v1142 = vsel %vm819, %v1116, %v1114
        %v1143 = vsel %vm819, %v1120, %v1118
        %v1144 = vsel %vm819, %v1124, %v1122
        %1145 = vrot.lane.b32.xlu0 %v713, 124
        %v1146 = vpop.permute.xlu0 %1145
        %1147 = vrot.lane.b32.xlu0 %v714, 124
        %v1148 = vpop.permute.xlu0 %1147
        %1149 = vrot.lane.b32.xlu0 %v715, 124
        %v1150 = vpop.permute.xlu0 %1149
        %1151 = vrot.lane.b32.xlu0 %v716, 124
        %v1152 = vpop.permute.xlu0 %1151
        %1153 = vrot.lane.b32.xlu0 %v717, 124
        %v1154 = vpop.permute.xlu0 %1153
        %1155 = vrot.lane.b32.xlu0 %v718, 124
        %v1156 = vpop.permute.xlu0 %1155
        %1157 = vrot.lane.b32.xlu0 %v719, 124
        %v1158 = vpop.permute.xlu0 %1157
        %1159 = vrot.lane.b32.xlu0 %v720, 124
        %v1160 = vpop.permute.xlu0 %1159
        %v1161 = vsel %vm856, %v1146, %v1148
        %v1162 = vsel %vm856, %v1150, %v1152
        %v1163 = vsel %vm856, %v1154, %v1156
        %v1164 = vsel %vm856, %v1158, %v1160
        %v1177 = vsel %vm856, %v1148, %v1146
        %v1178 = vsel %vm856, %v1152, %v1150
        %v1179 = vsel %vm856, %v1156, %v1154
        %v1180 = vsel %vm856, %v1160, %v1158
        %v1181 = vld [vmem:[%s1] sm:$0xff]
        %v1182 = vld [vmem:[%s1 + $0x8] sm:$0xff]
        %v1183 = vld [vmem:[%s1 + $0x10] sm:$0xff]
        %v1184 = vld [vmem:[%s1 + $0x18] sm:$0xff]
        %v1185 = vld [vmem:[%s1 + $0x20] sm:$0xff]
        %v1186 = vld [vmem:[%s1 + $0x28] sm:$0xff]
        %v1187 = vld [vmem:[%s1 + $0x30] sm:$0xff]
        %v1188 = vld [vmem:[%s1 + $0x38] sm:$0xff]
        %v1189 = vld [vmem:[%s1 + $0x40] sm:$0xff]
        %v1190 = vld [vmem:[%s1 + $0x48] sm:$0xff]
        %v1191 = vld [vmem:[%s1 + $0x50] sm:$0xff]
        %v1192 = vld [vmem:[%s1 + $0x58] sm:$0xff]
        %v1193 = vld [vmem:[%s1 + $0x60] sm:$0xff]
        %v1194 = vld [vmem:[%s1 + $0x68] sm:$0xff]
        %v1195 = vld [vmem:[%s1 + $0x70] sm:$0xff]
        %v1196 = vld [vmem:[%s1 + $0x78] sm:$0xff]
        %v1197 = vld [vmem:[%s1 + $0x80] sm:$0xff]
        %v1198 = vld [vmem:[%s1 + $0x88] sm:$0xff]
        %v1199 = vld [vmem:[%s1 + $0x90] sm:$0xff]
        %v1200 = vld [vmem:[%s1 + $0x98] sm:$0xff]
        %v1201 = vld [vmem:[%s1 + $0xa0] sm:$0xff]
        %v1202 = vld [vmem:[%s1 + $0xa8] sm:$0xff]
        %v1203 = vld [vmem:[%s1 + $0xb0] sm:$0xff]
        %v1204 = vld [vmem:[%s1 + $0xb8] sm:$0xff]
        %v1205 = vld [vmem:[%s1 + $0xc0] sm:$0xff]
        %v1206 = vld [vmem:[%s1 + $0xc8] sm:$0xff]
        %v1207 = vld [vmem:[%s1 + $0xd0] sm:$0xff]
        %v1208 = vld [vmem:[%s1 + $0xd8] sm:$0xff]
        %v1209 = vld [vmem:[%s1 + $0xe0] sm:$0xff]
        %v1210 = vld [vmem:[%s1 + $0xe8] sm:$0xff]
        %v1211 = vld [vmem:[%s1 + $0xf0] sm:$0xff]
        %v1212 = vld [vmem:[%s1 + $0xf8] sm:$0xff]
        %v1213 = vld [vmem:[%s1 + $0x100] sm:$0xff]
        %v1214 = vld [vmem:[%s1 + $0x108] sm:$0xff]
        %v1215 = vld [vmem:[%s1 + $0x110] sm:$0xff]
        %v1216 = vld [vmem:[%s1 + $0x118] sm:$0xff]
        %v1217 = vld [vmem:[%s1 + $0x120] sm:$0xff]
        %v1218 = vld [vmem:[%s1 + $0x128] sm:$0xff]
        %v1219 = vld [vmem:[%s1 + $0x130] sm:$0xff]
        %v1220 = vld [vmem:[%s1 + $0x138] sm:$0xff]
        %v1221 = vld [vmem:[%s1 + $0x140] sm:$0xff]
        %v1222 = vld [vmem:[%s1 + $0x148] sm:$0xff]
        %v1223 = vld [vmem:[%s1 + $0x150] sm:$0xff]
        %v1224 = vld [vmem:[%s1 + $0x158] sm:$0xff]
        %v1225 = vld [vmem:[%s1 + $0x160] sm:$0xff]
        %v1226 = vld [vmem:[%s1 + $0x168] sm:$0xff]
        %v1227 = vld [vmem:[%s1 + $0x170] sm:$0xff]
        %v1228 = vld [vmem:[%s1 + $0x178] sm:$0xff]
        %v1229 = vld [vmem:[%s1 + $0x180] sm:$0xff]
        %v1230 = vld [vmem:[%s1 + $0x188] sm:$0xff]
        %v1231 = vld [vmem:[%s1 + $0x190] sm:$0xff]
        %v1232 = vld [vmem:[%s1 + $0x198] sm:$0xff]
        %v1233 = vld [vmem:[%s1 + $0x1a0] sm:$0xff]
        %v1234 = vld [vmem:[%s1 + $0x1a8] sm:$0xff]
        %v1235 = vld [vmem:[%s1 + $0x1b0] sm:$0xff]
        %v1236 = vld [vmem:[%s1 + $0x1b8] sm:$0xff]
        %v1237 = vld [vmem:[%s1 + $0x1c0] sm:$0xff]
        %v1238 = vld [vmem:[%s1 + $0x1c8] sm:$0xff]
        %v1239 = vld [vmem:[%s1 + $0x1d0] sm:$0xff]
        %v1240 = vld [vmem:[%s1 + $0x1d8] sm:$0xff]
        %v1241 = vld [vmem:[%s1 + $0x1e0] sm:$0xff]
        %v1242 = vld [vmem:[%s1 + $0x1e8] sm:$0xff]
        %v1243 = vld [vmem:[%s1 + $0x1f0] sm:$0xff]
        %v1244 = vld [vmem:[%s1 + $0x1f8] sm:$0xff]
        %v1245 = vld [vmem:[%s1 + $0x200] sm:$0xff]
        %v1246 = vld [vmem:[%s1 + $0x208] sm:$0xff]
        %v1247 = vld [vmem:[%s1 + $0x210] sm:$0xff]
        %v1248 = vld [vmem:[%s1 + $0x218] sm:$0xff]
        %v1249 = vld [vmem:[%s1 + $0x220] sm:$0xff]
        %v1250 = vld [vmem:[%s1 + $0x228] sm:$0xff]
        %v1251 = vld [vmem:[%s1 + $0x230] sm:$0xff]
        %v1252 = vld [vmem:[%s1 + $0x238] sm:$0xff]
        %v1253 = vld [vmem:[%s1 + $0x240] sm:$0xff]
        %v1254 = vld [vmem:[%s1 + $0x248] sm:$0xff]
        %v1255 = vld [vmem:[%s1 + $0x250] sm:$0xff]
        %v1256 = vld [vmem:[%s1 + $0x258] sm:$0xff]
        %v1257 = vld [vmem:[%s1 + $0x260] sm:$0xff]
        %v1258 = vld [vmem:[%s1 + $0x268] sm:$0xff]
        %v1259 = vld [vmem:[%s1 + $0x270] sm:$0xff]
        %v1260 = vld [vmem:[%s1 + $0x278] sm:$0xff]
        %v1261 = vld [vmem:[%s1 + $0x280] sm:$0xff]
        %v1262 = vld [vmem:[%s1 + $0x288] sm:$0xff]
        %v1263 = vld [vmem:[%s1 + $0x290] sm:$0xff]
        %v1264 = vld [vmem:[%s1 + $0x298] sm:$0xff]
        %v1265 = vld [vmem:[%s2] sm:$0xff]
        %v1266 = vld [vmem:[%s2 + $0x8] sm:$0xff]
        %v1267 = vld [vmem:[%s2 + $0x10] sm:$0xff]
        %v1268 = vld [vmem:[%s2 + $0x18] sm:$0xff]
        %v1269 = vld [vmem:[%s2 + $0x20] sm:$0xff]
        %v1270 = vld [vmem:[%s2 + $0x28] sm:$0xff]
        %v1271 = vld [vmem:[%s2 + $0x30] sm:$0xff]
        %v1272 = vld [vmem:[%s2 + $0x38] sm:$0xff]
        %v1273 = vld [vmem:[%s2 + $0x40] sm:$0xff]
        %v1274 = vld [vmem:[%s2 + $0x48] sm:$0xff]
        %v1275 = vld [vmem:[%s2 + $0x50] sm:$0xff]
        %v1276 = vld [vmem:[%s2 + $0x58] sm:$0xff]
        %v1277 = vld [vmem:[%s2 + $0x60] sm:$0xff]
        %v1278 = vld [vmem:[%s2 + $0x68] sm:$0xff]
        %v1279 = vld [vmem:[%s2 + $0x70] sm:$0xff]
        %v1280 = vld [vmem:[%s2 + $0x78] sm:$0xff]
        %v1281 = vld [vmem:[%s2 + $0x80] sm:$0xff]
        %v1282 = vld [vmem:[%s2 + $0x88] sm:$0xff]
        %v1283 = vld [vmem:[%s2 + $0x90] sm:$0xff]
        %v1284 = vld [vmem:[%s2 + $0x98] sm:$0xff]
        %v1285 = vld [vmem:[%s2 + $0xa0] sm:$0xff]
        %1287 = vset.pattern.permute.xlu0 0
        %1288 = vperm.xlu0 %1287, %v1265
        %v1289 = vpop.permute.xlu0 %1288
        %1292 = vset.pattern.permute.xlu0 0
        %1293 = vperm.xlu0 %1292, %v1266
        %v1294 = vpop.permute.xlu0 %1293
        %1297 = vset.pattern.permute.xlu0 0
        %1298 = vperm.xlu0 %1297, %v1267
        %v1299 = vpop.permute.xlu0 %1298
        %1302 = vset.pattern.permute.xlu0 0
        %1303 = vperm.xlu0 %1302, %v1268
        %v1304 = vpop.permute.xlu0 %1303
        %1307 = vset.pattern.permute.xlu0 0
        %1308 = vperm.xlu0 %1307, %v1269
        %v1309 = vpop.permute.xlu0 %1308
        %1312 = vset.pattern.permute.xlu0 0
        %1313 = vperm.xlu0 %1312, %v1270
        %v1314 = vpop.permute.xlu0 %1313
        %1317 = vset.pattern.permute.xlu0 0
        %1318 = vperm.xlu0 %1317, %v1271
        %v1319 = vpop.permute.xlu0 %1318
        %1322 = vset.pattern.permute.xlu0 0
        %1323 = vperm.xlu0 %1322, %v1272
        %v1324 = vpop.permute.xlu0 %1323
        %1327 = vset.pattern.permute.xlu0 0
        %1328 = vperm.xlu0 %1327, %v1273
        %v1329 = vpop.permute.xlu0 %1328
        %1332 = vset.pattern.permute.xlu0 0
        %1333 = vperm.xlu0 %1332, %v1274
        %v1334 = vpop.permute.xlu0 %1333
        %1337 = vset.pattern.permute.xlu0 0
        %1338 = vperm.xlu0 %1337, %v1275
        %v1339 = vpop.permute.xlu0 %1338
        %1342 = vset.pattern.permute.xlu0 0
        %1343 = vperm.xlu0 %1342, %v1276
        %v1344 = vpop.permute.xlu0 %1343
        %1347 = vset.pattern.permute.xlu0 0
        %1348 = vperm.xlu0 %1347, %v1277
        %v1349 = vpop.permute.xlu0 %1348
        %1352 = vset.pattern.permute.xlu0 0
        %1353 = vperm.xlu0 %1352, %v1278
        %v1354 = vpop.permute.xlu0 %1353
        %1357 = vset.pattern.permute.xlu0 0
        %1358 = vperm.xlu0 %1357, %v1279
        %v1359 = vpop.permute.xlu0 %1358
        %1362 = vset.pattern.permute.xlu0 0
        %1363 = vperm.xlu0 %1362, %v1280
        %v1364 = vpop.permute.xlu0 %1363
        %1367 = vset.pattern.permute.xlu0 0
        %1368 = vperm.xlu0 %1367, %v1281
        %v1369 = vpop.permute.xlu0 %1368
        %1372 = vset.pattern.permute.xlu0 0
        %1373 = vperm.xlu0 %1372, %v1282
        %v1374 = vpop.permute.xlu0 %1373
        %1377 = vset.pattern.permute.xlu0 0
        %1378 = vperm.xlu0 %1377, %v1283
        %v1379 = vpop.permute.xlu0 %1378
        %1382 = vset.pattern.permute.xlu0 0
        %1383 = vperm.xlu0 %1382, %v1284
        %v1384 = vpop.permute.xlu0 %1383
        %1387 = vset.pattern.permute.xlu0 0
        %1388 = vperm.xlu0 %1387, %v1285
        %v1389 = vpop.permute.xlu0 %1388
        %vm1391 = vcmask 785408
        %v1393 = vsel %vm1391, %v1184, 0
        %v1396 = vsel %vm1391, %v1188, 0
        %v1399 = vsel %vm1391, %v1192, 0
        %v1402 = vsel %vm1391, %v1196, 0
        %v1405 = vsel %vm1391, %v1200, 0
        %v1408 = vsel %vm1391, %v1204, 0
        %v1411 = vsel %vm1391, %v1208, 0
        %v1414 = vsel %vm1391, %v1212, 0
        %v1417 = vsel %vm1391, %v1216, 0
        %v1420 = vsel %vm1391, %v1220, 0
        %v1423 = vsel %vm1391, %v1224, 0
        %v1426 = vsel %vm1391, %v1228, 0
        %v1429 = vsel %vm1391, %v1232, 0
        %v1432 = vsel %vm1391, %v1236, 0
        %v1435 = vsel %vm1391, %v1240, 0
        %v1438 = vsel %vm1391, %v1244, 0
        %v1441 = vsel %vm1391, %v1248, 0
        %v1444 = vsel %vm1391, %v1252, 0
        %v1447 = vsel %vm1391, %v1256, 0
        %v1450 = vsel %vm1391, %v1260, 0
        %v1453 = vsel %vm1391, %v1264, 0
        %1455 = vmatpush.msra.mxu0 %v823
        %1456 = vmatpush.msra.mxu0 %v822
        %1457 = vmatpush.msra.mxu0 %v821
        %1458 = vmatpush.msra.mxu0 %v820
        %1459 = vmatpush.msra.mxu0 %v786
        %1460 = vmatpush.msra.mxu0 %v785
        %1461 = vmatpush.msra.mxu0 %v784
        %1462 = vmatpush.msra.mxu0 %v783
        %1463 = vmatpush.msra.mxu0 %v749
        %1464 = vmatpush.msra.mxu0 %v748
        %1465 = vmatpush.msra.mxu0 %v747
        %1466 = vmatpush.msra.mxu0 %v746
        %1467 = vmatpush.msra.mxu0 %v703
        %1468 = vmatpush.msra.mxu0 %v701
        %1469 = vmatpush.msra.mxu0 %v699
        %1470 = vmatpush.msra.mxu0 %v697
        %1471 = vmatmul.f32.gmra.mxu0 %v1181
        %v1472 = vpop.f32.mrf.mxu0
        %v1473 = vadd.f32 %v1289, %v1472
        %1474 = vmatmul.f32.gmra.mxu0 %v1185
        %v1475 = vpop.f32.mrf.mxu0
        %v1476 = vadd.f32 %v1294, %v1475
        %1477 = vmatmul.f32.gmra.mxu0 %v1189
        %v1478 = vpop.f32.mrf.mxu0
        %v1479 = vadd.f32 %v1299, %v1478
        %1480 = vmatmul.f32.gmra.mxu0 %v1193
        %v1481 = vpop.f32.mrf.mxu0
        %v1482 = vadd.f32 %v1304, %v1481
        %1483 = vmatmul.f32.gmra.mxu0 %v1197
        %v1484 = vpop.f32.mrf.mxu0
        %v1485 = vadd.f32 %v1309, %v1484
        %1486 = vmatmul.f32.gmra.mxu0 %v1201
        %v1487 = vpop.f32.mrf.mxu0
        %v1488 = vadd.f32 %v1314, %v1487
        %1489 = vmatmul.f32.gmra.mxu0 %v1205
        %v1490 = vpop.f32.mrf.mxu0
        %v1491 = vadd.f32 %v1319, %v1490
        %1492 = vmatmul.f32.gmra.mxu0 %v1209
        %v1493 = vpop.f32.mrf.mxu0
        %v1494 = vadd.f32 %v1324, %v1493
        %1495 = vmatmul.f32.gmra.mxu0 %v1213
        %v1496 = vpop.f32.mrf.mxu0
        %v1497 = vadd.f32 %v1329, %v1496
        %1498 = vmatmul.f32.gmra.mxu0 %v1217
        %v1499 = vpop.f32.mrf.mxu0
        %v1500 = vadd.f32 %v1334, %v1499
        %1501 = vmatmul.f32.gmra.mxu0 %v1221
        %v1502 = vpop.f32.mrf.mxu0
        %v1503 = vadd.f32 %v1339, %v1502
        %1504 = vmatmul.f32.gmra.mxu0 %v1225
        %v1505 = vpop.f32.mrf.mxu0
        %v1506 = vadd.f32 %v1344, %v1505
        %1507 = vmatmul.f32.gmra.mxu0 %v1229
        %v1508 = vpop.f32.mrf.mxu0
        %v1509 = vadd.f32 %v1349, %v1508
        %1510 = vmatmul.f32.gmra.mxu0 %v1233
        %v1511 = vpop.f32.mrf.mxu0
        %v1512 = vadd.f32 %v1354, %v1511
        %1513 = vmatmul.f32.gmra.mxu0 %v1237
        %v1514 = vpop.f32.mrf.mxu0
        %v1515 = vadd.f32 %v1359, %v1514
        %1516 = vmatmul.f32.gmra.mxu0 %v1241
        %v1517 = vpop.f32.mrf.mxu0
        %v1518 = vadd.f32 %v1364, %v1517
        %1519 = vmatmul.f32.gmra.mxu0 %v1245
        %v1520 = vpop.f32.mrf.mxu0
        %v1521 = vadd.f32 %v1369, %v1520
        %1522 = vmatmul.f32.gmra.mxu0 %v1249
        %v1523 = vpop.f32.mrf.mxu0
        %v1524 = vadd.f32 %v1374, %v1523
        %1525 = vmatmul.f32.gmra.mxu0 %v1253
        %v1526 = vpop.f32.mrf.mxu0
        %v1527 = vadd.f32 %v1379, %v1526
        %1528 = vmatmul.f32.gmra.mxu0 %v1257
        %v1529 = vpop.f32.mrf.mxu0
        %v1530 = vadd.f32 %v1384, %v1529
        %1531 = vmatmul.f32.gmra.mxu0 %v1261
        %v1532 = vpop.f32.mrf.mxu0
        %v1533 = vadd.f32 %v1389, %v1532
        %1534 = vdwg.mxu0
        %1535 = vmatpush.msra.mxu0 %v940
        %1536 = vmatpush.msra.mxu0 %v939
        %1537 = vmatpush.msra.mxu0 %v938
        %1538 = vmatpush.msra.mxu0 %v937
        %1539 = vmatpush.msra.mxu0 %v904
        %1540 = vmatpush.msra.mxu0 %v903
        %1541 = vmatpush.msra.mxu0 %v902
        %1542 = vmatpush.msra.mxu0 %v901
        %1543 = vmatpush.msra.mxu0 %v711
        %1544 = vmatpush.msra.mxu0 %v709
        %1545 = vmatpush.msra.mxu0 %v707
        %1546 = vmatpush.msra.mxu0 %v705
        %1547 = vmatpush.msra.mxu0 %v860
        %1548 = vmatpush.msra.mxu0 %v859
        %1549 = vmatpush.msra.mxu0 %v858
        %1550 = vmatpush.msra.mxu0 %v857
        %1551 = vmatmul.f32.gmra.mxu0 %v1182
        %v1552 = vpop.f32.mrf.mxu0
        %v1553 = vadd.f32 %v1473, %v1552
        %1554 = vmatmul.f32.gmra.mxu0 %v1186
        %v1555 = vpop.f32.mrf.mxu0
        %v1556 = vadd.f32 %v1476, %v1555
        %1557 = vmatmul.f32.gmra.mxu0 %v1190
        %v1558 = vpop.f32.mrf.mxu0
        %v1559 = vadd.f32 %v1479, %v1558
        %1560 = vmatmul.f32.gmra.mxu0 %v1194
        %v1561 = vpop.f32.mrf.mxu0
        %v1562 = vadd.f32 %v1482, %v1561
        %1563 = vmatmul.f32.gmra.mxu0 %v1198
        %v1564 = vpop.f32.mrf.mxu0
        %v1565 = vadd.f32 %v1485, %v1564
        %1566 = vmatmul.f32.gmra.mxu0 %v1202
        %v1567 = vpop.f32.mrf.mxu0
        %v1568 = vadd.f32 %v1488, %v1567
        %1569 = vmatmul.f32.gmra.mxu0 %v1206
        %v1570 = vpop.f32.mrf.mxu0
        %v1571 = vadd.f32 %v1491, %v1570
        %1572 = vmatmul.f32.gmra.mxu0 %v1210
        %v1573 = vpop.f32.mrf.mxu0
        %v1574 = vadd.f32 %v1494, %v1573
        %1575 = vmatmul.f32.gmra.mxu0 %v1214
        %v1576 = vpop.f32.mrf.mxu0
        %v1577 = vadd.f32 %v1497, %v1576
        %1578 = vmatmul.f32.gmra.mxu0 %v1218
        %v1579 = vpop.f32.mrf.mxu0
        %v1580 = vadd.f32 %v1500, %v1579
        %1581 = vmatmul.f32.gmra.mxu0 %v1222
        %v1582 = vpop.f32.mrf.mxu0
        %v1583 = vadd.f32 %v1503, %v1582
        %1584 = vmatmul.f32.gmra.mxu0 %v1226
        %v1585 = vpop.f32.mrf.mxu0
        %v1586 = vadd.f32 %v1506, %v1585
        %1587 = vmatmul.f32.gmra.mxu0 %v1230
        %v1588 = vpop.f32.mrf.mxu0
        %v1589 = vadd.f32 %v1509, %v1588
        %1590 = vmatmul.f32.gmra.mxu0 %v1234
        %v1591 = vpop.f32.mrf.mxu0
        %v1592 = vadd.f32 %v1512, %v1591
        %1593 = vmatmul.f32.gmra.mxu0 %v1238
        %v1594 = vpop.f32.mrf.mxu0
        %v1595 = vadd.f32 %v1515, %v1594
        %1596 = vmatmul.f32.gmra.mxu0 %v1242
        %v1597 = vpop.f32.mrf.mxu0
        %v1598 = vadd.f32 %v1518, %v1597
        %1599 = vmatmul.f32.gmra.mxu0 %v1246
        %v1600 = vpop.f32.mrf.mxu0
        %v1601 = vadd.f32 %v1521, %v1600
        %1602 = vmatmul.f32.gmra.mxu0 %v1250
        %v1603 = vpop.f32.mrf.mxu0
        %v1604 = vadd.f32 %v1524, %v1603
        %1605 = vmatmul.f32.gmra.mxu0 %v1254
        %v1606 = vpop.f32.mrf.mxu0
        %v1607 = vadd.f32 %v1527, %v1606
        %1608 = vmatmul.f32.gmra.mxu0 %v1258
        %v1609 = vpop.f32.mrf.mxu0
        %v1610 = vadd.f32 %v1530, %v1609
        %1611 = vmatmul.f32.gmra.mxu0 %v1262
        %v1612 = vpop.f32.mrf.mxu0
        %v1613 = vadd.f32 %v1533, %v1612
        %1614 = vdwg.mxu0
        %1615 = vmatpush.msra.mxu0 %v1056
        %1616 = vmatpush.msra.mxu0 %v1055
        %1617 = vmatpush.msra.mxu0 %v1054
        %1618 = vmatpush.msra.mxu0 %v1053
        %1619 = vmatpush.msra.mxu0 %v719
        %1620 = vmatpush.msra.mxu0 %v717
        %1621 = vmatpush.msra.mxu0 %v715
        %1622 = vmatpush.msra.mxu0 %v713
        %1623 = vmatpush.msra.mxu0 %v1012
        %1624 = vmatpush.msra.mxu0 %v1011
        %1625 = vmatpush.msra.mxu0 %v1010
        %1626 = vmatpush.msra.mxu0 %v1009
        %1627 = vmatpush.msra.mxu0 %v976
        %1628 = vmatpush.msra.mxu0 %v975
        %1629 = vmatpush.msra.mxu0 %v974
        %1630 = vmatpush.msra.mxu0 %v973
        %1631 = vmatmul.f32.gmra.mxu0 %v1183
        %v1632 = vpop.f32.mrf.mxu0
        %v1633 = vadd.f32 %v1553, %v1632
        %1634 = vmatmul.f32.gmra.mxu0 %v1187
        %v1635 = vpop.f32.mrf.mxu0
        %v1636 = vadd.f32 %v1556, %v1635
        %1637 = vmatmul.f32.gmra.mxu0 %v1191
        %v1638 = vpop.f32.mrf.mxu0
        %v1639 = vadd.f32 %v1559, %v1638
        %1640 = vmatmul.f32.gmra.mxu0 %v1195
        %v1641 = vpop.f32.mrf.mxu0
        %v1642 = vadd.f32 %v1562, %v1641
        %1643 = vmatmul.f32.gmra.mxu0 %v1199
        %v1644 = vpop.f32.mrf.mxu0
        %v1645 = vadd.f32 %v1565, %v1644
        %1646 = vmatmul.f32.gmra.mxu0 %v1203
        %v1647 = vpop.f32.mrf.mxu0
        %v1648 = vadd.f32 %v1568, %v1647
        %1649 = vmatmul.f32.gmra.mxu0 %v1207
        %v1650 = vpop.f32.mrf.mxu0
        %v1651 = vadd.f32 %v1571, %v1650
        %1652 = vmatmul.f32.gmra.mxu0 %v1211
        %v1653 = vpop.f32.mrf.mxu0
        %v1654 = vadd.f32 %v1574, %v1653
        %1655 = vmatmul.f32.gmra.mxu0 %v1215
        %v1656 = vpop.f32.mrf.mxu0
        %v1657 = vadd.f32 %v1577, %v1656
        %1658 = vmatmul.f32.gmra.mxu0 %v1219
        %v1659 = vpop.f32.mrf.mxu0
        %v1660 = vadd.f32 %v1580, %v1659
        %1661 = vmatmul.f32.gmra.mxu0 %v1223
        %v1662 = vpop.f32.mrf.mxu0
        %v1663 = vadd.f32 %v1583, %v1662
        %1664 = vmatmul.f32.gmra.mxu0 %v1227
        %v1665 = vpop.f32.mrf.mxu0
        %v1666 = vadd.f32 %v1586, %v1665
        %1667 = vmatmul.f32.gmra.mxu0 %v1231
        %v1668 = vpop.f32.mrf.mxu0
        %v1669 = vadd.f32 %v1589, %v1668
        %1670 = vmatmul.f32.gmra.mxu0 %v1235
        %v1671 = vpop.f32.mrf.mxu0
        %v1672 = vadd.f32 %v1592, %v1671
        %1673 = vmatmul.f32.gmra.mxu0 %v1239
        %v1674 = vpop.f32.mrf.mxu0
        %v1675 = vadd.f32 %v1595, %v1674
        %1676 = vmatmul.f32.gmra.mxu0 %v1243
        %v1677 = vpop.f32.mrf.mxu0
        %v1678 = vadd.f32 %v1598, %v1677
        %1679 = vmatmul.f32.gmra.mxu0 %v1247
        %v1680 = vpop.f32.mrf.mxu0
        %v1681 = vadd.f32 %v1601, %v1680
        %1682 = vmatmul.f32.gmra.mxu0 %v1251
        %v1683 = vpop.f32.mrf.mxu0
        %v1684 = vadd.f32 %v1604, %v1683
        %1685 = vmatmul.f32.gmra.mxu0 %v1255
        %v1686 = vpop.f32.mrf.mxu0
        %v1687 = vadd.f32 %v1607, %v1686
        %1688 = vmatmul.f32.gmra.mxu0 %v1259
        %v1689 = vpop.f32.mrf.mxu0
        %v1690 = vadd.f32 %v1610, %v1689
        %1691 = vmatmul.f32.gmra.mxu0 %v1263
        %v1692 = vpop.f32.mrf.mxu0
        %v1693 = vadd.f32 %v1613, %v1692
        %1694 = vdwg.mxu0
        %1695 = vmatpush.msra.mxu0 0.0
        %1696 = vmatpush.msra.mxu0 0.0
        %1697 = vmatpush.msra.mxu0 0.0
        %1698 = vmatpush.msra.mxu0 0.0
        %1699 = vmatpush.msra.mxu0 %v1164
        %1700 = vmatpush.msra.mxu0 %v1163
        %1701 = vmatpush.msra.mxu0 %v1162
        %1702 = vmatpush.msra.mxu0 %v1161
        %1703 = vmatpush.msra.mxu0 %v1128
        %1704 = vmatpush.msra.mxu0 %v1127
        %1705 = vmatpush.msra.mxu0 %v1126
        %1706 = vmatpush.msra.mxu0 %v1125
        %1707 = vmatpush.msra.mxu0 %v1092
        %1708 = vmatpush.msra.mxu0 %v1091
        %1709 = vmatpush.msra.mxu0 %v1090
        %1710 = vmatpush.msra.mxu0 %v1089
        %1711 = vmatmul.f32.gmra.mxu0 %v1393
        %v1712 = vpop.f32.mrf.mxu0
        %v1713 = vadd.f32 %v1633, %v1712
        %1714 = vmatmul.f32.gmra.mxu0 %v1396
        %v1715 = vpop.f32.mrf.mxu0
        %v1716 = vadd.f32 %v1636, %v1715
        %1717 = vmatmul.f32.gmra.mxu0 %v1399
        %v1718 = vpop.f32.mrf.mxu0
        %v1719 = vadd.f32 %v1639, %v1718
        %1720 = vmatmul.f32.gmra.mxu0 %v1402
        %v1721 = vpop.f32.mrf.mxu0
        %v1722 = vadd.f32 %v1642, %v1721
        %1723 = vmatmul.f32.gmra.mxu0 %v1405
        %v1724 = vpop.f32.mrf.mxu0
        %v1725 = vadd.f32 %v1645, %v1724
        %1726 = vmatmul.f32.gmra.mxu0 %v1408
        %v1727 = vpop.f32.mrf.mxu0
        %v1728 = vadd.f32 %v1648, %v1727
        %1729 = vmatmul.f32.gmra.mxu0 %v1411
        %v1730 = vpop.f32.mrf.mxu0
        %v1731 = vadd.f32 %v1651, %v1730
        %1732 = vmatmul.f32.gmra.mxu0 %v1414
        %v1733 = vpop.f32.mrf.mxu0
        %v1734 = vadd.f32 %v1654, %v1733
        %1735 = vmatmul.f32.gmra.mxu0 %v1417
        %v1736 = vpop.f32.mrf.mxu0
        %v1737 = vadd.f32 %v1657, %v1736
        %1738 = vmatmul.f32.gmra.mxu0 %v1420
        %v1739 = vpop.f32.mrf.mxu0
        %v1740 = vadd.f32 %v1660, %v1739
        %1741 = vmatmul.f32.gmra.mxu0 %v1423
        %v1742 = vpop.f32.mrf.mxu0
        %v1743 = vadd.f32 %v1663, %v1742
        %1744 = vmatmul.f32.gmra.mxu0 %v1426
        %v1745 = vpop.f32.mrf.mxu0
        %v1746 = vadd.f32 %v1666, %v1745
        %1747 = vmatmul.f32.gmra.mxu0 %v1429
        %v1748 = vpop.f32.mrf.mxu0
        %v1749 = vadd.f32 %v1669, %v1748
        %1750 = vmatmul.f32.gmra.mxu0 %v1432
        %v1751 = vpop.f32.mrf.mxu0
        %v1752 = vadd.f32 %v1672, %v1751
        %1753 = vmatmul.f32.gmra.mxu0 %v1435
        %v1754 = vpop.f32.mrf.mxu0
        %v1755 = vadd.f32 %v1675, %v1754
        %1756 = vmatmul.f32.gmra.mxu0 %v1438
        %v1757 = vpop.f32.mrf.mxu0
        %v1758 = vadd.f32 %v1678, %v1757
        %1759 = vmatmul.f32.gmra.mxu0 %v1441
        %v1760 = vpop.f32.mrf.mxu0
        %v1761 = vadd.f32 %v1681, %v1760
        %1762 = vmatmul.f32.gmra.mxu0 %v1444
        %v1763 = vpop.f32.mrf.mxu0
        %v1764 = vadd.f32 %v1684, %v1763
        %1765 = vmatmul.f32.gmra.mxu0 %v1447
        %v1766 = vpop.f32.mrf.mxu0
        %v1767 = vadd.f32 %v1687, %v1766
        %1768 = vmatmul.f32.gmra.mxu0 %v1450
        %v1769 = vpop.f32.mrf.mxu0
        %v1770 = vadd.f32 %v1690, %v1769
        %1771 = vmatmul.f32.gmra.mxu0 %v1453
        %v1772 = vpop.f32.mrf.mxu0
        %v1773 = vadd.f32 %v1693, %v1772
        %1774 = vdwg.mxu0
        %1775 = vmatpush.msra.mxu0 %v839
        %1776 = vmatpush.msra.mxu0 %v838
        %1777 = vmatpush.msra.mxu0 %v837
        %1778 = vmatpush.msra.mxu0 %v836
        %1779 = vmatpush.msra.mxu0 %v802
        %1780 = vmatpush.msra.mxu0 %v801
        %1781 = vmatpush.msra.mxu0 %v800
        %1782 = vmatpush.msra.mxu0 %v799
        %1783 = vmatpush.msra.mxu0 %v765
        %1784 = vmatpush.msra.mxu0 %v764
        %1785 = vmatpush.msra.mxu0 %v763
        %1786 = vmatpush.msra.mxu0 %v762
        %1787 = vmatpush.msra.mxu0 %v704
        %1788 = vmatpush.msra.mxu0 %v702
        %1789 = vmatpush.msra.mxu0 %v700
        %1790 = vmatpush.msra.mxu0 %v698
        %1791 = vmatmul.f32.gmra.mxu0 %v1181
        %v1792 = vpop.f32.mrf.mxu0
        %v1793 = vadd.f32 %v1289, %v1792
        %1794 = vmatmul.f32.gmra.mxu0 %v1185
        %v1795 = vpop.f32.mrf.mxu0
        %v1796 = vadd.f32 %v1294, %v1795
        %1797 = vmatmul.f32.gmra.mxu0 %v1189
        %v1798 = vpop.f32.mrf.mxu0
        %v1799 = vadd.f32 %v1299, %v1798
        %1800 = vmatmul.f32.gmra.mxu0 %v1193
        %v1801 = vpop.f32.mrf.mxu0
        %v1802 = vadd.f32 %v1304, %v1801
        %1803 = vmatmul.f32.gmra.mxu0 %v1197
        %v1804 = vpop.f32.mrf.mxu0
        %v1805 = vadd.f32 %v1309, %v1804
        %1806 = vmatmul.f32.gmra.mxu0 %v1201
        %v1807 = vpop.f32.mrf.mxu0
        %v1808 = vadd.f32 %v1314, %v1807
        %1809 = vmatmul.f32.gmra.mxu0 %v1205
        %v1810 = vpop.f32.mrf.mxu0
        %v1811 = vadd.f32 %v1319, %v1810
        %1812 = vmatmul.f32.gmra.mxu0 %v1209
        %v1813 = vpop.f32.mrf.mxu0
        %v1814 = vadd.f32 %v1324, %v1813
        %1815 = vmatmul.f32.gmra.mxu0 %v1213
        %v1816 = vpop.f32.mrf.mxu0
        %v1817 = vadd.f32 %v1329, %v1816
        %1818 = vmatmul.f32.gmra.mxu0 %v1217
        %v1819 = vpop.f32.mrf.mxu0
        %v1820 = vadd.f32 %v1334, %v1819
        %1821 = vmatmul.f32.gmra.mxu0 %v1221
        %v1822 = vpop.f32.mrf.mxu0
        %v1823 = vadd.f32 %v1339, %v1822
        %1824 = vmatmul.f32.gmra.mxu0 %v1225
        %v1825 = vpop.f32.mrf.mxu0
        %v1826 = vadd.f32 %v1344, %v1825
        %1827 = vmatmul.f32.gmra.mxu0 %v1229
        %v1828 = vpop.f32.mrf.mxu0
        %v1829 = vadd.f32 %v1349, %v1828
        %1830 = vmatmul.f32.gmra.mxu0 %v1233
        %v1831 = vpop.f32.mrf.mxu0
        %v1832 = vadd.f32 %v1354, %v1831
        %1833 = vmatmul.f32.gmra.mxu0 %v1237
        %v1834 = vpop.f32.mrf.mxu0
        %v1835 = vadd.f32 %v1359, %v1834
        %1836 = vmatmul.f32.gmra.mxu0 %v1241
        %v1837 = vpop.f32.mrf.mxu0
        %v1838 = vadd.f32 %v1364, %v1837
        %1839 = vmatmul.f32.gmra.mxu0 %v1245
        %v1840 = vpop.f32.mrf.mxu0
        %v1841 = vadd.f32 %v1369, %v1840
        %1842 = vmatmul.f32.gmra.mxu0 %v1249
        %v1843 = vpop.f32.mrf.mxu0
        %v1844 = vadd.f32 %v1374, %v1843
        %1845 = vmatmul.f32.gmra.mxu0 %v1253
        %v1846 = vpop.f32.mrf.mxu0
        %v1847 = vadd.f32 %v1379, %v1846
        %1848 = vmatmul.f32.gmra.mxu0 %v1257
        %v1849 = vpop.f32.mrf.mxu0
        %v1850 = vadd.f32 %v1384, %v1849
        %1851 = vmatmul.f32.gmra.mxu0 %v1261
        %v1852 = vpop.f32.mrf.mxu0
        %v1853 = vadd.f32 %v1389, %v1852
        %1854 = vdwg.mxu0
        %1855 = vmatpush.msra.mxu0 %v956
        %1856 = vmatpush.msra.mxu0 %v955
        %1857 = vmatpush.msra.mxu0 %v954
        %1858 = vmatpush.msra.mxu0 %v953
        %1859 = vmatpush.msra.mxu0 %v920
        %1860 = vmatpush.msra.mxu0 %v919
        %1861 = vmatpush.msra.mxu0 %v918
        %1862 = vmatpush.msra.mxu0 %v917
        %1863 = vmatpush.msra.mxu0 %v712
        %1864 = vmatpush.msra.mxu0 %v710
        %1865 = vmatpush.msra.mxu0 %v708
        %1866 = vmatpush.msra.mxu0 %v706
        %1867 = vmatpush.msra.mxu0 %v876
        %1868 = vmatpush.msra.mxu0 %v875
        %1869 = vmatpush.msra.mxu0 %v874
        %1870 = vmatpush.msra.mxu0 %v873
        %1871 = vmatmul.f32.gmra.mxu0 %v1182
        %v1872 = vpop.f32.mrf.mxu0
        %v1873 = vadd.f32 %v1793, %v1872
        %1874 = vmatmul.f32.gmra.mxu0 %v1186
        %v1875 = vpop.f32.mrf.mxu0
        %v1876 = vadd.f32 %v1796, %v1875
        %1877 = vmatmul.f32.gmra.mxu0 %v1190
        %v1878 = vpop.f32.mrf.mxu0
        %v1879 = vadd.f32 %v1799, %v1878
        %1880 = vmatmul.f32.gmra.mxu0 %v1194
        %v1881 = vpop.f32.mrf.mxu0
        %v1882 = vadd.f32 %v1802, %v1881
        %1883 = vmatmul.f32.gmra.mxu0 %v1198
        %v1884 = vpop.f32.mrf.mxu0
        %v1885 = vadd.f32 %v1805, %v1884
        %1886 = vmatmul.f32.gmra.mxu0 %v1202
        %v1887 = vpop.f32.mrf.mxu0
        %v1888 = vadd.f32 %v1808, %v1887
        %1889 = vmatmul.f32.gmra.mxu0 %v1206
        %v1890 = vpop.f32.mrf.mxu0
        %v1891 = vadd.f32 %v1811, %v1890
        %1892 = vmatmul.f32.gmra.mxu0 %v1210
        %v1893 = vpop.f32.mrf.mxu0
        %v1894 = vadd.f32 %v1814, %v1893
        %1895 = vmatmul.f32.gmra.mxu0 %v1214
        %v1896 = vpop.f32.mrf.mxu0
        %v1897 = vadd.f32 %v1817, %v1896
        %1898 = vmatmul.f32.gmra.mxu0 %v1218
        %v1899 = vpop.f32.mrf.mxu0
        %v1900 = vadd.f32 %v1820, %v1899
        %1901 = vmatmul.f32.gmra.mxu0 %v1222
        %v1902 = vpop.f32.mrf.mxu0
        %v1903 = vadd.f32 %v1823, %v1902
        %1904 = vmatmul.f32.gmra.mxu0 %v1226
        %v1905 = vpop.f32.mrf.mxu0
        %v1906 = vadd.f32 %v1826, %v1905
        %1907 = vmatmul.f32.gmra.mxu0 %v1230
        %v1908 = vpop.f32.mrf.mxu0
        %v1909 = vadd.f32 %v1829, %v1908
        %1910 = vmatmul.f32.gmra.mxu0 %v1234
        %v1911 = vpop.f32.mrf.mxu0
        %v1912 = vadd.f32 %v1832, %v1911
        %1913 = vmatmul.f32.gmra.mxu0 %v1238
        %v1914 = vpop.f32.mrf.mxu0
        %v1915 = vadd.f32 %v1835, %v1914
        %1916 = vmatmul.f32.gmra.mxu0 %v1242
        %v1917 = vpop.f32.mrf.mxu0
        %v1918 = vadd.f32 %v1838, %v1917
        %1919 = vmatmul.f32.gmra.mxu0 %v1246
        %v1920 = vpop.f32.mrf.mxu0
        %v1921 = vadd.f32 %v1841, %v1920
        %1922 = vmatmul.f32.gmra.mxu0 %v1250
        %v1923 = vpop.f32.mrf.mxu0
        %v1924 = vadd.f32 %v1844, %v1923
        %1925 = vmatmul.f32.gmra.mxu0 %v1254
        %v1926 = vpop.f32.mrf.mxu0
        %v1927 = vadd.f32 %v1847, %v1926
        %1928 = vmatmul.f32.gmra.mxu0 %v1258
        %v1929 = vpop.f32.mrf.mxu0
        %v1930 = vadd.f32 %v1850, %v1929
        %1931 = vmatmul.f32.gmra.mxu0 %v1262
        %v1932 = vpop.f32.mrf.mxu0
        %v1933 = vadd.f32 %v1853, %v1932
        %1934 = vdwg.mxu0
        %1935 = vmatpush.msra.mxu0 %v1072
        %1936 = vmatpush.msra.mxu0 %v1071
        %1937 = vmatpush.msra.mxu0 %v1070
        %1938 = vmatpush.msra.mxu0 %v1069
        %1939 = vmatpush.msra.mxu0 %v720
        %1940 = vmatpush.msra.mxu0 %v718
        %1941 = vmatpush.msra.mxu0 %v716
        %1942 = vmatpush.msra.mxu0 %v714
        %1943 = vmatpush.msra.mxu0 %v1028
        %1944 = vmatpush.msra.mxu0 %v1027
        %1945 = vmatpush.msra.mxu0 %v1026
        %1946 = vmatpush.msra.mxu0 %v1025
        %1947 = vmatpush.msra.mxu0 %v992
        %1948 = vmatpush.msra.mxu0 %v991
        %1949 = vmatpush.msra.mxu0 %v990
        %1950 = vmatpush.msra.mxu0 %v989
        %1951 = vmatmul.f32.gmra.mxu0 %v1183
        %v1952 = vpop.f32.mrf.mxu0
        %v1953 = vadd.f32 %v1873, %v1952
        %1954 = vmatmul.f32.gmra.mxu0 %v1187
        %v1955 = vpop.f32.mrf.mxu0
        %v1956 = vadd.f32 %v1876, %v1955
        %1957 = vmatmul.f32.gmra.mxu0 %v1191
        %v1958 = vpop.f32.mrf.mxu0
        %v1959 = vadd.f32 %v1879, %v1958
        %1960 = vmatmul.f32.gmra.mxu0 %v1195
        %v1961 = vpop.f32.mrf.mxu0
        %v1962 = vadd.f32 %v1882, %v1961
        %1963 = vmatmul.f32.gmra.mxu0 %v1199
        %v1964 = vpop.f32.mrf.mxu0
        %v1965 = vadd.f32 %v1885, %v1964
        %1966 = vmatmul.f32.gmra.mxu0 %v1203
        %v1967 = vpop.f32.mrf.mxu0
        %v1968 = vadd.f32 %v1888, %v1967
        %1969 = vmatmul.f32.gmra.mxu0 %v1207
        %v1970 = vpop.f32.mrf.mxu0
        %v1971 = vadd.f32 %v1891, %v1970
        %1972 = vmatmul.f32.gmra.mxu0 %v1211
        %v1973 = vpop.f32.mrf.mxu0
        %v1974 = vadd.f32 %v1894, %v1973
        %1975 = vmatmul.f32.gmra.mxu0 %v1215
        %v1976 = vpop.f32.mrf.mxu0
        %v1977 = vadd.f32 %v1897, %v1976
        %1978 = vmatmul.f32.gmra.mxu0 %v1219
        %v1979 = vpop.f32.mrf.mxu0
        %v1980 = vadd.f32 %v1900, %v1979
        %1981 = vmatmul.f32.gmra.mxu0 %v1223
        %v1982 = vpop.f32.mrf.mxu0
        %v1983 = vadd.f32 %v1903, %v1982
        %1984 = vmatmul.f32.gmra.mxu0 %v1227
        %v1985 = vpop.f32.mrf.mxu0
        %v1986 = vadd.f32 %v1906, %v1985
        %1987 = vmatmul.f32.gmra.mxu0 %v1231
        %v1988 = vpop.f32.mrf.mxu0
        %v1989 = vadd.f32 %v1909, %v1988
        %1990 = vmatmul.f32.gmra.mxu0 %v1235
        %v1991 = vpop.f32.mrf.mxu0
        %v1992 = vadd.f32 %v1912, %v1991
        %1993 = vmatmul.f32.gmra.mxu0 %v1239
        %v1994 = vpop.f32.mrf.mxu0
        %v1995 = vadd.f32 %v1915, %v1994
        %1996 = vmatmul.f32.gmra.mxu0 %v1243
        %v1997 = vpop.f32.mrf.mxu0
        %v1998 = vadd.f32 %v1918, %v1997
        %1999 = vmatmul.f32.gmra.mxu0 %v1247
        %v2000 = vpop.f32.mrf.mxu0
        %v2001 = vadd.f32 %v1921, %v2000
        %2002 = vmatmul.f32.gmra.mxu0 %v1251
        %v2003 = vpop.f32.mrf.mxu0
        %v2004 = vadd.f32 %v1924, %v2003
        %2005 = vmatmul.f32.gmra.mxu0 %v1255
        %v2006 = vpop.f32.mrf.mxu0
        %v2007 = vadd.f32 %v1927, %v2006
        %2008 = vmatmul.f32.gmra.mxu0 %v1259
        %v2009 = vpop.f32.mrf.mxu0
        %v2010 = vadd.f32 %v1930, %v2009
        %2011 = vmatmul.f32.gmra.mxu0 %v1263
        %v2012 = vpop.f32.mrf.mxu0
        %v2013 = vadd.f32 %v1933, %v2012
        %2014 = vdwg.mxu0
        %2015 = vmatpush.msra.mxu0 0.0
        %2016 = vmatpush.msra.mxu0 0.0
        %2017 = vmatpush.msra.mxu0 0.0
        %2018 = vmatpush.msra.mxu0 0.0
        %2019 = vmatpush.msra.mxu0 %v1180
        %2020 = vmatpush.msra.mxu0 %v1179
        %2021 = vmatpush.msra.mxu0 %v1178
        %2022 = vmatpush.msra.mxu0 %v1177
        %2023 = vmatpush.msra.mxu0 %v1144
        %2024 = vmatpush.msra.mxu0 %v1143
        %2025 = vmatpush.msra.mxu0 %v1142
        %2026 = vmatpush.msra.mxu0 %v1141
        %2027 = vmatpush.msra.mxu0 %v1108
        %2028 = vmatpush.msra.mxu0 %v1107
        %2029 = vmatpush.msra.mxu0 %v1106
        %2030 = vmatpush.msra.mxu0 %v1105
        %2031 = vmatmul.f32.gmra.mxu0 %v1393
        %v2032 = vpop.f32.mrf.mxu0
        %v2033 = vadd.f32 %v1953, %v2032
        %2034 = vmatmul.f32.gmra.mxu0 %v1396
        %v2035 = vpop.f32.mrf.mxu0
        %v2036 = vadd.f32 %v1956, %v2035
        %2037 = vmatmul.f32.gmra.mxu0 %v1399
        %v2038 = vpop.f32.mrf.mxu0
        %v2039 = vadd.f32 %v1959, %v2038
        %2040 = vmatmul.f32.gmra.mxu0 %v1402
        %v2041 = vpop.f32.mrf.mxu0
        %v2042 = vadd.f32 %v1962, %v2041
        %2043 = vmatmul.f32.gmra.mxu0 %v1405
        %v2044 = vpop.f32.mrf.mxu0
        %v2045 = vadd.f32 %v1965, %v2044
        %2046 = vmatmul.f32.gmra.mxu0 %v1408
        %v2047 = vpop.f32.mrf.mxu0
        %v2048 = vadd.f32 %v1968, %v2047
        %2049 = vmatmul.f32.gmra.mxu0 %v1411
        %v2050 = vpop.f32.mrf.mxu0
        %v2051 = vadd.f32 %v1971, %v2050
        %2052 = vmatmul.f32.gmra.mxu0 %v1414
        %v2053 = vpop.f32.mrf.mxu0
        %v2054 = vadd.f32 %v1974, %v2053
        %2055 = vmatmul.f32.gmra.mxu0 %v1417
        %v2056 = vpop.f32.mrf.mxu0
        %v2057 = vadd.f32 %v1977, %v2056
        %2058 = vmatmul.f32.gmra.mxu0 %v1420
        %v2059 = vpop.f32.mrf.mxu0
        %v2060 = vadd.f32 %v1980, %v2059
        %2061 = vmatmul.f32.gmra.mxu0 %v1423
        %v2062 = vpop.f32.mrf.mxu0
        %v2063 = vadd.f32 %v1983, %v2062
        %2064 = vmatmul.f32.gmra.mxu0 %v1426
        %v2065 = vpop.f32.mrf.mxu0
        %v2066 = vadd.f32 %v1986, %v2065
        %2067 = vmatmul.f32.gmra.mxu0 %v1429
        %v2068 = vpop.f32.mrf.mxu0
        %v2069 = vadd.f32 %v1989, %v2068
        %2070 = vmatmul.f32.gmra.mxu0 %v1432
        %v2071 = vpop.f32.mrf.mxu0
        %v2072 = vadd.f32 %v1992, %v2071
        %2073 = vmatmul.f32.gmra.mxu0 %v1435
        %v2074 = vpop.f32.mrf.mxu0
        %v2075 = vadd.f32 %v1995, %v2074
        %2076 = vmatmul.f32.gmra.mxu0 %v1438
        %v2077 = vpop.f32.mrf.mxu0
        %v2078 = vadd.f32 %v1998, %v2077
        %2079 = vmatmul.f32.gmra.mxu0 %v1441
        %v2080 = vpop.f32.mrf.mxu0
        %v2081 = vadd.f32 %v2001, %v2080
        %2082 = vmatmul.f32.gmra.mxu0 %v1444
        %v2083 = vpop.f32.mrf.mxu0
        %v2084 = vadd.f32 %v2004, %v2083
        %2085 = vmatmul.f32.gmra.mxu0 %v1447
        %v2086 = vpop.f32.mrf.mxu0
        %v2087 = vadd.f32 %v2007, %v2086
        %2088 = vmatmul.f32.gmra.mxu0 %v1450
        %v2089 = vpop.f32.mrf.mxu0
        %v2090 = vadd.f32 %v2010, %v2089
        %2091 = vmatmul.f32.gmra.mxu0 %v1453
        %v2092 = vpop.f32.mrf.mxu0
        %v2093 = vadd.f32 %v2013, %v2092
        %2094 = vdwg.mxu0
        %v2095 = vmax.f32 %v1713, 0.0
        %v2096 = vmax.f32 %v2033, 0.0
        %v2097 = vmax.f32 %v1716, 0.0
        %v2098 = vmax.f32 %v2036, 0.0
        %v2099 = vmax.f32 %v1719, 0.0
        %v2100 = vmax.f32 %v2039, 0.0
        %v2101 = vmax.f32 %v1722, 0.0
        %v2102 = vmax.f32 %v2042, 0.0
        %v2103 = vmax.f32 %v1725, 0.0
        %v2104 = vmax.f32 %v2045, 0.0
        %v2105 = vmax.f32 %v1728, 0.0
        %v2106 = vmax.f32 %v2048, 0.0
        %v2107 = vmax.f32 %v1731, 0.0
        %v2108 = vmax.f32 %v2051, 0.0
        %v2109 = vmax.f32 %v1734, 0.0
        %v2110 = vmax.f32 %v2054, 0.0
        %v2111 = vmax.f32 %v1737, 0.0
        %v2112 = vmax.f32 %v2057, 0.0
        %v2113 = vmax.f32 %v1740, 0.0
        %v2114 = vmax.f32 %v2060, 0.0
        %v2115 = vmax.f32 %v1743, 0.0
        %v2116 = vmax.f32 %v2063, 0.0
        %v2117 = vmax.f32 %v1746, 0.0
        %v2118 = vmax.f32 %v2066, 0.0
        %v2119 = vmax.f32 %v1749, 0.0
        %v2120 = vmax.f32 %v2069, 0.0
        %v2121 = vmax.f32 %v1752, 0.0
        %v2122 = vmax.f32 %v2072, 0.0
        %v2123 = vmax.f32 %v1755, 0.0
        %v2124 = vmax.f32 %v2075, 0.0
        %v2125 = vmax.f32 %v1758, 0.0
        %v2126 = vmax.f32 %v2078, 0.0
        %v2127 = vmax.f32 %v1761, 0.0
        %v2128 = vmax.f32 %v2081, 0.0
        %v2129 = vmax.f32 %v1764, 0.0
        %v2130 = vmax.f32 %v2084, 0.0
        %v2131 = vmax.f32 %v1767, 0.0
        %v2132 = vmax.f32 %v2087, 0.0
        %v2133 = vmax.f32 %v1770, 0.0
        %v2134 = vmax.f32 %v2090, 0.0
        %v2135 = vmax.f32 %v1773, 0.0
        %v2136 = vmax.f32 %v2093, 0.0
        %v2137 = vld [vmem:[%s5] sm:$0xff]
        %v2138 = vld [vmem:[%s5 + $0x8] sm:$0xff]
        %v2139 = vld [vmem:[%s5 + $0x10] sm:$0xff]
        %v2140 = vld [vmem:[%s5 + $0x18] sm:$0xff]
        %v2141 = vld [vmem:[%s5 + $0x20] sm:$0xff]
        %v2142 = vld [vmem:[%s5 + $0x28] sm:$0xff]
        %v2143 = vld [vmem:[%s5 + $0x30] sm:$0xff]
        %v2144 = vld [vmem:[%s5 + $0x38] sm:$0xff]
        %v2145 = vld [vmem:[%s5 + $0x40] sm:$0xff]
        %v2146 = vld [vmem:[%s5 + $0x48] sm:$0xff]
        %v2147 = vld [vmem:[%s5 + $0x50] sm:$0xff]
        %v2148 = vld [vmem:[%s5 + $0x58] sm:$0xff]
        %v2149 = vld [vmem:[%s5 + $0x60] sm:$0xff]
        %v2150 = vld [vmem:[%s5 + $0x68] sm:$0xff]
        %v2151 = vld [vmem:[%s5 + $0x70] sm:$0xff]
        %v2152 = vld [vmem:[%s5 + $0x78] sm:$0xff]
        %v2153 = vld [vmem:[%s5 + $0x80] sm:$0xff]
        %v2154 = vld [vmem:[%s5 + $0x88] sm:$0xff]
        %v2155 = vld [vmem:[%s5 + $0x90] sm:$0xff]
        %v2156 = vld [vmem:[%s5 + $0x98] sm:$0xff]
        %v2157 = vld [vmem:[%s5 + $0xa0] sm:$0xff]
        %v2158 = vld [vmem:[%s5 + $0xa8] sm:$0xff]
        %v2159 = vld [vmem:[%s5 + $0xb0] sm:$0xff]
        %v2160 = vld [vmem:[%s5 + $0xb8] sm:$0xff]
        %v2161 = vld [vmem:[%s5 + $0xc0] sm:$0xff]
        %v2162 = vld [vmem:[%s5 + $0xc8] sm:$0xff]
        %v2163 = vld [vmem:[%s5 + $0xd0] sm:$0xff]
        %v2164 = vld [vmem:[%s5 + $0xd8] sm:$0xff]
        %v2165 = vld [vmem:[%s5 + $0xe0] sm:$0xff]
        %v2166 = vld [vmem:[%s5 + $0xe8] sm:$0xff]
        %v2167 = vld [vmem:[%s5 + $0xf0] sm:$0xff]
        %v2168 = vld [vmem:[%s5 + $0xf8] sm:$0xff]
        %2169 = vmatpush.msra.mxu0 %v2152
        %2170 = vmatpush.msra.mxu0 %v2151
        %2171 = vmatpush.msra.mxu0 %v2150
        %2172 = vmatpush.msra.mxu0 %v2149
        %2173 = vmatpush.msra.mxu0 %v2148
        %2174 = vmatpush.msra.mxu0 %v2147
        %2175 = vmatpush.msra.mxu0 %v2146
        %2176 = vmatpush.msra.mxu0 %v2145
        %2177 = vmatpush.msra.mxu0 %v2144
        %2178 = vmatpush.msra.mxu0 %v2143
        %2179 = vmatpush.msra.mxu0 %v2142
        %2180 = vmatpush.msra.mxu0 %v2141
        %2181 = vmatpush.msra.mxu0 %v2140
        %2182 = vmatpush.msra.mxu0 %v2139
        %2183 = vmatpush.msra.mxu0 %v2138
        %2184 = vmatpush.msra.mxu0 %v2137
        %2185 = vmatmul.f32.gmra.mxu0 %v2095
        %v2186 = vpop.f32.mrf.mxu0
        %v2187 = vadd.f32 0.0, %v2186
        %2188 = vmatmul.f32.gmra.mxu0 %v2097
        %v2189 = vpop.f32.mrf.mxu0
        %v2190 = vadd.f32 0.0, %v2189
        %2191 = vmatmul.f32.gmra.mxu0 %v2099
        %v2192 = vpop.f32.mrf.mxu0
        %v2193 = vadd.f32 0.0, %v2192
        %2194 = vmatmul.f32.gmra.mxu0 %v2101
        %v2195 = vpop.f32.mrf.mxu0
        %v2196 = vadd.f32 0.0, %v2195
        %2197 = vmatmul.f32.gmra.mxu0 %v2103
        %v2198 = vpop.f32.mrf.mxu0
        %v2199 = vadd.f32 0.0, %v2198
        %2200 = vmatmul.f32.gmra.mxu0 %v2105
        %v2201 = vpop.f32.mrf.mxu0
        %v2202 = vadd.f32 0.0, %v2201
        %2203 = vmatmul.f32.gmra.mxu0 %v2107
        %v2204 = vpop.f32.mrf.mxu0
        %v2205 = vadd.f32 0.0, %v2204
        %2206 = vmatmul.f32.gmra.mxu0 %v2109
        %v2207 = vpop.f32.mrf.mxu0
        %v2208 = vadd.f32 0.0, %v2207
        %2209 = vmatmul.f32.gmra.mxu0 %v2111
        %v2210 = vpop.f32.mrf.mxu0
        %v2211 = vadd.f32 0.0, %v2210
        %2212 = vmatmul.f32.gmra.mxu0 %v2113
        %v2213 = vpop.f32.mrf.mxu0
        %v2214 = vadd.f32 0.0, %v2213
        %2215 = vmatmul.f32.gmra.mxu0 %v2115
        %v2216 = vpop.f32.mrf.mxu0
        %v2217 = vadd.f32 0.0, %v2216
        %2218 = vmatmul.f32.gmra.mxu0 %v2117
        %v2219 = vpop.f32.mrf.mxu0
        %v2220 = vadd.f32 0.0, %v2219
        %2221 = vmatmul.f32.gmra.mxu0 %v2119
        %v2222 = vpop.f32.mrf.mxu0
        %v2223 = vadd.f32 0.0, %v2222
        %2224 = vmatmul.f32.gmra.mxu0 %v2121
        %v2225 = vpop.f32.mrf.mxu0
        %v2226 = vadd.f32 0.0, %v2225
        %2227 = vmatmul.f32.gmra.mxu0 %v2123
        %v2228 = vpop.f32.mrf.mxu0
        %v2229 = vadd.f32 0.0, %v2228
        %2230 = vmatmul.f32.gmra.mxu0 %v2125
        %v2231 = vpop.f32.mrf.mxu0
        %v2232 = vadd.f32 0.0, %v2231
        %2233 = vmatmul.f32.gmra.mxu0 %v2127
        %v2234 = vpop.f32.mrf.mxu0
        %v2235 = vadd.f32 0.0, %v2234
        %2236 = vmatmul.f32.gmra.mxu0 %v2129
        %v2237 = vpop.f32.mrf.mxu0
        %v2238 = vadd.f32 0.0, %v2237
        %2239 = vmatmul.f32.gmra.mxu0 %v2131
        %v2240 = vpop.f32.mrf.mxu0
        %v2241 = vadd.f32 0.0, %v2240
        %2242 = vmatmul.f32.gmra.mxu0 %v2133
        %v2243 = vpop.f32.mrf.mxu0
        %v2244 = vadd.f32 0.0, %v2243
        %2245 = vmatmul.f32.gmra.mxu0 %v2135
        %v2246 = vpop.f32.mrf.mxu0
        %v2247 = vadd.f32 0.0, %v2246
        %2248 = vdwg.mxu0
        %2249 = vmatpush.msra.mxu0 %v2168
        %2250 = vmatpush.msra.mxu0 %v2167
        %2251 = vmatpush.msra.mxu0 %v2166
        %2252 = vmatpush.msra.mxu0 %v2165
        %2253 = vmatpush.msra.mxu0 %v2164
        %2254 = vmatpush.msra.mxu0 %v2163
        %2255 = vmatpush.msra.mxu0 %v2162
        %2256 = vmatpush.msra.mxu0 %v2161
        %2257 = vmatpush.msra.mxu0 %v2160
        %2258 = vmatpush.msra.mxu0 %v2159
        %2259 = vmatpush.msra.mxu0 %v2158
        %2260 = vmatpush.msra.mxu0 %v2157
        %2261 = vmatpush.msra.mxu0 %v2156
        %2262 = vmatpush.msra.mxu0 %v2155
        %2263 = vmatpush.msra.mxu0 %v2154
        %2264 = vmatpush.msra.mxu0 %v2153
        %2265 = vmatmul.f32.gmra.mxu0 %v2096
        %v2266 = vpop.f32.mrf.mxu0
        %v2267 = vadd.f32 %v2187, %v2266
        %2268 = vmatmul.f32.gmra.mxu0 %v2098
        %v2269 = vpop.f32.mrf.mxu0
        %v2270 = vadd.f32 %v2190, %v2269
        %2271 = vmatmul.f32.gmra.mxu0 %v2100
        %v2272 = vpop.f32.mrf.mxu0
        %v2273 = vadd.f32 %v2193, %v2272
        %2274 = vmatmul.f32.gmra.mxu0 %v2102
        %v2275 = vpop.f32.mrf.mxu0
        %v2276 = vadd.f32 %v2196, %v2275
        %2277 = vmatmul.f32.gmra.mxu0 %v2104
        %v2278 = vpop.f32.mrf.mxu0
        %v2279 = vadd.f32 %v2199, %v2278
        %2280 = vmatmul.f32.gmra.mxu0 %v2106
        %v2281 = vpop.f32.mrf.mxu0
        %v2282 = vadd.f32 %v2202, %v2281
        %2283 = vmatmul.f32.gmra.mxu0 %v2108
        %v2284 = vpop.f32.mrf.mxu0
        %v2285 = vadd.f32 %v2205, %v2284
        %2286 = vmatmul.f32.gmra.mxu0 %v2110
        %v2287 = vpop.f32.mrf.mxu0
        %v2288 = vadd.f32 %v2208, %v2287
        %2289 = vmatmul.f32.gmra.mxu0 %v2112
        %v2290 = vpop.f32.mrf.mxu0
        %v2291 = vadd.f32 %v2211, %v2290
        %2292 = vmatmul.f32.gmra.mxu0 %v2114
        %v2293 = vpop.f32.mrf.mxu0
        %v2294 = vadd.f32 %v2214, %v2293
        %2295 = vmatmul.f32.gmra.mxu0 %v2116
        %v2296 = vpop.f32.mrf.mxu0
        %v2297 = vadd.f32 %v2217, %v2296
        %2298 = vmatmul.f32.gmra.mxu0 %v2118
        %v2299 = vpop.f32.mrf.mxu0
        %v2300 = vadd.f32 %v2220, %v2299
        %2301 = vmatmul.f32.gmra.mxu0 %v2120
        %v2302 = vpop.f32.mrf.mxu0
        %v2303 = vadd.f32 %v2223, %v2302
        %2304 = vmatmul.f32.gmra.mxu0 %v2122
        %v2305 = vpop.f32.mrf.mxu0
        %v2306 = vadd.f32 %v2226, %v2305
        %2307 = vmatmul.f32.gmra.mxu0 %v2124
        %v2308 = vpop.f32.mrf.mxu0
        %v2309 = vadd.f32 %v2229, %v2308
        %2310 = vmatmul.f32.gmra.mxu0 %v2126
        %v2311 = vpop.f32.mrf.mxu0
        %v2312 = vadd.f32 %v2232, %v2311
        %2313 = vmatmul.f32.gmra.mxu0 %v2128
        %v2314 = vpop.f32.mrf.mxu0
        %v2315 = vadd.f32 %v2235, %v2314
        %2316 = vmatmul.f32.gmra.mxu0 %v2130
        %v2317 = vpop.f32.mrf.mxu0
        %v2318 = vadd.f32 %v2238, %v2317
        %2319 = vmatmul.f32.gmra.mxu0 %v2132
        %v2320 = vpop.f32.mrf.mxu0
        %v2321 = vadd.f32 %v2241, %v2320
        %2322 = vmatmul.f32.gmra.mxu0 %v2134
        %v2323 = vpop.f32.mrf.mxu0
        %v2324 = vadd.f32 %v2244, %v2323
        %2325 = vmatmul.f32.gmra.mxu0 %v2136
        %v2326 = vpop.f32.mrf.mxu0
        %v2327 = vadd.f32 %v2247, %v2326
        %2328 = vdwg.mxu0
        %v2329 = vld [vmem:[%s6] sm:$0xff]
        %v2330 = vld [vmem:[%s6 + $0x8] sm:$0xff]
        %v2331 = vld [vmem:[%s6 + $0x10] sm:$0xff]
        %v2332 = vld [vmem:[%s6 + $0x18] sm:$0xff]
        %v2333 = vld [vmem:[%s6 + $0x20] sm:$0xff]
        %v2334 = vld [vmem:[%s6 + $0x28] sm:$0xff]
        %v2335 = vld [vmem:[%s6 + $0x30] sm:$0xff]
        %v2336 = vld [vmem:[%s6 + $0x38] sm:$0xff]
        %v2337 = vld [vmem:[%s6 + $0x40] sm:$0xff]
        %v2338 = vld [vmem:[%s6 + $0x48] sm:$0xff]
        %v2339 = vld [vmem:[%s6 + $0x50] sm:$0xff]
        %v2340 = vld [vmem:[%s6 + $0x58] sm:$0xff]
        %v2341 = vld [vmem:[%s6 + $0x60] sm:$0xff]
        %v2342 = vld [vmem:[%s6 + $0x68] sm:$0xff]
        %v2343 = vld [vmem:[%s6 + $0x70] sm:$0xff]
        %v2344 = vld [vmem:[%s6 + $0x78] sm:$0xff]
        %v2345 = vld [vmem:[%s6 + $0x80] sm:$0xff]
        %v2346 = vld [vmem:[%s6 + $0x88] sm:$0xff]
        %v2347 = vld [vmem:[%s6 + $0x90] sm:$0xff]
        %v2348 = vld [vmem:[%s6 + $0x98] sm:$0xff]
        %v2349 = vld [vmem:[%s6 + $0xa0] sm:$0xff]
        %v2350 = vld [vmem:[%s6 + $0xa8] sm:$0xff]
        %v2351 = vld [vmem:[%s6 + $0xb0] sm:$0xff]
        %v2352 = vld [vmem:[%s6 + $0xb8] sm:$0xff]
        %v2353 = vld [vmem:[%s6 + $0xc0] sm:$0xff]
        %v2354 = vld [vmem:[%s6 + $0xc8] sm:$0xff]
        %v2355 = vld [vmem:[%s6 + $0xd0] sm:$0xff]
        %v2356 = vld [vmem:[%s6 + $0xd8] sm:$0xff]
        %v2357 = vld [vmem:[%s6 + $0xe0] sm:$0xff]
        %v2358 = vld [vmem:[%s6 + $0xe8] sm:$0xff]
        %v2359 = vld [vmem:[%s6 + $0xf0] sm:$0xff]
        %v2360 = vld [vmem:[%s6 + $0xf8] sm:$0xff]
        %2361 = vmatpush.msra.mxu0 %v2344
        %2362 = vmatpush.msra.mxu0 %v2343
        %2363 = vmatpush.msra.mxu0 %v2342
        %2364 = vmatpush.msra.mxu0 %v2341
        %2365 = vmatpush.msra.mxu0 %v2340
        %2366 = vmatpush.msra.mxu0 %v2339
        %2367 = vmatpush.msra.mxu0 %v2338
        %2368 = vmatpush.msra.mxu0 %v2337
        %2369 = vmatpush.msra.mxu0 %v2336
        %2370 = vmatpush.msra.mxu0 %v2335
        %2371 = vmatpush.msra.mxu0 %v2334
        %2372 = vmatpush.msra.mxu0 %v2333
        %2373 = vmatpush.msra.mxu0 %v2332
        %2374 = vmatpush.msra.mxu0 %v2331
        %2375 = vmatpush.msra.mxu0 %v2330
        %2376 = vmatpush.msra.mxu0 %v2329
        %2377 = vmatmul.f32.gmra.mxu0 %v2095
        %v2378 = vpop.f32.mrf.mxu0
        %v2379 = vadd.f32 0.0, %v2378
        %2380 = vmatmul.f32.gmra.mxu0 %v2097
        %v2381 = vpop.f32.mrf.mxu0
        %v2382 = vadd.f32 0.0, %v2381
        %2383 = vmatmul.f32.gmra.mxu0 %v2099
        %v2384 = vpop.f32.mrf.mxu0
        %v2385 = vadd.f32 0.0, %v2384
        %2386 = vmatmul.f32.gmra.mxu0 %v2101
        %v2387 = vpop.f32.mrf.mxu0
        %v2388 = vadd.f32 0.0, %v2387
        %2389 = vmatmul.f32.gmra.mxu0 %v2103
        %v2390 = vpop.f32.mrf.mxu0
        %v2391 = vadd.f32 0.0, %v2390
        %2392 = vmatmul.f32.gmra.mxu0 %v2105
        %v2393 = vpop.f32.mrf.mxu0
        %v2394 = vadd.f32 0.0, %v2393
        %2395 = vmatmul.f32.gmra.mxu0 %v2107
        %v2396 = vpop.f32.mrf.mxu0
        %v2397 = vadd.f32 0.0, %v2396
        %2398 = vmatmul.f32.gmra.mxu0 %v2109
        %v2399 = vpop.f32.mrf.mxu0
        %v2400 = vadd.f32 0.0, %v2399
        %2401 = vmatmul.f32.gmra.mxu0 %v2111
        %v2402 = vpop.f32.mrf.mxu0
        %v2403 = vadd.f32 0.0, %v2402
        %2404 = vmatmul.f32.gmra.mxu0 %v2113
        %v2405 = vpop.f32.mrf.mxu0
        %v2406 = vadd.f32 0.0, %v2405
        %2407 = vmatmul.f32.gmra.mxu0 %v2115
        %v2408 = vpop.f32.mrf.mxu0
        %v2409 = vadd.f32 0.0, %v2408
        %2410 = vmatmul.f32.gmra.mxu0 %v2117
        %v2411 = vpop.f32.mrf.mxu0
        %v2412 = vadd.f32 0.0, %v2411
        %2413 = vmatmul.f32.gmra.mxu0 %v2119
        %v2414 = vpop.f32.mrf.mxu0
        %v2415 = vadd.f32 0.0, %v2414
        %2416 = vmatmul.f32.gmra.mxu0 %v2121
        %v2417 = vpop.f32.mrf.mxu0
        %v2418 = vadd.f32 0.0, %v2417
        %2419 = vmatmul.f32.gmra.mxu0 %v2123
        %v2420 = vpop.f32.mrf.mxu0
        %v2421 = vadd.f32 0.0, %v2420
        %2422 = vmatmul.f32.gmra.mxu0 %v2125
        %v2423 = vpop.f32.mrf.mxu0
        %v2424 = vadd.f32 0.0, %v2423
        %2425 = vmatmul.f32.gmra.mxu0 %v2127
        %v2426 = vpop.f32.mrf.mxu0
        %v2427 = vadd.f32 0.0, %v2426
        %2428 = vmatmul.f32.gmra.mxu0 %v2129
        %v2429 = vpop.f32.mrf.mxu0
        %v2430 = vadd.f32 0.0, %v2429
        %2431 = vmatmul.f32.gmra.mxu0 %v2131
        %v2432 = vpop.f32.mrf.mxu0
        %v2433 = vadd.f32 0.0, %v2432
        %2434 = vmatmul.f32.gmra.mxu0 %v2133
        %v2435 = vpop.f32.mrf.mxu0
        %v2436 = vadd.f32 0.0, %v2435
        %2437 = vmatmul.f32.gmra.mxu0 %v2135
        %v2438 = vpop.f32.mrf.mxu0
        %v2439 = vadd.f32 0.0, %v2438
        %2440 = vdwg.mxu0
        %2441 = vmatpush.msra.mxu0 %v2360
        %2442 = vmatpush.msra.mxu0 %v2359
        %2443 = vmatpush.msra.mxu0 %v2358
        %2444 = vmatpush.msra.mxu0 %v2357
        %2445 = vmatpush.msra.mxu0 %v2356
        %2446 = vmatpush.msra.mxu0 %v2355
        %2447 = vmatpush.msra.mxu0 %v2354
        %2448 = vmatpush.msra.mxu0 %v2353
        %2449 = vmatpush.msra.mxu0 %v2352
        %2450 = vmatpush.msra.mxu0 %v2351
        %2451 = vmatpush.msra.mxu0 %v2350
        %2452 = vmatpush.msra.mxu0 %v2349
        %2453 = vmatpush.msra.mxu0 %v2348
        %2454 = vmatpush.msra.mxu0 %v2347
        %2455 = vmatpush.msra.mxu0 %v2346
        %2456 = vmatpush.msra.mxu0 %v2345
        %2457 = vmatmul.f32.gmra.mxu0 %v2096
        %v2458 = vpop.f32.mrf.mxu0
        %v2459 = vadd.f32 %v2379, %v2458
        %2460 = vmatmul.f32.gmra.mxu0 %v2098
        %v2461 = vpop.f32.mrf.mxu0
        %v2462 = vadd.f32 %v2382, %v2461
        %2463 = vmatmul.f32.gmra.mxu0 %v2100
        %v2464 = vpop.f32.mrf.mxu0
        %v2465 = vadd.f32 %v2385, %v2464
        %2466 = vmatmul.f32.gmra.mxu0 %v2102
        %v2467 = vpop.f32.mrf.mxu0
        %v2468 = vadd.f32 %v2388, %v2467
        %2469 = vmatmul.f32.gmra.mxu0 %v2104
        %v2470 = vpop.f32.mrf.mxu0
        %v2471 = vadd.f32 %v2391, %v2470
        %2472 = vmatmul.f32.gmra.mxu0 %v2106
        %v2473 = vpop.f32.mrf.mxu0
        %v2474 = vadd.f32 %v2394, %v2473
        %2475 = vmatmul.f32.gmra.mxu0 %v2108
        %v2476 = vpop.f32.mrf.mxu0
        %v2477 = vadd.f32 %v2397, %v2476
        %2478 = vmatmul.f32.gmra.mxu0 %v2110
        %v2479 = vpop.f32.mrf.mxu0
        %v2480 = vadd.f32 %v2400, %v2479
        %2481 = vmatmul.f32.gmra.mxu0 %v2112
        %v2482 = vpop.f32.mrf.mxu0
        %v2483 = vadd.f32 %v2403, %v2482
        %2484 = vmatmul.f32.gmra.mxu0 %v2114
        %v2485 = vpop.f32.mrf.mxu0
        %v2486 = vadd.f32 %v2406, %v2485
        %2487 = vmatmul.f32.gmra.mxu0 %v2116
        %v2488 = vpop.f32.mrf.mxu0
        %v2489 = vadd.f32 %v2409, %v2488
        %2490 = vmatmul.f32.gmra.mxu0 %v2118
        %v2491 = vpop.f32.mrf.mxu0
        %v2492 = vadd.f32 %v2412, %v2491
        %2493 = vmatmul.f32.gmra.mxu0 %v2120
        %v2494 = vpop.f32.mrf.mxu0
        %v2495 = vadd.f32 %v2415, %v2494
        %2496 = vmatmul.f32.gmra.mxu0 %v2122
        %v2497 = vpop.f32.mrf.mxu0
        %v2498 = vadd.f32 %v2418, %v2497
        %2499 = vmatmul.f32.gmra.mxu0 %v2124
        %v2500 = vpop.f32.mrf.mxu0
        %v2501 = vadd.f32 %v2421, %v2500
        %2502 = vmatmul.f32.gmra.mxu0 %v2126
        %v2503 = vpop.f32.mrf.mxu0
        %v2504 = vadd.f32 %v2424, %v2503
        %2505 = vmatmul.f32.gmra.mxu0 %v2128
        %v2506 = vpop.f32.mrf.mxu0
        %v2507 = vadd.f32 %v2427, %v2506
        %2508 = vmatmul.f32.gmra.mxu0 %v2130
        %v2509 = vpop.f32.mrf.mxu0
        %v2510 = vadd.f32 %v2430, %v2509
        %2511 = vmatmul.f32.gmra.mxu0 %v2132
        %v2512 = vpop.f32.mrf.mxu0
        %v2513 = vadd.f32 %v2433, %v2512
        %2514 = vmatmul.f32.gmra.mxu0 %v2134
        %v2515 = vpop.f32.mrf.mxu0
        %v2516 = vadd.f32 %v2436, %v2515
        %2517 = vmatmul.f32.gmra.mxu0 %v2136
        %v2518 = vpop.f32.mrf.mxu0
        %v2519 = vadd.f32 %v2439, %v2518
        %2520 = vdwg.mxu0
        %v2521 = vmax.f32 %v2267, %v2459
        %v2522 = vmax.f32 %v2270, %v2462
        %v2523 = vmax.f32 %v2273, %v2465
        %v2524 = vmax.f32 %v2276, %v2468
        %v2525 = vmax.f32 %v2279, %v2471
        %v2526 = vmax.f32 %v2282, %v2474
        %v2527 = vmax.f32 %v2285, %v2477
        %v2528 = vmax.f32 %v2288, %v2480
        %v2529 = vmax.f32 %v2291, %v2483
        %v2530 = vmax.f32 %v2294, %v2486
        %v2531 = vmax.f32 %v2297, %v2489
        %v2532 = vmax.f32 %v2300, %v2492
        %v2533 = vmax.f32 %v2303, %v2495
        %v2534 = vmax.f32 %v2306, %v2498
        %v2535 = vmax.f32 %v2309, %v2501
        %v2536 = vmax.f32 %v2312, %v2504
        %v2537 = vmax.f32 %v2315, %v2507
        %v2538 = vmax.f32 %v2318, %v2510
        %v2539 = vmax.f32 %v2321, %v2513
        %v2540 = vmax.f32 %v2324, %v2516
        %v2541 = vmax.f32 %v2327, %v2519
        %v2542 = vld [vmem:[%s7] sm:$0xff]
        %v2543 = vld [vmem:[%s7 + $0x8] sm:$0xff]
        %v2544 = vld [vmem:[%s7 + $0x10] sm:$0xff]
        %v2545 = vld [vmem:[%s7 + $0x18] sm:$0xff]
        %v2546 = vld [vmem:[%s7 + $0x20] sm:$0xff]
        %v2547 = vld [vmem:[%s7 + $0x28] sm:$0xff]
        %v2548 = vld [vmem:[%s7 + $0x30] sm:$0xff]
        %v2549 = vld [vmem:[%s7 + $0x38] sm:$0xff]
        %v2550 = vld [vmem:[%s7 + $0x40] sm:$0xff]
        %v2551 = vld [vmem:[%s7 + $0x48] sm:$0xff]
        %v2552 = vld [vmem:[%s7 + $0x50] sm:$0xff]
        %v2553 = vld [vmem:[%s7 + $0x58] sm:$0xff]
        %v2554 = vld [vmem:[%s7 + $0x60] sm:$0xff]
        %v2555 = vld [vmem:[%s7 + $0x68] sm:$0xff]
        %v2556 = vld [vmem:[%s7 + $0x70] sm:$0xff]
        %v2557 = vld [vmem:[%s7 + $0x78] sm:$0xff]
        %v2558 = vld [vmem:[%s7 + $0x80] sm:$0xff]
        %v2559 = vld [vmem:[%s7 + $0x88] sm:$0xff]
        %v2560 = vld [vmem:[%s7 + $0x90] sm:$0xff]
        %v2561 = vld [vmem:[%s7 + $0x98] sm:$0xff]
        %v2562 = vld [vmem:[%s7 + $0xa0] sm:$0xff]
        %v2563 = vld [vmem:[%s7 + $0xa8] sm:$0xff]
        %v2564 = vld [vmem:[%s7 + $0xb0] sm:$0xff]
        %v2565 = vld [vmem:[%s7 + $0xb8] sm:$0xff]
        %vm2566 = vcmask 326656
        %v2568 = vsel %vm2566, %v2543, 0
        %v2571 = vsel %vm2566, %v2545, 0
        %v2574 = vsel %vm2566, %v2547, 0
        %v2577 = vsel %vm2566, %v2549, 0
        %v2580 = vsel %vm2566, %v2551, 0
        %v2583 = vsel %vm2566, %v2553, 0
        %v2586 = vsel %vm2566, %v2555, 0
        %v2589 = vsel %vm2566, %v2557, 0
        %v2592 = vsel %vm2566, %v2559, 0
        %v2595 = vsel %vm2566, %v2561, 0
        %v2598 = vsel %vm2566, %v2563, 0
        %v2601 = vsel %vm2566, %v2565, 0
        %2603 = vmatpush.msra.mxu0 %v2536
        %2604 = vmatpush.msra.mxu0 %v2535
        %2605 = vmatpush.msra.mxu0 %v2534
        %2606 = vmatpush.msra.mxu0 %v2533
        %2607 = vmatpush.msra.mxu0 %v2532
        %2608 = vmatpush.msra.mxu0 %v2531
        %2609 = vmatpush.msra.mxu0 %v2530
        %2610 = vmatpush.msra.mxu0 %v2529
        %2611 = vmatpush.msra.mxu0 %v2528
        %2612 = vmatpush.msra.mxu0 %v2527
        %2613 = vmatpush.msra.mxu0 %v2526
        %2614 = vmatpush.msra.mxu0 %v2525
        %2615 = vmatpush.msra.mxu0 %v2524
        %2616 = vmatpush.msra.mxu0 %v2523
        %2617 = vmatpush.msra.mxu0 %v2522
        %2618 = vmatpush.msra.mxu0 %v2521
        %2619 = vmatmul.f32.gmra.mxu0 %v2542
        %v2620 = vpop.f32.mrf.mxu0
        %v2621 = vadd.f32 0.0, %v2620
        %2622 = vmatmul.f32.gmra.mxu0 %v2544
        %v2623 = vpop.f32.mrf.mxu0
        %v2624 = vadd.f32 0.0, %v2623
        %2625 = vmatmul.f32.gmra.mxu0 %v2546
        %v2626 = vpop.f32.mrf.mxu0
        %v2627 = vadd.f32 0.0, %v2626
        %2628 = vmatmul.f32.gmra.mxu0 %v2548
        %v2629 = vpop.f32.mrf.mxu0
        %v2630 = vadd.f32 0.0, %v2629
        %2631 = vmatmul.f32.gmra.mxu0 %v2550
        %v2632 = vpop.f32.mrf.mxu0
        %v2633 = vadd.f32 0.0, %v2632
        %2634 = vmatmul.f32.gmra.mxu0 %v2552
        %v2635 = vpop.f32.mrf.mxu0
        %v2636 = vadd.f32 0.0, %v2635
        %2637 = vmatmul.f32.gmra.mxu0 %v2554
        %v2638 = vpop.f32.mrf.mxu0
        %v2639 = vadd.f32 0.0, %v2638
        %2640 = vmatmul.f32.gmra.mxu0 %v2556
        %v2641 = vpop.f32.mrf.mxu0
        %v2642 = vadd.f32 0.0, %v2641
        %2643 = vmatmul.f32.gmra.mxu0 %v2558
        %v2644 = vpop.f32.mrf.mxu0
        %v2645 = vadd.f32 0.0, %v2644
        %2646 = vmatmul.f32.gmra.mxu0 %v2560
        %v2647 = vpop.f32.mrf.mxu0
        %v2648 = vadd.f32 0.0, %v2647
        %2649 = vmatmul.f32.gmra.mxu0 %v2562
        %v2650 = vpop.f32.mrf.mxu0
        %v2651 = vadd.f32 0.0, %v2650
        %2652 = vmatmul.f32.gmra.mxu0 %v2564
        %v2653 = vpop.f32.mrf.mxu0
        %v2654 = vadd.f32 0.0, %v2653
        %2655 = vdwg.mxu0
        %2656 = vmatpush.msra.mxu0 0.0
        %2657 = vmatpush.msra.mxu0 0.0
        %2658 = vmatpush.msra.mxu0 0.0
        %2659 = vmatpush.msra.mxu0 0.0
        %2660 = vmatpush.msra.mxu0 0.0
        %2661 = vmatpush.msra.mxu0 0.0
        %2662 = vmatpush.msra.mxu0 0.0
        %2663 = vmatpush.msra.mxu0 0.0
        %2664 = vmatpush.msra.mxu0 0.0
        %2665 = vmatpush.msra.mxu0 0.0
        %2666 = vmatpush.msra.mxu0 0.0
        %2667 = vmatpush.msra.mxu0 %v2541
        %2668 = vmatpush.msra.mxu0 %v2540
        %2669 = vmatpush.msra.mxu0 %v2539
        %2670 = vmatpush.msra.mxu0 %v2538
        %2671 = vmatpush.msra.mxu0 %v2537
        %2672 = vmatmul.f32.gmra.mxu0 %v2568
        %v2673 = vpop.f32.mrf.mxu0
        %v2674 = vadd.f32 %v2621, %v2673
        %2675 = vmatmul.f32.gmra.mxu0 %v2571
        %v2676 = vpop.f32.mrf.mxu0
        %v2677 = vadd.f32 %v2624, %v2676
        %2678 = vmatmul.f32.gmra.mxu0 %v2574
        %v2679 = vpop.f32.mrf.mxu0
        %v2680 = vadd.f32 %v2627, %v2679
        %2681 = vmatmul.f32.gmra.mxu0 %v2577
        %v2682 = vpop.f32.mrf.mxu0
        %v2683 = vadd.f32 %v2630, %v2682
        %2684 = vmatmul.f32.gmra.mxu0 %v2580
        %v2685 = vpop.f32.mrf.mxu0
        %v2686 = vadd.f32 %v2633, %v2685
        %2687 = vmatmul.f32.gmra.mxu0 %v2583
        %v2688 = vpop.f32.mrf.mxu0
        %v2689 = vadd.f32 %v2636, %v2688
        %2690 = vmatmul.f32.gmra.mxu0 %v2586
        %v2691 = vpop.f32.mrf.mxu0
        %v2692 = vadd.f32 %v2639, %v2691
        %2693 = vmatmul.f32.gmra.mxu0 %v2589
        %v2694 = vpop.f32.mrf.mxu0
        %v2695 = vadd.f32 %v2642, %v2694
        %2696 = vmatmul.f32.gmra.mxu0 %v2592
        %v2697 = vpop.f32.mrf.mxu0
        %v2698 = vadd.f32 %v2645, %v2697
        %2699 = vmatmul.f32.gmra.mxu0 %v2595
        %v2700 = vpop.f32.mrf.mxu0
        %v2701 = vadd.f32 %v2648, %v2700
        %2702 = vmatmul.f32.gmra.mxu0 %v2598
        %v2703 = vpop.f32.mrf.mxu0
        %v2704 = vadd.f32 %v2651, %v2703
        %2705 = vmatmul.f32.gmra.mxu0 %v2601
        %v2706 = vpop.f32.mrf.mxu0
        %v2707 = vadd.f32 %v2654, %v2706
        %2708 = vdwg.mxu0
        %v2709 = vld [vmem:[%s8] sm:$0xff]
        %v2710 = vld [vmem:[%s8 + $0x8] sm:$0xff]
        %v2711 = vld [vmem:[%s8 + $0x10] sm:$0xff]
        %v2712 = vld [vmem:[%s8 + $0x18] sm:$0xff]
        %v2713 = vld [vmem:[%s8 + $0x20] sm:$0xff]
        %v2714 = vld [vmem:[%s8 + $0x28] sm:$0xff]
        %v2715 = vld [vmem:[%s8 + $0x30] sm:$0xff]
        %v2716 = vld [vmem:[%s8 + $0x38] sm:$0xff]
        %v2717 = vld [vmem:[%s8 + $0x40] sm:$0xff]
        %v2718 = vld [vmem:[%s8 + $0x48] sm:$0xff]
        %v2719 = vld [vmem:[%s8 + $0x50] sm:$0xff]
        %v2720 = vld [vmem:[%s8 + $0x58] sm:$0xff]
        %v2721 = vld [vmem:[%s8 + $0x60] sm:$0xff]
        %v2722 = vld [vmem:[%s8 + $0x68] sm:$0xff]
        %v2723 = vld [vmem:[%s8 + $0x70] sm:$0xff]
        %v2724 = vld [vmem:[%s8 + $0x78] sm:$0xff]
        %v2725 = vld [vmem:[%s8 + $0x80] sm:$0xff]
        %v2726 = vld [vmem:[%s8 + $0x88] sm:$0xff]
        %v2727 = vld [vmem:[%s8 + $0x90] sm:$0xff]
        %v2728 = vld [vmem:[%s8 + $0x98] sm:$0xff]
        %v2729 = vld [vmem:[%s8 + $0xa0] sm:$0xff]
        %v2730 = vld [vmem:[%s8 + $0xa8] sm:$0xff]
        %v2731 = vld [vmem:[%s8 + $0xb0] sm:$0xff]
        %v2732 = vld [vmem:[%s8 + $0xb8] sm:$0xff]
        %v2734 = vsel %vm2566, %v2710, 0
        %v2737 = vsel %vm2566, %v2712, 0
        %v2740 = vsel %vm2566, %v2714, 0
        %v2743 = vsel %vm2566, %v2716, 0
        %v2746 = vsel %vm2566, %v2718, 0
        %v2749 = vsel %vm2566, %v2720, 0
        %v2752 = vsel %vm2566, %v2722, 0
        %v2755 = vsel %vm2566, %v2724, 0
        %v2758 = vsel %vm2566, %v2726, 0
        %v2761 = vsel %vm2566, %v2728, 0
        %v2764 = vsel %vm2566, %v2730, 0
        %v2767 = vsel %vm2566, %v2732, 0
        %2769 = vmatpush.msra.mxu0 %v2536
        %2770 = vmatpush.msra.mxu0 %v2535
        %2771 = vmatpush.msra.mxu0 %v2534
        %2772 = vmatpush.msra.mxu0 %v2533
        %2773 = vmatpush.msra.mxu0 %v2532
        %2774 = vmatpush.msra.mxu0 %v2531
        %2775 = vmatpush.msra.mxu0 %v2530
        %2776 = vmatpush.msra.mxu0 %v2529
        %2777 = vmatpush.msra.mxu0 %v2528
        %2778 = vmatpush.msra.mxu0 %v2527
        %2779 = vmatpush.msra.mxu0 %v2526
        %2780 = vmatpush.msra.mxu0 %v2525
        %2781 = vmatpush.msra.mxu0 %v2524
        %2782 = vmatpush.msra.mxu0 %v2523
        %2783 = vmatpush.msra.mxu0 %v2522
        %2784 = vmatpush.msra.mxu0 %v2521
        %2785 = vmatmul.f32.gmra.mxu0 %v2709
        %v2786 = vpop.f32.mrf.mxu0
        %v2787 = vadd.f32 0.0, %v2786
        %2788 = vmatmul.f32.gmra.mxu0 %v2711
        %v2789 = vpop.f32.mrf.mxu0
        %v2790 = vadd.f32 0.0, %v2789
        %2791 = vmatmul.f32.gmra.mxu0 %v2713
        %v2792 = vpop.f32.mrf.mxu0
        %v2793 = vadd.f32 0.0, %v2792
        %2794 = vmatmul.f32.gmra.mxu0 %v2715
        %v2795 = vpop.f32.mrf.mxu0
        %v2796 = vadd.f32 0.0, %v2795
        %2797 = vmatmul.f32.gmra.mxu0 %v2717
        %v2798 = vpop.f32.mrf.mxu0
        %v2799 = vadd.f32 0.0, %v2798
        %2800 = vmatmul.f32.gmra.mxu0 %v2719
        %v2801 = vpop.f32.mrf.mxu0
        %v2802 = vadd.f32 0.0, %v2801
        %2803 = vmatmul.f32.gmra.mxu0 %v2721
        %v2804 = vpop.f32.mrf.mxu0
        %v2805 = vadd.f32 0.0, %v2804
        %2806 = vmatmul.f32.gmra.mxu0 %v2723
        %v2807 = vpop.f32.mrf.mxu0
        %v2808 = vadd.f32 0.0, %v2807
        %2809 = vmatmul.f32.gmra.mxu0 %v2725
        %v2810 = vpop.f32.mrf.mxu0
        %v2811 = vadd.f32 0.0, %v2810
        %2812 = vmatmul.f32.gmra.mxu0 %v2727
        %v2813 = vpop.f32.mrf.mxu0
        %v2814 = vadd.f32 0.0, %v2813
        %2815 = vmatmul.f32.gmra.mxu0 %v2729
        %v2816 = vpop.f32.mrf.mxu0
        %v2817 = vadd.f32 0.0, %v2816
        %2818 = vmatmul.f32.gmra.mxu0 %v2731
        %v2819 = vpop.f32.mrf.mxu0
        %v2820 = vadd.f32 0.0, %v2819
        %2821 = vdwg.mxu0
        %2822 = vmatpush.msra.mxu0 0.0
        %2823 = vmatpush.msra.mxu0 0.0
        %2824 = vmatpush.msra.mxu0 0.0
        %2825 = vmatpush.msra.mxu0 0.0
        %2826 = vmatpush.msra.mxu0 0.0
        %2827 = vmatpush.msra.mxu0 0.0
        %2828 = vmatpush.msra.mxu0 0.0
        %2829 = vmatpush.msra.mxu0 0.0
        %2830 = vmatpush.msra.mxu0 0.0
        %2831 = vmatpush.msra.mxu0 0.0
        %2832 = vmatpush.msra.mxu0 0.0
        %2833 = vmatpush.msra.mxu0 %v2541
        %2834 = vmatpush.msra.mxu0 %v2540
        %2835 = vmatpush.msra.mxu0 %v2539
        %2836 = vmatpush.msra.mxu0 %v2538
        %2837 = vmatpush.msra.mxu0 %v2537
        %2838 = vmatmul.f32.gmra.mxu0 %v2734
        %v2839 = vpop.f32.mrf.mxu0
        %v2840 = vadd.f32 %v2787, %v2839
        %2841 = vmatmul.f32.gmra.mxu0 %v2737
        %v2842 = vpop.f32.mrf.mxu0
        %v2843 = vadd.f32 %v2790, %v2842
        %2844 = vmatmul.f32.gmra.mxu0 %v2740
        %v2845 = vpop.f32.mrf.mxu0
        %v2846 = vadd.f32 %v2793, %v2845
        %2847 = vmatmul.f32.gmra.mxu0 %v2743
        %v2848 = vpop.f32.mrf.mxu0
        %v2849 = vadd.f32 %v2796, %v2848
        %2850 = vmatmul.f32.gmra.mxu0 %v2746
        %v2851 = vpop.f32.mrf.mxu0
        %v2852 = vadd.f32 %v2799, %v2851
        %2853 = vmatmul.f32.gmra.mxu0 %v2749
        %v2854 = vpop.f32.mrf.mxu0
        %v2855 = vadd.f32 %v2802, %v2854
        %2856 = vmatmul.f32.gmra.mxu0 %v2752
        %v2857 = vpop.f32.mrf.mxu0
        %v2858 = vadd.f32 %v2805, %v2857
        %2859 = vmatmul.f32.gmra.mxu0 %v2755
        %v2860 = vpop.f32.mrf.mxu0
        %v2861 = vadd.f32 %v2808, %v2860
        %2862 = vmatmul.f32.gmra.mxu0 %v2758
        %v2863 = vpop.f32.mrf.mxu0
        %v2864 = vadd.f32 %v2811, %v2863
        %2865 = vmatmul.f32.gmra.mxu0 %v2761
        %v2866 = vpop.f32.mrf.mxu0
        %v2867 = vadd.f32 %v2814, %v2866
        %2868 = vmatmul.f32.gmra.mxu0 %v2764
        %v2869 = vpop.f32.mrf.mxu0
        %v2870 = vadd.f32 %v2817, %v2869
        %2871 = vmatmul.f32.gmra.mxu0 %v2767
        %v2872 = vpop.f32.mrf.mxu0
        %v2873 = vadd.f32 %v2820, %v2872
        %2874 = vdwg.mxu0
        %v2875 = vmax.f32 %v2674, %v2840
        %v2876 = vmax.f32 %v2677, %v2843
        %v2877 = vmax.f32 %v2680, %v2846
        %v2878 = vmax.f32 %v2683, %v2849
        %v2879 = vmax.f32 %v2686, %v2852
        %v2880 = vmax.f32 %v2689, %v2855
        %v2881 = vmax.f32 %v2692, %v2858
        %v2882 = vmax.f32 %v2695, %v2861
        %v2883 = vmax.f32 %v2698, %v2864
        %v2884 = vmax.f32 %v2701, %v2867
        %v2885 = vmax.f32 %v2704, %v2870
        %v2886 = vmax.f32 %v2707, %v2873
        %2889 = vrot.lane.b32.xlu0 %v2875, 127
        %v2890 = vpop.permute.xlu0 %2889
        %2891 = vrot.lane.b32.xlu0 %v2876, 127
        %v2892 = vpop.permute.xlu0 %2891
        %2895 = vrot.lane.b32.xlu0 %v2875, 126
        %v2896 = vpop.permute.xlu0 %2895
        %2897 = vrot.lane.b32.xlu0 %v2876, 126
        %v2898 = vpop.permute.xlu0 %2897
        %2901 = vrot.lane.b32.xlu0 %v2875, 125
        %v2902 = vpop.permute.xlu0 %2901
        %2903 = vrot.lane.b32.xlu0 %v2876, 125
        %v2904 = vpop.permute.xlu0 %2903
        %2907 = vrot.lane.b32.xlu0 %v2875, 124
        %v2908 = vpop.permute.xlu0 %2907
        %2909 = vrot.lane.b32.xlu0 %v2876, 124
        %v2910 = vpop.permute.xlu0 %2909
        %2915 = vrot.lane.b32.xlu0 %v2877, 127
        %v2916 = vpop.permute.xlu0 %2915
        %2917 = vrot.lane.b32.xlu0 %v2878, 127
        %v2918 = vpop.permute.xlu0 %2917
        %2921 = vrot.lane.b32.xlu0 %v2877, 126
        %v2922 = vpop.permute.xlu0 %2921
        %2923 = vrot.lane.b32.xlu0 %v2878, 126
        %v2924 = vpop.permute.xlu0 %2923
        %2927 = vrot.lane.b32.xlu0 %v2877, 125
        %v2928 = vpop.permute.xlu0 %2927
        %2929 = vrot.lane.b32.xlu0 %v2878, 125
        %v2930 = vpop.permute.xlu0 %2929
        %2933 = vrot.lane.b32.xlu0 %v2877, 124
        %v2934 = vpop.permute.xlu0 %2933
        %2935 = vrot.lane.b32.xlu0 %v2878, 124
        %v2936 = vpop.permute.xlu0 %2935
        %2941 = vrot.lane.b32.xlu0 %v2879, 127
        %v2942 = vpop.permute.xlu0 %2941
        %2943 = vrot.lane.b32.xlu0 %v2880, 127
        %v2944 = vpop.permute.xlu0 %2943
        %2947 = vrot.lane.b32.xlu0 %v2879, 126
        %v2948 = vpop.permute.xlu0 %2947
        %2949 = vrot.lane.b32.xlu0 %v2880, 126
        %v2950 = vpop.permute.xlu0 %2949
        %2953 = vrot.lane.b32.xlu0 %v2879, 125
        %v2954 = vpop.permute.xlu0 %2953
        %2955 = vrot.lane.b32.xlu0 %v2880, 125
        %v2956 = vpop.permute.xlu0 %2955
        %2959 = vrot.lane.b32.xlu0 %v2879, 124
        %v2960 = vpop.permute.xlu0 %2959
        %2961 = vrot.lane.b32.xlu0 %v2880, 124
        %v2962 = vpop.permute.xlu0 %2961
        %2967 = vrot.lane.b32.xlu0 %v2881, 127
        %v2968 = vpop.permute.xlu0 %2967
        %2969 = vrot.lane.b32.xlu0 %v2882, 127
        %v2970 = vpop.permute.xlu0 %2969
        %2973 = vrot.lane.b32.xlu0 %v2881, 126
        %v2974 = vpop.permute.xlu0 %2973
        %2975 = vrot.lane.b32.xlu0 %v2882, 126
        %v2976 = vpop.permute.xlu0 %2975
        %2979 = vrot.lane.b32.xlu0 %v2881, 125
        %v2980 = vpop.permute.xlu0 %2979
        %2981 = vrot.lane.b32.xlu0 %v2882, 125
        %v2982 = vpop.permute.xlu0 %2981
        %2985 = vrot.lane.b32.xlu0 %v2881, 124
        %v2986 = vpop.permute.xlu0 %2985
        %2987 = vrot.lane.b32.xlu0 %v2882, 124
        %v2988 = vpop.permute.xlu0 %2987
        %2993 = vrot.lane.b32.xlu0 %v2883, 127
        %v2994 = vpop.permute.xlu0 %2993
        %2995 = vrot.lane.b32.xlu0 %v2884, 127
        %v2996 = vpop.permute.xlu0 %2995
        %2999 = vrot.lane.b32.xlu0 %v2883, 126
        %v3000 = vpop.permute.xlu0 %2999
        %3001 = vrot.lane.b32.xlu0 %v2884, 126
        %v3002 = vpop.permute.xlu0 %3001
        %3005 = vrot.lane.b32.xlu0 %v2883, 125
        %v3006 = vpop.permute.xlu0 %3005
        %3007 = vrot.lane.b32.xlu0 %v2884, 125
        %v3008 = vpop.permute.xlu0 %3007
        %3011 = vrot.lane.b32.xlu0 %v2883, 124
        %v3012 = vpop.permute.xlu0 %3011
        %3013 = vrot.lane.b32.xlu0 %v2884, 124
        %v3014 = vpop.permute.xlu0 %3013
        %3019 = vrot.lane.b32.xlu0 %v2885, 127
        %v3020 = vpop.permute.xlu0 %3019
        %3021 = vrot.lane.b32.xlu0 %v2886, 127
        %v3022 = vpop.permute.xlu0 %3021
        %3025 = vrot.lane.b32.xlu0 %v2885, 126
        %v3026 = vpop.permute.xlu0 %3025
        %3027 = vrot.lane.b32.xlu0 %v2886, 126
        %v3028 = vpop.permute.xlu0 %3027
        %3031 = vrot.lane.b32.xlu0 %v2885, 125
        %v3032 = vpop.permute.xlu0 %3031
        %3033 = vrot.lane.b32.xlu0 %v2886, 125
        %v3034 = vpop.permute.xlu0 %3033
        %3037 = vrot.lane.b32.xlu0 %v2885, 124
        %v3038 = vpop.permute.xlu0 %3037
        %3039 = vrot.lane.b32.xlu0 %v2886, 124
        %v3040 = vpop.permute.xlu0 %3039
        %v3043 = vld [vmem:[%s3] sm:$0xff]
        %v3044 = vld [vmem:[%s3 + $0x8] sm:$0xff]
        %v3045 = vld [vmem:[%s3 + $0x10] sm:$0xff]
        %v3046 = vld [vmem:[%s3 + $0x18] sm:$0xff]
        %v3047 = vld [vmem:[%s3 + $0x20] sm:$0xff]
        %v3048 = vld [vmem:[%s3 + $0x28] sm:$0xff]
        %v3049 = vld [vmem:[%s3 + $0x30] sm:$0xff]
        %v3050 = vld [vmem:[%s3 + $0x38] sm:$0xff]
        %v3051 = vld [vmem:[%s3 + $0x40] sm:$0xff]
        %v3052 = vld [vmem:[%s3 + $0x48] sm:$0xff]
        %v3053 = vld [vmem:[%s3 + $0x50] sm:$0xff]
        %v3054 = vld [vmem:[%s3 + $0x58] sm:$0xff]
        %v3055 = vld [vmem:[%s3 + $0x60] sm:$0xff]
        %v3056 = vld [vmem:[%s3 + $0x68] sm:$0xff]
        %v3057 = vld [vmem:[%s3 + $0x70] sm:$0xff]
        %v3058 = vld [vmem:[%s3 + $0x78] sm:$0xff]
        %v3059 = vld [vmem:[%s3 + $0x80] sm:$0xff]
        %v3060 = vld [vmem:[%s3 + $0x88] sm:$0xff]
        %v3061 = vld [vmem:[%s3 + $0x90] sm:$0xff]
        %v3062 = vld [vmem:[%s3 + $0x98] sm:$0xff]
        %v3063 = vld [vmem:[%s3 + $0xa0] sm:$0xff]
        %v3064 = vld [vmem:[%s3 + $0xa8] sm:$0xff]
        %v3065 = vld [vmem:[%s3 + $0xb0] sm:$0xff]
        %v3066 = vld [vmem:[%s3 + $0xb8] sm:$0xff]
        %v3067 = vld [vmem:[%s3 + $0xc0] sm:$0xff]
        %v3068 = vld [vmem:[%s3 + $0xc8] sm:$0xff]
        %v3069 = vld [vmem:[%s3 + $0xd0] sm:$0xff]
        %v3070 = vld [vmem:[%s3 + $0xd8] sm:$0xff]
        %v3071 = vld [vmem:[%s3 + $0xe0] sm:$0xff]
        %v3072 = vld [vmem:[%s3 + $0xe8] sm:$0xff]
        %v3073 = vld [vmem:[%s3 + $0xf0] sm:$0xff]
        %v3074 = vld [vmem:[%s3 + $0xf8] sm:$0xff]
        %v3075 = vld [vmem:[%s3 + $0x100] sm:$0xff]
        %v3076 = vld [vmem:[%s3 + $0x108] sm:$0xff]
        %v3077 = vld [vmem:[%s3 + $0x110] sm:$0xff]
        %v3078 = vld [vmem:[%s3 + $0x118] sm:$0xff]
        %v3079 = vld [vmem:[%s3 + $0x120] sm:$0xff]
        %v3080 = vld [vmem:[%s3 + $0x128] sm:$0xff]
        %v3081 = vld [vmem:[%s3 + $0x130] sm:$0xff]
        %v3082 = vld [vmem:[%s3 + $0x138] sm:$0xff]
        %v3083 = vld [vmem:[%s3 + $0x140] sm:$0xff]
        %v3084 = vld [vmem:[%s3 + $0x148] sm:$0xff]
        %v3085 = vld [vmem:[%s3 + $0x150] sm:$0xff]
        %v3086 = vld [vmem:[%s3 + $0x158] sm:$0xff]
        %v3087 = vld [vmem:[%s3 + $0x160] sm:$0xff]
        %v3088 = vld [vmem:[%s3 + $0x168] sm:$0xff]
        %v3089 = vld [vmem:[%s3 + $0x170] sm:$0xff]
        %v3090 = vld [vmem:[%s3 + $0x178] sm:$0xff]
        %v3091 = vld [vmem:[%s3 + $0x180] sm:$0xff]
        %v3092 = vld [vmem:[%s3 + $0x188] sm:$0xff]
        %v3093 = vld [vmem:[%s3 + $0x190] sm:$0xff]
        %v3094 = vld [vmem:[%s3 + $0x198] sm:$0xff]
        %v3095 = vld [vmem:[%s3 + $0x1a0] sm:$0xff]
        %v3096 = vld [vmem:[%s3 + $0x1a8] sm:$0xff]
        %v3097 = vld [vmem:[%s3 + $0x1b0] sm:$0xff]
        %v3098 = vld [vmem:[%s3 + $0x1b8] sm:$0xff]
        %v3099 = vld [vmem:[%s3 + $0x1c0] sm:$0xff]
        %v3100 = vld [vmem:[%s3 + $0x1c8] sm:$0xff]
        %v3101 = vld [vmem:[%s3 + $0x1d0] sm:$0xff]
        %v3102 = vld [vmem:[%s3 + $0x1d8] sm:$0xff]
        %v3103 = vld [vmem:[%s3 + $0x1e0] sm:$0xff]
        %v3104 = vld [vmem:[%s3 + $0x1e8] sm:$0xff]
        %v3105 = vld [vmem:[%s3 + $0x1f0] sm:$0xff]
        %v3106 = vld [vmem:[%s3 + $0x1f8] sm:$0xff]
        %v3107 = vld [vmem:[%s3 + $0x200] sm:$0xff]
        %v3108 = vld [vmem:[%s3 + $0x208] sm:$0xff]
        %v3109 = vld [vmem:[%s3 + $0x210] sm:$0xff]
        %v3110 = vld [vmem:[%s3 + $0x218] sm:$0xff]
        %v3111 = vld [vmem:[%s3 + $0x220] sm:$0xff]
        %v3112 = vld [vmem:[%s3 + $0x228] sm:$0xff]
        %v3113 = vld [vmem:[%s3 + $0x230] sm:$0xff]
        %v3114 = vld [vmem:[%s3 + $0x238] sm:$0xff]
        %v3115 = vld [vmem:[%s3 + $0x240] sm:$0xff]
        %v3116 = vld [vmem:[%s3 + $0x248] sm:$0xff]
        %v3117 = vld [vmem:[%s3 + $0x250] sm:$0xff]
        %v3118 = vld [vmem:[%s3 + $0x258] sm:$0xff]
        %v3119 = vld [vmem:[%s3 + $0x260] sm:$0xff]
        %v3120 = vld [vmem:[%s3 + $0x268] sm:$0xff]
        %v3121 = vld [vmem:[%s3 + $0x270] sm:$0xff]
        %v3122 = vld [vmem:[%s3 + $0x278] sm:$0xff]
        %v3123 = vld [vmem:[%s4] sm:$0xff]
        %v3124 = vld [vmem:[%s4 + $0x8] sm:$0xff]
        %v3125 = vld [vmem:[%s4 + $0x10] sm:$0xff]
        %v3126 = vld [vmem:[%s4 + $0x18] sm:$0xff]
        %v3127 = vld [vmem:[%s4 + $0x20] sm:$0xff]
        %v3128 = vld [vmem:[%s4 + $0x28] sm:$0xff]
        %v3129 = vld [vmem:[%s4 + $0x30] sm:$0xff]
        %v3130 = vld [vmem:[%s4 + $0x38] sm:$0xff]
        %v3131 = vld [vmem:[%s4 + $0x40] sm:$0xff]
        %v3132 = vld [vmem:[%s4 + $0x48] sm:$0xff]
        %v3133 = vld [vmem:[%s4 + $0x50] sm:$0xff]
        %v3134 = vld [vmem:[%s4 + $0x58] sm:$0xff]
        %v3135 = vld [vmem:[%s4 + $0x60] sm:$0xff]
        %v3136 = vld [vmem:[%s4 + $0x68] sm:$0xff]
        %v3137 = vld [vmem:[%s4 + $0x70] sm:$0xff]
        %v3138 = vld [vmem:[%s4 + $0x78] sm:$0xff]
        %v3139 = vld [vmem:[%s4 + $0x80] sm:$0xff]
        %v3140 = vld [vmem:[%s4 + $0x88] sm:$0xff]
        %v3141 = vld [vmem:[%s4 + $0x90] sm:$0xff]
        %v3142 = vld [vmem:[%s4 + $0x98] sm:$0xff]
        %3144 = vset.pattern.permute.xlu0 0
        %3145 = vperm.xlu0 %3144, %v3123
        %v3146 = vpop.permute.xlu0 %3145
        %3149 = vset.pattern.permute.xlu0 0
        %3150 = vperm.xlu0 %3149, %v3124
        %v3151 = vpop.permute.xlu0 %3150
        %3154 = vset.pattern.permute.xlu0 0
        %3155 = vperm.xlu0 %3154, %v3125
        %v3156 = vpop.permute.xlu0 %3155
        %3159 = vset.pattern.permute.xlu0 0
        %3160 = vperm.xlu0 %3159, %v3126
        %v3161 = vpop.permute.xlu0 %3160
        %3164 = vset.pattern.permute.xlu0 0
        %3165 = vperm.xlu0 %3164, %v3127
        %v3166 = vpop.permute.xlu0 %3165
        %3169 = vset.pattern.permute.xlu0 0
        %3170 = vperm.xlu0 %3169, %v3128
        %v3171 = vpop.permute.xlu0 %3170
        %3174 = vset.pattern.permute.xlu0 0
        %3175 = vperm.xlu0 %3174, %v3129
        %v3176 = vpop.permute.xlu0 %3175
        %3179 = vset.pattern.permute.xlu0 0
        %3180 = vperm.xlu0 %3179, %v3130
        %v3181 = vpop.permute.xlu0 %3180
        %3184 = vset.pattern.permute.xlu0 0
        %3185 = vperm.xlu0 %3184, %v3131
        %v3186 = vpop.permute.xlu0 %3185
        %3189 = vset.pattern.permute.xlu0 0
        %3190 = vperm.xlu0 %3189, %v3132
        %v3191 = vpop.permute.xlu0 %3190
        %3194 = vset.pattern.permute.xlu0 0
        %3195 = vperm.xlu0 %3194, %v3133
        %v3196 = vpop.permute.xlu0 %3195
        %3199 = vset.pattern.permute.xlu0 0
        %3200 = vperm.xlu0 %3199, %v3134
        %v3201 = vpop.permute.xlu0 %3200
        %3204 = vset.pattern.permute.xlu0 0
        %3205 = vperm.xlu0 %3204, %v3135
        %v3206 = vpop.permute.xlu0 %3205
        %3209 = vset.pattern.permute.xlu0 0
        %3210 = vperm.xlu0 %3209, %v3136
        %v3211 = vpop.permute.xlu0 %3210
        %3214 = vset.pattern.permute.xlu0 0
        %3215 = vperm.xlu0 %3214, %v3137
        %v3216 = vpop.permute.xlu0 %3215
        %3219 = vset.pattern.permute.xlu0 0
        %3220 = vperm.xlu0 %3219, %v3138
        %v3221 = vpop.permute.xlu0 %3220
        %3224 = vset.pattern.permute.xlu0 0
        %3225 = vperm.xlu0 %3224, %v3139
        %v3226 = vpop.permute.xlu0 %3225
        %3229 = vset.pattern.permute.xlu0 0
        %3230 = vperm.xlu0 %3229, %v3140
        %v3231 = vpop.permute.xlu0 %3230
        %3234 = vset.pattern.permute.xlu0 0
        %3235 = vperm.xlu0 %3234, %v3141
        %v3236 = vpop.permute.xlu0 %3235
        %3239 = vset.pattern.permute.xlu0 0
        %3240 = vperm.xlu0 %3239, %v3142
        %v3241 = vpop.permute.xlu0 %3240
        %v3244 = vsel %vm1391, %v3046, 0
        %v3247 = vsel %vm1391, %v3050, 0
        %v3250 = vsel %vm1391, %v3054, 0
        %v3253 = vsel %vm1391, %v3058, 0
        %v3256 = vsel %vm1391, %v3062, 0
        %v3259 = vsel %vm1391, %v3066, 0
        %v3262 = vsel %vm1391, %v3070, 0
        %v3265 = vsel %vm1391, %v3074, 0
        %v3268 = vsel %vm1391, %v3078, 0
        %v3271 = vsel %vm1391, %v3082, 0
        %v3274 = vsel %vm1391, %v3086, 0
        %v3277 = vsel %vm1391, %v3090, 0
        %v3280 = vsel %vm1391, %v3094, 0
        %v3283 = vsel %vm1391, %v3098, 0
        %v3286 = vsel %vm1391, %v3102, 0
        %v3289 = vsel %vm1391, %v3106, 0
        %v3292 = vsel %vm1391, %v3110, 0
        %v3295 = vsel %vm1391, %v3114, 0
        %v3298 = vsel %vm1391, %v3118, 0
        %v3301 = vsel %vm1391, %v3122, 0
        %3303 = vmatpush.msra.mxu0 %v2924
        %3304 = vmatpush.msra.mxu0 %v2922
        %3305 = vmatpush.msra.mxu0 %v2918
        %3306 = vmatpush.msra.mxu0 %v2916
        %3307 = vmatpush.msra.mxu0 %v2878
        %3308 = vmatpush.msra.mxu0 %v2877
        %3309 = vmatpush.msra.mxu0 %v2910
        %3310 = vmatpush.msra.mxu0 %v2908
        %3311 = vmatpush.msra.mxu0 %v2904
        %3312 = vmatpush.msra.mxu0 %v2902
        %3313 = vmatpush.msra.mxu0 %v2898
        %3314 = vmatpush.msra.mxu0 %v2896
        %3315 = vmatpush.msra.mxu0 %v2892
        %3316 = vmatpush.msra.mxu0 %v2890
        %3317 = vmatpush.msra.mxu0 %v2876
        %3318 = vmatpush.msra.mxu0 %v2875
        %3319 = vmatmul.f32.gmra.mxu0 %v3043
        %v3320 = vpop.f32.mrf.mxu0
        %v3321 = vadd.f32 %v3146, %v3320
        %3322 = vmatmul.f32.gmra.mxu0 %v3047
        %v3323 = vpop.f32.mrf.mxu0
        %v3324 = vadd.f32 %v3151, %v3323
        %3325 = vmatmul.f32.gmra.mxu0 %v3051
        %v3326 = vpop.f32.mrf.mxu0
        %v3327 = vadd.f32 %v3156, %v3326
        %3328 = vmatmul.f32.gmra.mxu0 %v3055
        %v3329 = vpop.f32.mrf.mxu0
        %v3330 = vadd.f32 %v3161, %v3329
        %3331 = vmatmul.f32.gmra.mxu0 %v3059
        %v3332 = vpop.f32.mrf.mxu0
        %v3333 = vadd.f32 %v3166, %v3332
        %3334 = vmatmul.f32.gmra.mxu0 %v3063
        %v3335 = vpop.f32.mrf.mxu0
        %v3336 = vadd.f32 %v3171, %v3335
        %3337 = vmatmul.f32.gmra.mxu0 %v3067
        %v3338 = vpop.f32.mrf.mxu0
        %v3339 = vadd.f32 %v3176, %v3338
        %3340 = vmatmul.f32.gmra.mxu0 %v3071
        %v3341 = vpop.f32.mrf.mxu0
        %v3342 = vadd.f32 %v3181, %v3341
        %3343 = vmatmul.f32.gmra.mxu0 %v3075
        %v3344 = vpop.f32.mrf.mxu0
        %v3345 = vadd.f32 %v3186, %v3344
        %3346 = vmatmul.f32.gmra.mxu0 %v3079
        %v3347 = vpop.f32.mrf.mxu0
        %v3348 = vadd.f32 %v3191, %v3347
        %3349 = vmatmul.f32.gmra.mxu0 %v3083
        %v3350 = vpop.f32.mrf.mxu0
        %v3351 = vadd.f32 %v3196, %v3350
        %3352 = vmatmul.f32.gmra.mxu0 %v3087
        %v3353 = vpop.f32.mrf.mxu0
        %v3354 = vadd.f32 %v3201, %v3353
        %3355 = vmatmul.f32.gmra.mxu0 %v3091
        %v3356 = vpop.f32.mrf.mxu0
        %v3357 = vadd.f32 %v3206, %v3356
        %3358 = vmatmul.f32.gmra.mxu0 %v3095
        %v3359 = vpop.f32.mrf.mxu0
        %v3360 = vadd.f32 %v3211, %v3359
        %3361 = vmatmul.f32.gmra.mxu0 %v3099
        %v3362 = vpop.f32.mrf.mxu0
        %v3363 = vadd.f32 %v3216, %v3362
        %3364 = vmatmul.f32.gmra.mxu0 %v3103
        %v3365 = vpop.f32.mrf.mxu0
        %v3366 = vadd.f32 %v3221, %v3365
        %3367 = vmatmul.f32.gmra.mxu0 %v3107
        %v3368 = vpop.f32.mrf.mxu0
        %v3369 = vadd.f32 %v3226, %v3368
        %3370 = vmatmul.f32.gmra.mxu0 %v3111
        %v3371 = vpop.f32.mrf.mxu0
        %v3372 = vadd.f32 %v3231, %v3371
        %3373 = vmatmul.f32.gmra.mxu0 %v3115
        %v3374 = vpop.f32.mrf.mxu0
        %v3375 = vadd.f32 %v3236, %v3374
        %3376 = vmatmul.f32.gmra.mxu0 %v3119
        %v3377 = vpop.f32.mrf.mxu0
        %v3378 = vadd.f32 %v3241, %v3377
        %3379 = vdwg.mxu0
        %3380 = vmatpush.msra.mxu0 %v2882
        %3381 = vmatpush.msra.mxu0 %v2881
        %3382 = vmatpush.msra.mxu0 %v2962
        %3383 = vmatpush.msra.mxu0 %v2960
        %3384 = vmatpush.msra.mxu0 %v2956
        %3385 = vmatpush.msra.mxu0 %v2954
        %3386 = vmatpush.msra.mxu0 %v2950
        %3387 = vmatpush.msra.mxu0 %v2948
        %3388 = vmatpush.msra.mxu0 %v2944
        %3389 = vmatpush.msra.mxu0 %v2942
        %3390 = vmatpush.msra.mxu0 %v2880
        %3391 = vmatpush.msra.mxu0 %v2879
        %3392 = vmatpush.msra.mxu0 %v2936
        %3393 = vmatpush.msra.mxu0 %v2934
        %3394 = vmatpush.msra.mxu0 %v2930
        %3395 = vmatpush.msra.mxu0 %v2928
        %3396 = vmatmul.f32.gmra.mxu0 %v3044
        %v3397 = vpop.f32.mrf.mxu0
        %v3398 = vadd.f32 %v3321, %v3397
        %3399 = vmatmul.f32.gmra.mxu0 %v3048
        %v3400 = vpop.f32.mrf.mxu0
        %v3401 = vadd.f32 %v3324, %v3400
        %3402 = vmatmul.f32.gmra.mxu0 %v3052
        %v3403 = vpop.f32.mrf.mxu0
        %v3404 = vadd.f32 %v3327, %v3403
        %3405 = vmatmul.f32.gmra.mxu0 %v3056
        %v3406 = vpop.f32.mrf.mxu0
        %v3407 = vadd.f32 %v3330, %v3406
        %3408 = vmatmul.f32.gmra.mxu0 %v3060
        %v3409 = vpop.f32.mrf.mxu0
        %v3410 = vadd.f32 %v3333, %v3409
        %3411 = vmatmul.f32.gmra.mxu0 %v3064
        %v3412 = vpop.f32.mrf.mxu0
        %v3413 = vadd.f32 %v3336, %v3412
        %3414 = vmatmul.f32.gmra.mxu0 %v3068
        %v3415 = vpop.f32.mrf.mxu0
        %v3416 = vadd.f32 %v3339, %v3415
        %3417 = vmatmul.f32.gmra.mxu0 %v3072
        %v3418 = vpop.f32.mrf.mxu0
        %v3419 = vadd.f32 %v3342, %v3418
        %3420 = vmatmul.f32.gmra.mxu0 %v3076
        %v3421 = vpop.f32.mrf.mxu0
        %v3422 = vadd.f32 %v3345, %v3421
        %3423 = vmatmul.f32.gmra.mxu0 %v3080
        %v3424 = vpop.f32.mrf.mxu0
        %v3425 = vadd.f32 %v3348, %v3424
        %3426 = vmatmul.f32.gmra.mxu0 %v3084
        %v3427 = vpop.f32.mrf.mxu0
        %v3428 = vadd.f32 %v3351, %v3427
        %3429 = vmatmul.f32.gmra.mxu0 %v3088
        %v3430 = vpop.f32.mrf.mxu0
        %v3431 = vadd.f32 %v3354, %v3430
        %3432 = vmatmul.f32.gmra.mxu0 %v3092
        %v3433 = vpop.f32.mrf.mxu0
        %v3434 = vadd.f32 %v3357, %v3433
        %3435 = vmatmul.f32.gmra.mxu0 %v3096
        %v3436 = vpop.f32.mrf.mxu0
        %v3437 = vadd.f32 %v3360, %v3436
        %3438 = vmatmul.f32.gmra.mxu0 %v3100
        %v3439 = vpop.f32.mrf.mxu0
        %v3440 = vadd.f32 %v3363, %v3439
        %3441 = vmatmul.f32.gmra.mxu0 %v3104
        %v3442 = vpop.f32.mrf.mxu0
        %v3443 = vadd.f32 %v3366, %v3442
        %3444 = vmatmul.f32.gmra.mxu0 %v3108
        %v3445 = vpop.f32.mrf.mxu0
        %v3446 = vadd.f32 %v3369, %v3445
        %3447 = vmatmul.f32.gmra.mxu0 %v3112
        %v3448 = vpop.f32.mrf.mxu0
        %v3449 = vadd.f32 %v3372, %v3448
        %3450 = vmatmul.f32.gmra.mxu0 %v3116
        %v3451 = vpop.f32.mrf.mxu0
        %v3452 = vadd.f32 %v3375, %v3451
        %3453 = vmatmul.f32.gmra.mxu0 %v3120
        %v3454 = vpop.f32.mrf.mxu0
        %v3455 = vadd.f32 %v3378, %v3454
        %3456 = vdwg.mxu0
        %3457 = vmatpush.msra.mxu0 %v3008
        %3458 = vmatpush.msra.mxu0 %v3006
        %3459 = vmatpush.msra.mxu0 %v3002
        %3460 = vmatpush.msra.mxu0 %v3000
        %3461 = vmatpush.msra.mxu0 %v2996
        %3462 = vmatpush.msra.mxu0 %v2994
        %3463 = vmatpush.msra.mxu0 %v2884
        %3464 = vmatpush.msra.mxu0 %v2883
        %3465 = vmatpush.msra.mxu0 %v2988
        %3466 = vmatpush.msra.mxu0 %v2986
        %3467 = vmatpush.msra.mxu0 %v2982
        %3468 = vmatpush.msra.mxu0 %v2980
        %3469 = vmatpush.msra.mxu0 %v2976
        %3470 = vmatpush.msra.mxu0 %v2974
        %3471 = vmatpush.msra.mxu0 %v2970
        %3472 = vmatpush.msra.mxu0 %v2968
        %3473 = vmatmul.f32.gmra.mxu0 %v3045
        %v3474 = vpop.f32.mrf.mxu0
        %v3475 = vadd.f32 %v3398, %v3474
        %3476 = vmatmul.f32.gmra.mxu0 %v3049
        %v3477 = vpop.f32.mrf.mxu0
        %v3478 = vadd.f32 %v3401, %v3477
        %3479 = vmatmul.f32.gmra.mxu0 %v3053
        %v3480 = vpop.f32.mrf.mxu0
        %v3481 = vadd.f32 %v3404, %v3480
        %3482 = vmatmul.f32.gmra.mxu0 %v3057
        %v3483 = vpop.f32.mrf.mxu0
        %v3484 = vadd.f32 %v3407, %v3483
        %3485 = vmatmul.f32.gmra.mxu0 %v3061
        %v3486 = vpop.f32.mrf.mxu0
        %v3487 = vadd.f32 %v3410, %v3486
        %3488 = vmatmul.f32.gmra.mxu0 %v3065
        %v3489 = vpop.f32.mrf.mxu0
        %v3490 = vadd.f32 %v3413, %v3489
        %3491 = vmatmul.f32.gmra.mxu0 %v3069
        %v3492 = vpop.f32.mrf.mxu0
        %v3493 = vadd.f32 %v3416, %v3492
        %3494 = vmatmul.f32.gmra.mxu0 %v3073
        %v3495 = vpop.f32.mrf.mxu0
        %v3496 = vadd.f32 %v3419, %v3495
        %3497 = vmatmul.f32.gmra.mxu0 %v3077
        %v3498 = vpop.f32.mrf.mxu0
        %v3499 = vadd.f32 %v3422, %v3498
        %3500 = vmatmul.f32.gmra.mxu0 %v3081
        %v3501 = vpop.f32.mrf.mxu0
        %v3502 = vadd.f32 %v3425, %v3501
        %3503 = vmatmul.f32.gmra.mxu0 %v3085
        %v3504 = vpop.f32.mrf.mxu0
        %v3505 = vadd.f32 %v3428, %v3504
        %3506 = vmatmul.f32.gmra.mxu0 %v3089
        %v3507 = vpop.f32.mrf.mxu0
        %v3508 = vadd.f32 %v3431, %v3507
        %3509 = vmatmul.f32.gmra.mxu0 %v3093
        %v3510 = vpop.f32.mrf.mxu0
        %v3511 = vadd.f32 %v3434, %v3510
        %3512 = vmatmul.f32.gmra.mxu0 %v3097
        %v3513 = vpop.f32.mrf.mxu0
        %v3514 = vadd.f32 %v3437, %v3513
        %3515 = vmatmul.f32.gmra.mxu0 %v3101
        %v3516 = vpop.f32.mrf.mxu0
        %v3517 = vadd.f32 %v3440, %v3516
        %3518 = vmatmul.f32.gmra.mxu0 %v3105
        %v3519 = vpop.f32.mrf.mxu0
        %v3520 = vadd.f32 %v3443, %v3519
        %3521 = vmatmul.f32.gmra.mxu0 %v3109
        %v3522 = vpop.f32.mrf.mxu0
        %v3523 = vadd.f32 %v3446, %v3522
        %3524 = vmatmul.f32.gmra.mxu0 %v3113
        %v3525 = vpop.f32.mrf.mxu0
        %v3526 = vadd.f32 %v3449, %v3525
        %3527 = vmatmul.f32.gmra.mxu0 %v3117
        %v3528 = vpop.f32.mrf.mxu0
        %v3529 = vadd.f32 %v3452, %v3528
        %3530 = vmatmul.f32.gmra.mxu0 %v3121
        %v3531 = vpop.f32.mrf.mxu0
        %v3532 = vadd.f32 %v3455, %v3531
        %3533 = vdwg.mxu0
        %3534 = vmatpush.msra.mxu0 0.0
        %3535 = vmatpush.msra.mxu0 0.0
        %3536 = vmatpush.msra.mxu0 0.0
        %3537 = vmatpush.msra.mxu0 0.0
        %3538 = vmatpush.msra.mxu0 %v3040
        %3539 = vmatpush.msra.mxu0 %v3038
        %3540 = vmatpush.msra.mxu0 %v3034
        %3541 = vmatpush.msra.mxu0 %v3032
        %3542 = vmatpush.msra.mxu0 %v3028
        %3543 = vmatpush.msra.mxu0 %v3026
        %3544 = vmatpush.msra.mxu0 %v3022
        %3545 = vmatpush.msra.mxu0 %v3020
        %3546 = vmatpush.msra.mxu0 %v2886
        %3547 = vmatpush.msra.mxu0 %v2885
        %3548 = vmatpush.msra.mxu0 %v3014
        %3549 = vmatpush.msra.mxu0 %v3012
        %3550 = vmatmul.f32.gmra.mxu0 %v3244
        %v3551 = vpop.f32.mrf.mxu0
        %v3552 = vadd.f32 %v3475, %v3551
        %3553 = vmatmul.f32.gmra.mxu0 %v3247
        %v3554 = vpop.f32.mrf.mxu0
        %v3555 = vadd.f32 %v3478, %v3554
        %3556 = vmatmul.f32.gmra.mxu0 %v3250
        %v3557 = vpop.f32.mrf.mxu0
        %v3558 = vadd.f32 %v3481, %v3557
        %3559 = vmatmul.f32.gmra.mxu0 %v3253
        %v3560 = vpop.f32.mrf.mxu0
        %v3561 = vadd.f32 %v3484, %v3560
        %3562 = vmatmul.f32.gmra.mxu0 %v3256
        %v3563 = vpop.f32.mrf.mxu0
        %v3564 = vadd.f32 %v3487, %v3563
        %3565 = vmatmul.f32.gmra.mxu0 %v3259
        %v3566 = vpop.f32.mrf.mxu0
        %v3567 = vadd.f32 %v3490, %v3566
        %3568 = vmatmul.f32.gmra.mxu0 %v3262
        %v3569 = vpop.f32.mrf.mxu0
        %v3570 = vadd.f32 %v3493, %v3569
        %3571 = vmatmul.f32.gmra.mxu0 %v3265
        %v3572 = vpop.f32.mrf.mxu0
        %v3573 = vadd.f32 %v3496, %v3572
        %3574 = vmatmul.f32.gmra.mxu0 %v3268
        %v3575 = vpop.f32.mrf.mxu0
        %v3576 = vadd.f32 %v3499, %v3575
        %3577 = vmatmul.f32.gmra.mxu0 %v3271
        %v3578 = vpop.f32.mrf.mxu0
        %v3579 = vadd.f32 %v3502, %v3578
        %3580 = vmatmul.f32.gmra.mxu0 %v3274
        %v3581 = vpop.f32.mrf.mxu0
        %v3582 = vadd.f32 %v3505, %v3581
        %3583 = vmatmul.f32.gmra.mxu0 %v3277
        %v3584 = vpop.f32.mrf.mxu0
        %v3585 = vadd.f32 %v3508, %v3584
        %3586 = vmatmul.f32.gmra.mxu0 %v3280
        %v3587 = vpop.f32.mrf.mxu0
        %v3588 = vadd.f32 %v3511, %v3587
        %3589 = vmatmul.f32.gmra.mxu0 %v3283
        %v3590 = vpop.f32.mrf.mxu0
        %v3591 = vadd.f32 %v3514, %v3590
        %3592 = vmatmul.f32.gmra.mxu0 %v3286
        %v3593 = vpop.f32.mrf.mxu0
        %v3594 = vadd.f32 %v3517, %v3593
        %3595 = vmatmul.f32.gmra.mxu0 %v3289
        %v3596 = vpop.f32.mrf.mxu0
        %v3597 = vadd.f32 %v3520, %v3596
        %3598 = vmatmul.f32.gmra.mxu0 %v3292
        %v3599 = vpop.f32.mrf.mxu0
        %v3600 = vadd.f32 %v3523, %v3599
        %3601 = vmatmul.f32.gmra.mxu0 %v3295
        %v3602 = vpop.f32.mrf.mxu0
        %v3603 = vadd.f32 %v3526, %v3602
        %3604 = vmatmul.f32.gmra.mxu0 %v3298
        %v3605 = vpop.f32.mrf.mxu0
        %v3606 = vadd.f32 %v3529, %v3605
        %3607 = vmatmul.f32.gmra.mxu0 %v3301
        %v3608 = vpop.f32.mrf.mxu0
        %v3609 = vadd.f32 %v3532, %v3608
        %3610 = vdwg.mxu0
        %v3611 = vmax.f32 %v3552, 0.0
        %v3612 = vmax.f32 %v3555, 0.0
        %v3613 = vmax.f32 %v3558, 0.0
        %v3614 = vmax.f32 %v3561, 0.0
        %v3615 = vmax.f32 %v3564, 0.0
        %v3616 = vmax.f32 %v3567, 0.0
        %v3617 = vmax.f32 %v3570, 0.0
        %v3618 = vmax.f32 %v3573, 0.0
        %v3619 = vmax.f32 %v3576, 0.0
        %v3620 = vmax.f32 %v3579, 0.0
        %v3621 = vmax.f32 %v3582, 0.0
        %v3622 = vmax.f32 %v3585, 0.0
        %v3623 = vmax.f32 %v3588, 0.0
        %v3624 = vmax.f32 %v3591, 0.0
        %v3625 = vmax.f32 %v3594, 0.0
        %v3626 = vmax.f32 %v3597, 0.0
        %v3627 = vmax.f32 %v3600, 0.0
        %v3628 = vmax.f32 %v3603, 0.0
        %v3629 = vmax.f32 %v3606, 0.0
        %v3630 = vmax.f32 %v3609, 0.0
        %v3631 = vld [vmem:[%s9] sm:$0xff]
        %v3632 = vld [vmem:[%s9 + $0x8] sm:$0xff]
        %v3633 = vld [vmem:[%s9 + $0x10] sm:$0xff]
        %v3634 = vld [vmem:[%s9 + $0x18] sm:$0xff]
        %v3635 = vld [vmem:[%s9 + $0x20] sm:$0xff]
        %v3636 = vld [vmem:[%s9 + $0x28] sm:$0xff]
        %v3637 = vld [vmem:[%s9 + $0x30] sm:$0xff]
        %v3638 = vld [vmem:[%s9 + $0x38] sm:$0xff]
        %v3639 = vld [vmem:[%s9 + $0x40] sm:$0xff]
        %v3640 = vld [vmem:[%s9 + $0x48] sm:$0xff]
        %v3641 = vld [vmem:[%s9 + $0x50] sm:$0xff]
        %v3642 = vld [vmem:[%s9 + $0x58] sm:$0xff]
        %v3643 = vld [vmem:[%s9 + $0x60] sm:$0xff]
        %v3644 = vld [vmem:[%s9 + $0x68] sm:$0xff]
        %v3645 = vld [vmem:[%s9 + $0x70] sm:$0xff]
        %v3646 = vld [vmem:[%s9 + $0x78] sm:$0xff]
        %3647 = vmatpush.msra.mxu0 %v3646
        %3648 = vmatpush.msra.mxu0 %v3645
        %3649 = vmatpush.msra.mxu0 %v3644
        %3650 = vmatpush.msra.mxu0 %v3643
        %3651 = vmatpush.msra.mxu0 %v3642
        %3652 = vmatpush.msra.mxu0 %v3641
        %3653 = vmatpush.msra.mxu0 %v3640
        %3654 = vmatpush.msra.mxu0 %v3639
        %3655 = vmatpush.msra.mxu0 %v3638
        %3656 = vmatpush.msra.mxu0 %v3637
        %3657 = vmatpush.msra.mxu0 %v3636
        %3658 = vmatpush.msra.mxu0 %v3635
        %3659 = vmatpush.msra.mxu0 %v3634
        %3660 = vmatpush.msra.mxu0 %v3633
        %3661 = vmatpush.msra.mxu0 %v3632
        %3662 = vmatpush.msra.mxu0 %v3631
        %3663 = vmatmul.f32.gmra.mxu0 %v3611
        %v3664 = vpop.f32.mrf.mxu0
        %v3665 = vadd.f32 0.0, %v3664
        %3666 = vmatmul.f32.gmra.mxu0 %v3612
        %v3667 = vpop.f32.mrf.mxu0
        %v3668 = vadd.f32 0.0, %v3667
        %3669 = vmatmul.f32.gmra.mxu0 %v3613
        %v3670 = vpop.f32.mrf.mxu0
        %v3671 = vadd.f32 0.0, %v3670
        %3672 = vmatmul.f32.gmra.mxu0 %v3614
        %v3673 = vpop.f32.mrf.mxu0
        %v3674 = vadd.f32 0.0, %v3673
        %3675 = vmatmul.f32.gmra.mxu0 %v3615
        %v3676 = vpop.f32.mrf.mxu0
        %v3677 = vadd.f32 0.0, %v3676
        %3678 = vmatmul.f32.gmra.mxu0 %v3616
        %v3679 = vpop.f32.mrf.mxu0
        %v3680 = vadd.f32 0.0, %v3679
        %3681 = vmatmul.f32.gmra.mxu0 %v3617
        %v3682 = vpop.f32.mrf.mxu0
        %v3683 = vadd.f32 0.0, %v3682
        %3684 = vmatmul.f32.gmra.mxu0 %v3618
        %v3685 = vpop.f32.mrf.mxu0
        %v3686 = vadd.f32 0.0, %v3685
        %3687 = vmatmul.f32.gmra.mxu0 %v3619
        %v3688 = vpop.f32.mrf.mxu0
        %v3689 = vadd.f32 0.0, %v3688
        %3690 = vmatmul.f32.gmra.mxu0 %v3620
        %v3691 = vpop.f32.mrf.mxu0
        %v3692 = vadd.f32 0.0, %v3691
        %3693 = vmatmul.f32.gmra.mxu0 %v3621
        %v3694 = vpop.f32.mrf.mxu0
        %v3695 = vadd.f32 0.0, %v3694
        %3696 = vmatmul.f32.gmra.mxu0 %v3622
        %v3697 = vpop.f32.mrf.mxu0
        %v3698 = vadd.f32 0.0, %v3697
        %3699 = vmatmul.f32.gmra.mxu0 %v3623
        %v3700 = vpop.f32.mrf.mxu0
        %v3701 = vadd.f32 0.0, %v3700
        %3702 = vmatmul.f32.gmra.mxu0 %v3624
        %v3703 = vpop.f32.mrf.mxu0
        %v3704 = vadd.f32 0.0, %v3703
        %3705 = vmatmul.f32.gmra.mxu0 %v3625
        %v3706 = vpop.f32.mrf.mxu0
        %v3707 = vadd.f32 0.0, %v3706
        %3708 = vmatmul.f32.gmra.mxu0 %v3626
        %v3709 = vpop.f32.mrf.mxu0
        %v3710 = vadd.f32 0.0, %v3709
        %3711 = vmatmul.f32.gmra.mxu0 %v3627
        %v3712 = vpop.f32.mrf.mxu0
        %v3713 = vadd.f32 0.0, %v3712
        %3714 = vmatmul.f32.gmra.mxu0 %v3628
        %v3715 = vpop.f32.mrf.mxu0
        %v3716 = vadd.f32 0.0, %v3715
        %3717 = vmatmul.f32.gmra.mxu0 %v3629
        %v3718 = vpop.f32.mrf.mxu0
        %v3719 = vadd.f32 0.0, %v3718
        %3720 = vmatmul.f32.gmra.mxu0 %v3630
        %v3721 = vpop.f32.mrf.mxu0
        %v3722 = vadd.f32 0.0, %v3721
        %3723 = vdwg.mxu0
        %v3724 = vld [vmem:[%s10] sm:$0xff]
        %v3725 = vld [vmem:[%s10 + $0x8] sm:$0xff]
        %v3726 = vld [vmem:[%s10 + $0x10] sm:$0xff]
        %v3727 = vld [vmem:[%s10 + $0x18] sm:$0xff]
        %v3728 = vld [vmem:[%s10 + $0x20] sm:$0xff]
        %v3729 = vld [vmem:[%s10 + $0x28] sm:$0xff]
        %v3730 = vld [vmem:[%s10 + $0x30] sm:$0xff]
        %v3731 = vld [vmem:[%s10 + $0x38] sm:$0xff]
        %v3732 = vld [vmem:[%s10 + $0x40] sm:$0xff]
        %v3733 = vld [vmem:[%s10 + $0x48] sm:$0xff]
        %v3734 = vld [vmem:[%s10 + $0x50] sm:$0xff]
        %v3735 = vld [vmem:[%s10 + $0x58] sm:$0xff]
        %v3736 = vld [vmem:[%s10 + $0x60] sm:$0xff]
        %v3737 = vld [vmem:[%s10 + $0x68] sm:$0xff]
        %v3738 = vld [vmem:[%s10 + $0x70] sm:$0xff]
        %v3739 = vld [vmem:[%s10 + $0x78] sm:$0xff]
        %3740 = vmatpush.msra.mxu0 %v3739
        %3741 = vmatpush.msra.mxu0 %v3738
        %3742 = vmatpush.msra.mxu0 %v3737
        %3743 = vmatpush.msra.mxu0 %v3736
        %3744 = vmatpush.msra.mxu0 %v3735
        %3745 = vmatpush.msra.mxu0 %v3734
        %3746 = vmatpush.msra.mxu0 %v3733
        %3747 = vmatpush.msra.mxu0 %v3732
        %3748 = vmatpush.msra.mxu0 %v3731
        %3749 = vmatpush.msra.mxu0 %v3730
        %3750 = vmatpush.msra.mxu0 %v3729
        %3751 = vmatpush.msra.mxu0 %v3728
        %3752 = vmatpush.msra.mxu0 %v3727
        %3753 = vmatpush.msra.mxu0 %v3726
        %3754 = vmatpush.msra.mxu0 %v3725
        %3755 = vmatpush.msra.mxu0 %v3724
        %3756 = vmatmul.f32.gmra.mxu0 %v3611
        %v3757 = vpop.f32.mrf.mxu0
        %v3758 = vadd.f32 0.0, %v3757
        %3759 = vmatmul.f32.gmra.mxu0 %v3612
        %v3760 = vpop.f32.mrf.mxu0
        %v3761 = vadd.f32 0.0, %v3760
        %3762 = vmatmul.f32.gmra.mxu0 %v3613
        %v3763 = vpop.f32.mrf.mxu0
        %v3764 = vadd.f32 0.0, %v3763
        %3765 = vmatmul.f32.gmra.mxu0 %v3614
        %v3766 = vpop.f32.mrf.mxu0
        %v3767 = vadd.f32 0.0, %v3766
        %3768 = vmatmul.f32.gmra.mxu0 %v3615
        %v3769 = vpop.f32.mrf.mxu0
        %v3770 = vadd.f32 0.0, %v3769
        %3771 = vmatmul.f32.gmra.mxu0 %v3616
        %v3772 = vpop.f32.mrf.mxu0
        %v3773 = vadd.f32 0.0, %v3772
        %3774 = vmatmul.f32.gmra.mxu0 %v3617
        %v3775 = vpop.f32.mrf.mxu0
        %v3776 = vadd.f32 0.0, %v3775
        %3777 = vmatmul.f32.gmra.mxu0 %v3618
        %v3778 = vpop.f32.mrf.mxu0
        %v3779 = vadd.f32 0.0, %v3778
        %3780 = vmatmul.f32.gmra.mxu0 %v3619
        %v3781 = vpop.f32.mrf.mxu0
        %v3782 = vadd.f32 0.0, %v3781
        %3783 = vmatmul.f32.gmra.mxu0 %v3620
        %v3784 = vpop.f32.mrf.mxu0
        %v3785 = vadd.f32 0.0, %v3784
        %3786 = vmatmul.f32.gmra.mxu0 %v3621
        %v3787 = vpop.f32.mrf.mxu0
        %v3788 = vadd.f32 0.0, %v3787
        %3789 = vmatmul.f32.gmra.mxu0 %v3622
        %v3790 = vpop.f32.mrf.mxu0
        %v3791 = vadd.f32 0.0, %v3790
        %3792 = vmatmul.f32.gmra.mxu0 %v3623
        %v3793 = vpop.f32.mrf.mxu0
        %v3794 = vadd.f32 0.0, %v3793
        %3795 = vmatmul.f32.gmra.mxu0 %v3624
        %v3796 = vpop.f32.mrf.mxu0
        %v3797 = vadd.f32 0.0, %v3796
        %3798 = vmatmul.f32.gmra.mxu0 %v3625
        %v3799 = vpop.f32.mrf.mxu0
        %v3800 = vadd.f32 0.0, %v3799
        %3801 = vmatmul.f32.gmra.mxu0 %v3626
        %v3802 = vpop.f32.mrf.mxu0
        %v3803 = vadd.f32 0.0, %v3802
        %3804 = vmatmul.f32.gmra.mxu0 %v3627
        %v3805 = vpop.f32.mrf.mxu0
        %v3806 = vadd.f32 0.0, %v3805
        %3807 = vmatmul.f32.gmra.mxu0 %v3628
        %v3808 = vpop.f32.mrf.mxu0
        %v3809 = vadd.f32 0.0, %v3808
        %3810 = vmatmul.f32.gmra.mxu0 %v3629
        %v3811 = vpop.f32.mrf.mxu0
        %v3812 = vadd.f32 0.0, %v3811
        %3813 = vmatmul.f32.gmra.mxu0 %v3630
        %v3814 = vpop.f32.mrf.mxu0
        %v3815 = vadd.f32 0.0, %v3814
        %3816 = vdwg.mxu0
        %v3817 = vmax.f32 %v3665, %v3758
        %v3818 = vmax.f32 %v3668, %v3761
        %v3819 = vmax.f32 %v3671, %v3764
        %v3820 = vmax.f32 %v3674, %v3767
        %v3821 = vmax.f32 %v3677, %v3770
        %v3822 = vmax.f32 %v3680, %v3773
        %v3823 = vmax.f32 %v3683, %v3776
        %v3824 = vmax.f32 %v3686, %v3779
        %v3825 = vmax.f32 %v3689, %v3782
        %v3826 = vmax.f32 %v3692, %v3785
        %v3827 = vmax.f32 %v3695, %v3788
        %v3828 = vmax.f32 %v3698, %v3791
        %v3829 = vmax.f32 %v3701, %v3794
        %v3830 = vmax.f32 %v3704, %v3797
        %v3831 = vmax.f32 %v3707, %v3800
        %v3832 = vmax.f32 %v3710, %v3803
        %v3833 = vmax.f32 %v3713, %v3806
        %v3834 = vmax.f32 %v3716, %v3809
        %v3835 = vmax.f32 %v3719, %v3812
        %v3836 = vmax.f32 %v3722, %v3815
        %v3837 = vld [vmem:[%s11] sm:$0xff]
        %v3838 = vld [vmem:[%s11 + $0x8] sm:$0xff]
        %v3839 = vld [vmem:[%s11 + $0x10] sm:$0xff]
        %v3840 = vld [vmem:[%s11 + $0x18] sm:$0xff]
        %v3841 = vld [vmem:[%s11 + $0x20] sm:$0xff]
        %v3842 = vld [vmem:[%s11 + $0x28] sm:$0xff]
        %v3843 = vld [vmem:[%s11 + $0x30] sm:$0xff]
        %v3844 = vld [vmem:[%s11 + $0x38] sm:$0xff]
        %v3845 = vld [vmem:[%s11 + $0x40] sm:$0xff]
        %v3846 = vld [vmem:[%s11 + $0x48] sm:$0xff]
        %v3847 = vld [vmem:[%s11 + $0x50] sm:$0xff]
        %v3848 = vld [vmem:[%s11 + $0x58] sm:$0xff]
        %v3849 = vld [vmem:[%s11 + $0x60] sm:$0xff]
        %v3850 = vld [vmem:[%s11 + $0x68] sm:$0xff]
        %v3851 = vld [vmem:[%s11 + $0x70] sm:$0xff]
        %v3852 = vld [vmem:[%s11 + $0x78] sm:$0xff]
        %v3853 = vld [vmem:[%s11 + $0x80] sm:$0xff]
        %v3854 = vld [vmem:[%s11 + $0x88] sm:$0xff]
        %v3855 = vld [vmem:[%s11 + $0x90] sm:$0xff]
        %v3856 = vld [vmem:[%s11 + $0x98] sm:$0xff]
        %vm3857 = vcmask 261120
        %v3859 = vsel %vm3857, %v3838, 0
        %v3862 = vsel %vm3857, %v3840, 0
        %v3865 = vsel %vm3857, %v3842, 0
        %v3868 = vsel %vm3857, %v3844, 0
        %v3871 = vsel %vm3857, %v3846, 0
        %v3874 = vsel %vm3857, %v3848, 0
        %v3877 = vsel %vm3857, %v3850, 0
        %v3880 = vsel %vm3857, %v3852, 0
        %v3883 = vsel %vm3857, %v3854, 0
        %v3886 = vsel %vm3857, %v3856, 0
        %3888 = vmatpush.msra.mxu0 %v3832
        %3889 = vmatpush.msra.mxu0 %v3831
        %3890 = vmatpush.msra.mxu0 %v3830
        %3891 = vmatpush.msra.mxu0 %v3829
        %3892 = vmatpush.msra.mxu0 %v3828
        %3893 = vmatpush.msra.mxu0 %v3827
        %3894 = vmatpush.msra.mxu0 %v3826
        %3895 = vmatpush.msra.mxu0 %v3825
        %3896 = vmatpush.msra.mxu0 %v3824
        %3897 = vmatpush.msra.mxu0 %v3823
        %3898 = vmatpush.msra.mxu0 %v3822
        %3899 = vmatpush.msra.mxu0 %v3821
        %3900 = vmatpush.msra.mxu0 %v3820
        %3901 = vmatpush.msra.mxu0 %v3819
        %3902 = vmatpush.msra.mxu0 %v3818
        %3903 = vmatpush.msra.mxu0 %v3817
        %3904 = vmatmul.f32.gmra.mxu0 %v3837
        %v3905 = vpop.f32.mrf.mxu0
        %v3906 = vadd.f32 0.0, %v3905
        %3907 = vmatmul.f32.gmra.mxu0 %v3839
        %v3908 = vpop.f32.mrf.mxu0
        %v3909 = vadd.f32 0.0, %v3908
        %3910 = vmatmul.f32.gmra.mxu0 %v3841
        %v3911 = vpop.f32.mrf.mxu0
        %v3912 = vadd.f32 0.0, %v3911
        %3913 = vmatmul.f32.gmra.mxu0 %v3843
        %v3914 = vpop.f32.mrf.mxu0
        %v3915 = vadd.f32 0.0, %v3914
        %3916 = vmatmul.f32.gmra.mxu0 %v3845
        %v3917 = vpop.f32.mrf.mxu0
        %v3918 = vadd.f32 0.0, %v3917
        %3919 = vmatmul.f32.gmra.mxu0 %v3847
        %v3920 = vpop.f32.mrf.mxu0
        %v3921 = vadd.f32 0.0, %v3920
        %3922 = vmatmul.f32.gmra.mxu0 %v3849
        %v3923 = vpop.f32.mrf.mxu0
        %v3924 = vadd.f32 0.0, %v3923
        %3925 = vmatmul.f32.gmra.mxu0 %v3851
        %v3926 = vpop.f32.mrf.mxu0
        %v3927 = vadd.f32 0.0, %v3926
        %3928 = vmatmul.f32.gmra.mxu0 %v3853
        %v3929 = vpop.f32.mrf.mxu0
        %v3930 = vadd.f32 0.0, %v3929
        %3931 = vmatmul.f32.gmra.mxu0 %v3855
        %v3932 = vpop.f32.mrf.mxu0
        %v3933 = vadd.f32 0.0, %v3932
        %3934 = vdwg.mxu0
        %3935 = vmatpush.msra.mxu0 0.0
        %3936 = vmatpush.msra.mxu0 0.0
        %3937 = vmatpush.msra.mxu0 0.0
        %3938 = vmatpush.msra.mxu0 0.0
        %3939 = vmatpush.msra.mxu0 0.0
        %3940 = vmatpush.msra.mxu0 0.0
        %3941 = vmatpush.msra.mxu0 0.0
        %3942 = vmatpush.msra.mxu0 0.0
        %3943 = vmatpush.msra.mxu0 0.0
        %3944 = vmatpush.msra.mxu0 0.0
        %3945 = vmatpush.msra.mxu0 0.0
        %3946 = vmatpush.msra.mxu0 0.0
        %3947 = vmatpush.msra.mxu0 %v3836
        %3948 = vmatpush.msra.mxu0 %v3835
        %3949 = vmatpush.msra.mxu0 %v3834
        %3950 = vmatpush.msra.mxu0 %v3833
        %3951 = vmatmul.f32.gmra.mxu0 %v3859
        %v3952 = vpop.f32.mrf.mxu0
        %v3953 = vadd.f32 %v3906, %v3952
        %3954 = vmatmul.f32.gmra.mxu0 %v3862
        %v3955 = vpop.f32.mrf.mxu0
        %v3956 = vadd.f32 %v3909, %v3955
        %3957 = vmatmul.f32.gmra.mxu0 %v3865
        %v3958 = vpop.f32.mrf.mxu0
        %v3959 = vadd.f32 %v3912, %v3958
        %3960 = vmatmul.f32.gmra.mxu0 %v3868
        %v3961 = vpop.f32.mrf.mxu0
        %v3962 = vadd.f32 %v3915, %v3961
        %3963 = vmatmul.f32.gmra.mxu0 %v3871
        %v3964 = vpop.f32.mrf.mxu0
        %v3965 = vadd.f32 %v3918, %v3964
        %3966 = vmatmul.f32.gmra.mxu0 %v3874
        %v3967 = vpop.f32.mrf.mxu0
        %v3968 = vadd.f32 %v3921, %v3967
        %3969 = vmatmul.f32.gmra.mxu0 %v3877
        %v3970 = vpop.f32.mrf.mxu0
        %v3971 = vadd.f32 %v3924, %v3970
        %3972 = vmatmul.f32.gmra.mxu0 %v3880
        %v3973 = vpop.f32.mrf.mxu0
        %v3974 = vadd.f32 %v3927, %v3973
        %3975 = vmatmul.f32.gmra.mxu0 %v3883
        %v3976 = vpop.f32.mrf.mxu0
        %v3977 = vadd.f32 %v3930, %v3976
        %3978 = vmatmul.f32.gmra.mxu0 %v3886
        %v3979 = vpop.f32.mrf.mxu0
        %v3980 = vadd.f32 %v3933, %v3979
        %3981 = vdwg.mxu0
        %v3982 = vld [vmem:[%s12] sm:$0xff]
        %v3983 = vld [vmem:[%s12 + $0x8] sm:$0xff]
        %v3984 = vld [vmem:[%s12 + $0x10] sm:$0xff]
        %v3985 = vld [vmem:[%s12 + $0x18] sm:$0xff]
        %v3986 = vld [vmem:[%s12 + $0x20] sm:$0xff]
        %v3987 = vld [vmem:[%s12 + $0x28] sm:$0xff]
        %v3988 = vld [vmem:[%s12 + $0x30] sm:$0xff]
        %v3989 = vld [vmem:[%s12 + $0x38] sm:$0xff]
        %v3990 = vld [vmem:[%s12 + $0x40] sm:$0xff]
        %v3991 = vld [vmem:[%s12 + $0x48] sm:$0xff]
        %v3992 = vld [vmem:[%s12 + $0x50] sm:$0xff]
        %v3993 = vld [vmem:[%s12 + $0x58] sm:$0xff]
        %v3994 = vld [vmem:[%s12 + $0x60] sm:$0xff]
        %v3995 = vld [vmem:[%s12 + $0x68] sm:$0xff]
        %v3996 = vld [vmem:[%s12 + $0x70] sm:$0xff]
        %v3997 = vld [vmem:[%s12 + $0x78] sm:$0xff]
        %v3998 = vld [vmem:[%s12 + $0x80] sm:$0xff]
        %v3999 = vld [vmem:[%s12 + $0x88] sm:$0xff]
        %v4000 = vld [vmem:[%s12 + $0x90] sm:$0xff]
        %v4001 = vld [vmem:[%s12 + $0x98] sm:$0xff]
        %v4003 = vsel %vm3857, %v3983, 0
        %v4006 = vsel %vm3857, %v3985, 0
        %v4009 = vsel %vm3857, %v3987, 0
        %v4012 = vsel %vm3857, %v3989, 0
        %v4015 = vsel %vm3857, %v3991, 0
        %v4018 = vsel %vm3857, %v3993, 0
        %v4021 = vsel %vm3857, %v3995, 0
        %v4024 = vsel %vm3857, %v3997, 0
        %v4027 = vsel %vm3857, %v3999, 0
        %v4030 = vsel %vm3857, %v4001, 0
        %4032 = vmatpush.msra.mxu0 %v3832
        %4033 = vmatpush.msra.mxu0 %v3831
        %4034 = vmatpush.msra.mxu0 %v3830
        %4035 = vmatpush.msra.mxu0 %v3829
        %4036 = vmatpush.msra.mxu0 %v3828
        %4037 = vmatpush.msra.mxu0 %v3827
        %4038 = vmatpush.msra.mxu0 %v3826
        %4039 = vmatpush.msra.mxu0 %v3825
        %4040 = vmatpush.msra.mxu0 %v3824
        %4041 = vmatpush.msra.mxu0 %v3823
        %4042 = vmatpush.msra.mxu0 %v3822
        %4043 = vmatpush.msra.mxu0 %v3821
        %4044 = vmatpush.msra.mxu0 %v3820
        %4045 = vmatpush.msra.mxu0 %v3819
        %4046 = vmatpush.msra.mxu0 %v3818
        %4047 = vmatpush.msra.mxu0 %v3817
        %4048 = vmatmul.f32.gmra.mxu0 %v3982
        %v4049 = vpop.f32.mrf.mxu0
        %v4050 = vadd.f32 0.0, %v4049
        %4051 = vmatmul.f32.gmra.mxu0 %v3984
        %v4052 = vpop.f32.mrf.mxu0
        %v4053 = vadd.f32 0.0, %v4052
        %4054 = vmatmul.f32.gmra.mxu0 %v3986
        %v4055 = vpop.f32.mrf.mxu0
        %v4056 = vadd.f32 0.0, %v4055
        %4057 = vmatmul.f32.gmra.mxu0 %v3988
        %v4058 = vpop.f32.mrf.mxu0
        %v4059 = vadd.f32 0.0, %v4058
        %4060 = vmatmul.f32.gmra.mxu0 %v3990
        %v4061 = vpop.f32.mrf.mxu0
        %v4062 = vadd.f32 0.0, %v4061
        %4063 = vmatmul.f32.gmra.mxu0 %v3992
        %v4064 = vpop.f32.mrf.mxu0
        %v4065 = vadd.f32 0.0, %v4064
        %4066 = vmatmul.f32.gmra.mxu0 %v3994
        %v4067 = vpop.f32.mrf.mxu0
        %v4068 = vadd.f32 0.0, %v4067
        %4069 = vmatmul.f32.gmra.mxu0 %v3996
        %v4070 = vpop.f32.mrf.mxu0
        %v4071 = vadd.f32 0.0, %v4070
        %4072 = vmatmul.f32.gmra.mxu0 %v3998
        %v4073 = vpop.f32.mrf.mxu0
        %v4074 = vadd.f32 0.0, %v4073
        %4075 = vmatmul.f32.gmra.mxu0 %v4000
        %v4076 = vpop.f32.mrf.mxu0
        %v4077 = vadd.f32 0.0, %v4076
        %4078 = vdwg.mxu0
        %4079 = vmatpush.msra.mxu0 0.0
        %4080 = vmatpush.msra.mxu0 0.0
        %4081 = vmatpush.msra.mxu0 0.0
        %4082 = vmatpush.msra.mxu0 0.0
        %4083 = vmatpush.msra.mxu0 0.0
        %4084 = vmatpush.msra.mxu0 0.0
        %4085 = vmatpush.msra.mxu0 0.0
        %4086 = vmatpush.msra.mxu0 0.0
        %4087 = vmatpush.msra.mxu0 0.0
        %4088 = vmatpush.msra.mxu0 0.0
        %4089 = vmatpush.msra.mxu0 0.0
        %4090 = vmatpush.msra.mxu0 0.0
        %4091 = vmatpush.msra.mxu0 %v3836
        %4092 = vmatpush.msra.mxu0 %v3835
        %4093 = vmatpush.msra.mxu0 %v3834
        %4094 = vmatpush.msra.mxu0 %v3833
        %4095 = vmatmul.f32.gmra.mxu0 %v4003
        %v4096 = vpop.f32.mrf.mxu0
        %v4097 = vadd.f32 %v4050, %v4096
        %4098 = vmatmul.f32.gmra.mxu0 %v4006
        %v4099 = vpop.f32.mrf.mxu0
        %v4100 = vadd.f32 %v4053, %v4099
        %4101 = vmatmul.f32.gmra.mxu0 %v4009
        %v4102 = vpop.f32.mrf.mxu0
        %v4103 = vadd.f32 %v4056, %v4102
        %4104 = vmatmul.f32.gmra.mxu0 %v4012
        %v4105 = vpop.f32.mrf.mxu0
        %v4106 = vadd.f32 %v4059, %v4105
        %4107 = vmatmul.f32.gmra.mxu0 %v4015
        %v4108 = vpop.f32.mrf.mxu0
        %v4109 = vadd.f32 %v4062, %v4108
        %4110 = vmatmul.f32.gmra.mxu0 %v4018
        %v4111 = vpop.f32.mrf.mxu0
        %v4112 = vadd.f32 %v4065, %v4111
        %4113 = vmatmul.f32.gmra.mxu0 %v4021
        %v4114 = vpop.f32.mrf.mxu0
        %v4115 = vadd.f32 %v4068, %v4114
        %4116 = vmatmul.f32.gmra.mxu0 %v4024
        %v4117 = vpop.f32.mrf.mxu0
        %v4118 = vadd.f32 %v4071, %v4117
        %4119 = vmatmul.f32.gmra.mxu0 %v4027
        %v4120 = vpop.f32.mrf.mxu0
        %v4121 = vadd.f32 %v4074, %v4120
        %4122 = vmatmul.f32.gmra.mxu0 %v4030
        %v4123 = vpop.f32.mrf.mxu0
        %v4124 = vadd.f32 %v4077, %v4123
        %4125 = vdwg.mxu0
        %v4126 = vmax.f32 %v3953, %v4097
        %v4127 = vmax.f32 %v3956, %v4100
        %v4128 = vmax.f32 %v3959, %v4103
        %v4129 = vmax.f32 %v3962, %v4106
        %v4130 = vmax.f32 %v3965, %v4109
        %v4131 = vmax.f32 %v3968, %v4112
        %v4132 = vmax.f32 %v3971, %v4115
        %v4133 = vmax.f32 %v3974, %v4118
        %v4134 = vmax.f32 %v3977, %v4121
        %v4135 = vmax.f32 %v3980, %v4124
        %v4136 = vld [vmem:[%s13] sm:$0xff]
        %v4137 = vld [vmem:[%s13 + $0x8] sm:$0xff]
        %v4138 = vld [vmem:[%s13 + $0x10] sm:$0xff]
        %v4139 = vld [vmem:[%s13 + $0x18] sm:$0xff]
        %v4140 = vld [vmem:[%s13 + $0x20] sm:$0xff]
        %v4141 = vld [vmem:[%s13 + $0x28] sm:$0xff]
        %v4142 = vld [vmem:[%s13 + $0x30] sm:$0xff]
        %v4143 = vld [vmem:[%s13 + $0x38] sm:$0xff]
        %v4144 = vld [vmem:[%s13 + $0x40] sm:$0xff]
        %v4145 = vld [vmem:[%s13 + $0x48] sm:$0xff]
        %v4146 = vld [vmem:[%s13 + $0x50] sm:$0xff]
        %v4147 = vld [vmem:[%s13 + $0x58] sm:$0xff]
        %v4148 = vld [vmem:[%s13 + $0x60] sm:$0xff]
        %v4149 = vld [vmem:[%s13 + $0x68] sm:$0xff]
        %v4150 = vld [vmem:[%s13 + $0x70] sm:$0xff]
        %v4151 = vld [vmem:[%s13 + $0x78] sm:$0xff]
        %v4152 = vld [vmem:[%s13 + $0x80] sm:$0xff]
        %v4153 = vld [vmem:[%s13 + $0x88] sm:$0xff]
        %v4154 = vld [vmem:[%s13 + $0x90] sm:$0xff]
        %v4155 = vld [vmem:[%s13 + $0x98] sm:$0xff]
        %v4156 = vld [vmem:[%s13 + $0xa0] sm:$0xff]
        %v4157 = vld [vmem:[%s13 + $0xa8] sm:$0xff]
        %v4158 = vld [vmem:[%s13 + $0xb0] sm:$0xff]
        %v4159 = vld [vmem:[%s13 + $0xb8] sm:$0xff]
        %v4160 = vld [vmem:[%s13 + $0xc0] sm:$0xff]
        %v4161 = vld [vmem:[%s13 + $0xc8] sm:$0xff]
        %v4162 = vld [vmem:[%s13 + $0xd0] sm:$0xff]
        %v4163 = vld [vmem:[%s13 + $0xd8] sm:$0xff]
        %v4164 = vld [vmem:[%s13 + $0xe0] sm:$0xff]
        %v4165 = vld [vmem:[%s13 + $0xe8] sm:$0xff]
        %v4166 = vld [vmem:[%s13 + $0xf0] sm:$0xff]
        %v4167 = vld [vmem:[%s13 + $0xf8] sm:$0xff]
        %v4168 = vld [vmem:[%s13 + $0x100] sm:$0xff]
        %v4169 = vld [vmem:[%s13 + $0x108] sm:$0xff]
        %v4170 = vld [vmem:[%s13 + $0x110] sm:$0xff]
        %v4171 = vld [vmem:[%s13 + $0x118] sm:$0xff]
        %v4172 = vld [vmem:[%s13 + $0x120] sm:$0xff]
        %v4173 = vld [vmem:[%s13 + $0x128] sm:$0xff]
        %v4174 = vld [vmem:[%s13 + $0x130] sm:$0xff]
        %v4175 = vld [vmem:[%s13 + $0x138] sm:$0xff]
        %vm4176 = vcmask 523264
        %v4178 = vsel %vm4176, %v4126, 0
        %v4181 = vsel %vm4176, %v4127, 0
        %v4184 = vsel %vm4176, %v4128, 0
        %v4187 = vsel %vm4176, %v4129, 0
        %v4190 = vsel %vm4176, %v4130, 0
        %v4193 = vsel %vm4176, %v4131, 0
        %v4196 = vsel %vm4176, %v4132, 0
        %v4199 = vsel %vm4176, %v4133, 0
        %v4202 = vsel %vm4176, %v4134, 0
        %v4205 = vsel %vm4176, %v4135, 0
        %4207 = vmatpush.msra.mxu0 0.0
        %4208 = vmatpush.msra.mxu0 0.0
        %4209 = vmatpush.msra.mxu0 0.0
        %4210 = vmatpush.msra.mxu0 0.0
        %4211 = vmatpush.msra.mxu0 0.0
        %4212 = vmatpush.msra.mxu0 0.0
        %4213 = vmatpush.msra.mxu0 0.0
        %4214 = vmatpush.msra.mxu0 0.0
        %4215 = vmatpush.msra.mxu0 %v4143
        %4216 = vmatpush.msra.mxu0 %v4142
        %4217 = vmatpush.msra.mxu0 %v4141
        %4218 = vmatpush.msra.mxu0 %v4140
        %4219 = vmatpush.msra.mxu0 %v4139
        %4220 = vmatpush.msra.mxu0 %v4138
        %4221 = vmatpush.msra.mxu0 %v4137
        %4222 = vmatpush.msra.mxu0 %v4136
        %4223 = vmatmul.f32.gmra.mxu0 %v4178
        %v4224 = vpop.f32.mrf.mxu0
        %v4225 = vadd.f32 0.0, %v4224
        %4226 = vmatmul.f32.gmra.mxu0 %v4181
        %v4227 = vpop.f32.mrf.mxu0
        %v4228 = vadd.f32 0.0, %v4227
        %4229 = vmatmul.f32.gmra.mxu0 %v4184
        %v4230 = vpop.f32.mrf.mxu0
        %v4231 = vadd.f32 0.0, %v4230
        %4232 = vmatmul.f32.gmra.mxu0 %v4187
        %v4233 = vpop.f32.mrf.mxu0
        %v4234 = vadd.f32 0.0, %v4233
        %4235 = vmatmul.f32.gmra.mxu0 %v4190
        %v4236 = vpop.f32.mrf.mxu0
        %v4237 = vadd.f32 0.0, %v4236
        %4238 = vmatmul.f32.gmra.mxu0 %v4193
        %v4239 = vpop.f32.mrf.mxu0
        %v4240 = vadd.f32 0.0, %v4239
        %4241 = vmatmul.f32.gmra.mxu0 %v4196
        %v4242 = vpop.f32.mrf.mxu0
        %v4243 = vadd.f32 0.0, %v4242
        %4244 = vmatmul.f32.gmra.mxu0 %v4199
        %v4245 = vpop.f32.mrf.mxu0
        %v4246 = vadd.f32 0.0, %v4245
        %4247 = vmatmul.f32.gmra.mxu0 %v4202
        %v4248 = vpop.f32.mrf.mxu0
        %v4249 = vadd.f32 0.0, %v4248
        %4250 = vmatmul.f32.gmra.mxu0 %v4205
        %v4251 = vpop.f32.mrf.mxu0
        %v4252 = vadd.f32 0.0, %v4251
        %4253 = vdwg.mxu0
        %4254 = vmatpush.msra.mxu0 0.0
        %4255 = vmatpush.msra.mxu0 0.0
        %4256 = vmatpush.msra.mxu0 0.0
        %4257 = vmatpush.msra.mxu0 0.0
        %4258 = vmatpush.msra.mxu0 0.0
        %4259 = vmatpush.msra.mxu0 0.0
        %4260 = vmatpush.msra.mxu0 0.0
        %4261 = vmatpush.msra.mxu0 0.0
        %4262 = vmatpush.msra.mxu0 %v4151
        %4263 = vmatpush.msra.mxu0 %v4150
        %4264 = vmatpush.msra.mxu0 %v4149
        %4265 = vmatpush.msra.mxu0 %v4148
        %4266 = vmatpush.msra.mxu0 %v4147
        %4267 = vmatpush.msra.mxu0 %v4146
        %4268 = vmatpush.msra.mxu0 %v4145
        %4269 = vmatpush.msra.mxu0 %v4144
        %4270 = vmatmul.f32.gmra.mxu0 %v4178
        %v4271 = vpop.f32.mrf.mxu0
        %v4272 = vadd.f32 0.0, %v4271
        %4273 = vmatmul.f32.gmra.mxu0 %v4181
        %v4274 = vpop.f32.mrf.mxu0
        %v4275 = vadd.f32 0.0, %v4274
        %4276 = vmatmul.f32.gmra.mxu0 %v4184
        %v4277 = vpop.f32.mrf.mxu0
        %v4278 = vadd.f32 0.0, %v4277
        %4279 = vmatmul.f32.gmra.mxu0 %v4187
        %v4280 = vpop.f32.mrf.mxu0
        %v4281 = vadd.f32 0.0, %v4280
        %4282 = vmatmul.f32.gmra.mxu0 %v4190
        %v4283 = vpop.f32.mrf.mxu0
        %v4284 = vadd.f32 0.0, %v4283
        %4285 = vmatmul.f32.gmra.mxu0 %v4193
        %v4286 = vpop.f32.mrf.mxu0
        %v4287 = vadd.f32 0.0, %v4286
        %4288 = vmatmul.f32.gmra.mxu0 %v4196
        %v4289 = vpop.f32.mrf.mxu0
        %v4290 = vadd.f32 0.0, %v4289
        %4291 = vmatmul.f32.gmra.mxu0 %v4199
        %v4292 = vpop.f32.mrf.mxu0
        %v4293 = vadd.f32 0.0, %v4292
        %4294 = vmatmul.f32.gmra.mxu0 %v4202
        %v4295 = vpop.f32.mrf.mxu0
        %v4296 = vadd.f32 0.0, %v4295
        %4297 = vmatmul.f32.gmra.mxu0 %v4205
        %v4298 = vpop.f32.mrf.mxu0
        %v4299 = vadd.f32 0.0, %v4298
        %4300 = vdwg.mxu0
        %4301 = vmatpush.msra.mxu0 0.0
        %4302 = vmatpush.msra.mxu0 0.0
        %4303 = vmatpush.msra.mxu0 0.0
        %4304 = vmatpush.msra.mxu0 0.0
        %4305 = vmatpush.msra.mxu0 0.0
        %4306 = vmatpush.msra.mxu0 0.0
        %4307 = vmatpush.msra.mxu0 0.0
        %4308 = vmatpush.msra.mxu0 0.0
        %4309 = vmatpush.msra.mxu0 %v4159
        %4310 = vmatpush.msra.mxu0 %v4158
        %4311 = vmatpush.msra.mxu0 %v4157
        %4312 = vmatpush.msra.mxu0 %v4156
        %4313 = vmatpush.msra.mxu0 %v4155
        %4314 = vmatpush.msra.mxu0 %v4154
        %4315 = vmatpush.msra.mxu0 %v4153
        %4316 = vmatpush.msra.mxu0 %v4152
        %4317 = vmatmul.f32.gmra.mxu0 %v4178
        %v4318 = vpop.f32.mrf.mxu0
        %v4319 = vadd.f32 0.0, %v4318
        %4320 = vmatmul.f32.gmra.mxu0 %v4181
        %v4321 = vpop.f32.mrf.mxu0
        %v4322 = vadd.f32 0.0, %v4321
        %4323 = vmatmul.f32.gmra.mxu0 %v4184
        %v4324 = vpop.f32.mrf.mxu0
        %v4325 = vadd.f32 0.0, %v4324
        %4326 = vmatmul.f32.gmra.mxu0 %v4187
        %v4327 = vpop.f32.mrf.mxu0
        %v4328 = vadd.f32 0.0, %v4327
        %4329 = vmatmul.f32.gmra.mxu0 %v4190
        %v4330 = vpop.f32.mrf.mxu0
        %v4331 = vadd.f32 0.0, %v4330
        %4332 = vmatmul.f32.gmra.mxu0 %v4193
        %v4333 = vpop.f32.mrf.mxu0
        %v4334 = vadd.f32 0.0, %v4333
        %4335 = vmatmul.f32.gmra.mxu0 %v4196
        %v4336 = vpop.f32.mrf.mxu0
        %v4337 = vadd.f32 0.0, %v4336
        %4338 = vmatmul.f32.gmra.mxu0 %v4199
        %v4339 = vpop.f32.mrf.mxu0
        %v4340 = vadd.f32 0.0, %v4339
        %4341 = vmatmul.f32.gmra.mxu0 %v4202
        %v4342 = vpop.f32.mrf.mxu0
        %v4343 = vadd.f32 0.0, %v4342
        %4344 = vmatmul.f32.gmra.mxu0 %v4205
        %v4345 = vpop.f32.mrf.mxu0
        %v4346 = vadd.f32 0.0, %v4345
        %4347 = vdwg.mxu0
        %4348 = vmatpush.msra.mxu0 0.0
        %4349 = vmatpush.msra.mxu0 0.0
        %4350 = vmatpush.msra.mxu0 0.0
        %4351 = vmatpush.msra.mxu0 0.0
        %4352 = vmatpush.msra.mxu0 0.0
        %4353 = vmatpush.msra.mxu0 0.0
        %4354 = vmatpush.msra.mxu0 0.0
        %4355 = vmatpush.msra.mxu0 0.0
        %4356 = vmatpush.msra.mxu0 %v4167
        %4357 = vmatpush.msra.mxu0 %v4166
        %4358 = vmatpush.msra.mxu0 %v4165
        %4359 = vmatpush.msra.mxu0 %v4164
        %4360 = vmatpush.msra.mxu0 %v4163
        %4361 = vmatpush.msra.mxu0 %v4162
        %4362 = vmatpush.msra.mxu0 %v4161
        %4363 = vmatpush.msra.mxu0 %v4160
        %4364 = vmatmul.f32.gmra.mxu0 %v4178
        %v4365 = vpop.f32.mrf.mxu0
        %v4366 = vadd.f32 0.0, %v4365
        %4367 = vmatmul.f32.gmra.mxu0 %v4181
        %v4368 = vpop.f32.mrf.mxu0
        %v4369 = vadd.f32 0.0, %v4368
        %4370 = vmatmul.f32.gmra.mxu0 %v4184
        %v4371 = vpop.f32.mrf.mxu0
        %v4372 = vadd.f32 0.0, %v4371
        %4373 = vmatmul.f32.gmra.mxu0 %v4187
        %v4374 = vpop.f32.mrf.mxu0
        %v4375 = vadd.f32 0.0, %v4374
        %4376 = vmatmul.f32.gmra.mxu0 %v4190
        %v4377 = vpop.f32.mrf.mxu0
        %v4378 = vadd.f32 0.0, %v4377
        %4379 = vmatmul.f32.gmra.mxu0 %v4193
        %v4380 = vpop.f32.mrf.mxu0
        %v4381 = vadd.f32 0.0, %v4380
        %4382 = vmatmul.f32.gmra.mxu0 %v4196
        %v4383 = vpop.f32.mrf.mxu0
        %v4384 = vadd.f32 0.0, %v4383
        %4385 = vmatmul.f32.gmra.mxu0 %v4199
        %v4386 = vpop.f32.mrf.mxu0
        %v4387 = vadd.f32 0.0, %v4386
        %4388 = vmatmul.f32.gmra.mxu0 %v4202
        %v4389 = vpop.f32.mrf.mxu0
        %v4390 = vadd.f32 0.0, %v4389
        %4391 = vmatmul.f32.gmra.mxu0 %v4205
        %v4392 = vpop.f32.mrf.mxu0
        %v4393 = vadd.f32 0.0, %v4392
        %4394 = vdwg.mxu0
        %4395 = vmatpush.msra.mxu0 0.0
        %4396 = vmatpush.msra.mxu0 0.0
        %4397 = vmatpush.msra.mxu0 0.0
        %4398 = vmatpush.msra.mxu0 0.0
        %4399 = vmatpush.msra.mxu0 0.0
        %4400 = vmatpush.msra.mxu0 0.0
        %4401 = vmatpush.msra.mxu0 0.0
        %4402 = vmatpush.msra.mxu0 0.0
        %4403 = vmatpush.msra.mxu0 %v4175
        %4404 = vmatpush.msra.mxu0 %v4174
        %4405 = vmatpush.msra.mxu0 %v4173
        %4406 = vmatpush.msra.mxu0 %v4172
        %4407 = vmatpush.msra.mxu0 %v4171
        %4408 = vmatpush.msra.mxu0 %v4170
        %4409 = vmatpush.msra.mxu0 %v4169
        %4410 = vmatpush.msra.mxu0 %v4168
        %4411 = vmatmul.f32.gmra.mxu0 %v4178
        %v4412 = vpop.f32.mrf.mxu0
        %v4413 = vadd.f32 0.0, %v4412
        %4414 = vmatmul.f32.gmra.mxu0 %v4181
        %v4415 = vpop.f32.mrf.mxu0
        %v4416 = vadd.f32 0.0, %v4415
        %4417 = vmatmul.f32.gmra.mxu0 %v4184
        %v4418 = vpop.f32.mrf.mxu0
        %v4419 = vadd.f32 0.0, %v4418
        %4420 = vmatmul.f32.gmra.mxu0 %v4187
        %v4421 = vpop.f32.mrf.mxu0
        %v4422 = vadd.f32 0.0, %v4421
        %4423 = vmatmul.f32.gmra.mxu0 %v4190
        %v4424 = vpop.f32.mrf.mxu0
        %v4425 = vadd.f32 0.0, %v4424
        %4426 = vmatmul.f32.gmra.mxu0 %v4193
        %v4427 = vpop.f32.mrf.mxu0
        %v4428 = vadd.f32 0.0, %v4427
        %4429 = vmatmul.f32.gmra.mxu0 %v4196
        %v4430 = vpop.f32.mrf.mxu0
        %v4431 = vadd.f32 0.0, %v4430
        %4432 = vmatmul.f32.gmra.mxu0 %v4199
        %v4433 = vpop.f32.mrf.mxu0
        %v4434 = vadd.f32 0.0, %v4433
        %4435 = vmatmul.f32.gmra.mxu0 %v4202
        %v4436 = vpop.f32.mrf.mxu0
        %v4437 = vadd.f32 0.0, %v4436
        %4438 = vmatmul.f32.gmra.mxu0 %v4205
        %v4439 = vpop.f32.mrf.mxu0
        %v4440 = vadd.f32 0.0, %v4439
        %4441 = vdwg.mxu0
        %v4442 = vld [vmem:[%s14] sm:$0xff]
        %v4443 = vld [vmem:[%s14 + $0x8] sm:$0xff]
        %v4444 = vld [vmem:[%s14 + $0x10] sm:$0xff]
        %v4445 = vld [vmem:[%s14 + $0x18] sm:$0xff]
        %v4446 = vld [vmem:[%s14 + $0x20] sm:$0xff]
        %v4447 = vld [vmem:[%s14 + $0x28] sm:$0xff]
        %v4448 = vld [vmem:[%s14 + $0x30] sm:$0xff]
        %v4449 = vld [vmem:[%s14 + $0x38] sm:$0xff]
        %v4450 = vld [vmem:[%s14 + $0x40] sm:$0xff]
        %v4451 = vld [vmem:[%s14 + $0x48] sm:$0xff]
        %v4452 = vld [vmem:[%s14 + $0x50] sm:$0xff]
        %v4453 = vld [vmem:[%s14 + $0x58] sm:$0xff]
        %v4454 = vld [vmem:[%s14 + $0x60] sm:$0xff]
        %v4455 = vld [vmem:[%s14 + $0x68] sm:$0xff]
        %v4456 = vld [vmem:[%s14 + $0x70] sm:$0xff]
        %v4457 = vld [vmem:[%s14 + $0x78] sm:$0xff]
        %v4458 = vld [vmem:[%s14 + $0x80] sm:$0xff]
        %v4459 = vld [vmem:[%s14 + $0x88] sm:$0xff]
        %v4460 = vld [vmem:[%s14 + $0x90] sm:$0xff]
        %v4461 = vld [vmem:[%s14 + $0x98] sm:$0xff]
        %v4462 = vld [vmem:[%s14 + $0xa0] sm:$0xff]
        %v4463 = vld [vmem:[%s14 + $0xa8] sm:$0xff]
        %v4464 = vld [vmem:[%s14 + $0xb0] sm:$0xff]
        %v4465 = vld [vmem:[%s14 + $0xb8] sm:$0xff]
        %v4466 = vld [vmem:[%s14 + $0xc0] sm:$0xff]
        %v4467 = vld [vmem:[%s14 + $0xc8] sm:$0xff]
        %v4468 = vld [vmem:[%s14 + $0xd0] sm:$0xff]
        %v4469 = vld [vmem:[%s14 + $0xd8] sm:$0xff]
        %v4470 = vld [vmem:[%s14 + $0xe0] sm:$0xff]
        %v4471 = vld [vmem:[%s14 + $0xe8] sm:$0xff]
        %v4472 = vld [vmem:[%s14 + $0xf0] sm:$0xff]
        %v4473 = vld [vmem:[%s14 + $0xf8] sm:$0xff]
        %v4474 = vld [vmem:[%s14 + $0x100] sm:$0xff]
        %v4475 = vld [vmem:[%s14 + $0x108] sm:$0xff]
        %v4476 = vld [vmem:[%s14 + $0x110] sm:$0xff]
        %v4477 = vld [vmem:[%s14 + $0x118] sm:$0xff]
        %v4478 = vld [vmem:[%s14 + $0x120] sm:$0xff]
        %v4479 = vld [vmem:[%s14 + $0x128] sm:$0xff]
        %v4480 = vld [vmem:[%s14 + $0x130] sm:$0xff]
        %v4481 = vld [vmem:[%s14 + $0x138] sm:$0xff]
        %v4482 = vld [vmem:[%s14 + $0x140] sm:$0xff]
        %v4483 = vld [vmem:[%s14 + $0x148] sm:$0xff]
        %v4484 = vld [vmem:[%s14 + $0x150] sm:$0xff]
        %v4485 = vld [vmem:[%s14 + $0x158] sm:$0xff]
        %v4486 = vld [vmem:[%s14 + $0x160] sm:$0xff]
        %v4487 = vld [vmem:[%s14 + $0x168] sm:$0xff]
        %v4488 = vld [vmem:[%s14 + $0x170] sm:$0xff]
        %v4489 = vld [vmem:[%s14 + $0x178] sm:$0xff]
        %v4490 = vld [vmem:[%s14 + $0x180] sm:$0xff]
        %v4491 = vld [vmem:[%s14 + $0x188] sm:$0xff]
        %v4492 = vld [vmem:[%s14 + $0x190] sm:$0xff]
        %v4493 = vld [vmem:[%s14 + $0x198] sm:$0xff]
        %v4494 = vld [vmem:[%s14 + $0x1a0] sm:$0xff]
        %v4495 = vld [vmem:[%s14 + $0x1a8] sm:$0xff]
        %v4496 = vld [vmem:[%s14 + $0x1b0] sm:$0xff]
        %v4497 = vld [vmem:[%s14 + $0x1b8] sm:$0xff]
        %v4498 = vld [vmem:[%s14 + $0x1c0] sm:$0xff]
        %v4499 = vld [vmem:[%s14 + $0x1c8] sm:$0xff]
        %v4500 = vld [vmem:[%s14 + $0x1d0] sm:$0xff]
        %v4501 = vld [vmem:[%s14 + $0x1d8] sm:$0xff]
        %v4502 = vld [vmem:[%s14 + $0x1e0] sm:$0xff]
        %v4503 = vld [vmem:[%s14 + $0x1e8] sm:$0xff]
        %v4504 = vld [vmem:[%s14 + $0x1f0] sm:$0xff]
        %v4505 = vld [vmem:[%s14 + $0x1f8] sm:$0xff]
        %v4506 = vld [vmem:[%s15] sm:$0xff]
        %v4507 = vld [vmem:[%s15 + $0x8] sm:$0xff]
        %v4508 = vld [vmem:[%s15 + $0x10] sm:$0xff]
        %v4509 = vld [vmem:[%s15 + $0x18] sm:$0xff]
        %v4510 = vld [vmem:[%s15 + $0x20] sm:$0xff]
        %v4511 = vld [vmem:[%s15 + $0x28] sm:$0xff]
        %v4512 = vld [vmem:[%s15 + $0x30] sm:$0xff]
        %v4513 = vld [vmem:[%s15 + $0x38] sm:$0xff]
        %v4514 = vld [vmem:[%s15 + $0x40] sm:$0xff]
        %v4515 = vld [vmem:[%s15 + $0x48] sm:$0xff]
        %v4516 = vld [vmem:[%s15 + $0x50] sm:$0xff]
        %v4517 = vld [vmem:[%s15 + $0x58] sm:$0xff]
        %v4518 = vld [vmem:[%s15 + $0x60] sm:$0xff]
        %v4519 = vld [vmem:[%s15 + $0x68] sm:$0xff]
        %v4520 = vld [vmem:[%s15 + $0x70] sm:$0xff]
        %v4521 = vld [vmem:[%s15 + $0x78] sm:$0xff]
        %4523 = vset.pattern.permute.xlu0 0
        %4524 = vperm.xlu0 %4523, %v4506
        %v4525 = vpop.permute.xlu0 %4524
        %4528 = vset.pattern.permute.xlu0 0
        %4529 = vperm.xlu0 %4528, %v4507
        %v4530 = vpop.permute.xlu0 %4529
        %4533 = vset.pattern.permute.xlu0 0
        %4534 = vperm.xlu0 %4533, %v4508
        %v4535 = vpop.permute.xlu0 %4534
        %4538 = vset.pattern.permute.xlu0 0
        %4539 = vperm.xlu0 %4538, %v4509
        %v4540 = vpop.permute.xlu0 %4539
        %4543 = vset.pattern.permute.xlu0 0
        %4544 = vperm.xlu0 %4543, %v4510
        %v4545 = vpop.permute.xlu0 %4544
        %4548 = vset.pattern.permute.xlu0 0
        %4549 = vperm.xlu0 %4548, %v4511
        %v4550 = vpop.permute.xlu0 %4549
        %4553 = vset.pattern.permute.xlu0 0
        %4554 = vperm.xlu0 %4553, %v4512
        %v4555 = vpop.permute.xlu0 %4554
        %4558 = vset.pattern.permute.xlu0 0
        %4559 = vperm.xlu0 %4558, %v4513
        %v4560 = vpop.permute.xlu0 %4559
        %4563 = vset.pattern.permute.xlu0 0
        %4564 = vperm.xlu0 %4563, %v4514
        %v4565 = vpop.permute.xlu0 %4564
        %4568 = vset.pattern.permute.xlu0 0
        %4569 = vperm.xlu0 %4568, %v4515
        %v4570 = vpop.permute.xlu0 %4569
        %4573 = vset.pattern.permute.xlu0 0
        %4574 = vperm.xlu0 %4573, %v4516
        %v4575 = vpop.permute.xlu0 %4574
        %4578 = vset.pattern.permute.xlu0 0
        %4579 = vperm.xlu0 %4578, %v4517
        %v4580 = vpop.permute.xlu0 %4579
        %4583 = vset.pattern.permute.xlu0 0
        %4584 = vperm.xlu0 %4583, %v4518
        %v4585 = vpop.permute.xlu0 %4584
        %4588 = vset.pattern.permute.xlu0 0
        %4589 = vperm.xlu0 %4588, %v4519
        %v4590 = vpop.permute.xlu0 %4589
        %4593 = vset.pattern.permute.xlu0 0
        %4594 = vperm.xlu0 %4593, %v4520
        %v4595 = vpop.permute.xlu0 %4594
        %4598 = vset.pattern.permute.xlu0 0
        %4599 = vperm.xlu0 %4598, %v4521
        %v4600 = vpop.permute.xlu0 %4599
        %vm4602 = vcmask 130048
        %v4604 = vsel %vm4602, %v4445, 0
        %v4607 = vsel %vm4602, %v4449, 0
        %v4610 = vsel %vm4602, %v4453, 0
        %v4613 = vsel %vm4602, %v4457, 0
        %v4616 = vsel %vm4602, %v4461, 0
        %v4619 = vsel %vm4602, %v4465, 0
        %v4622 = vsel %vm4602, %v4469, 0
        %v4625 = vsel %vm4602, %v4473, 0
        %v4628 = vsel %vm4602, %v4477, 0
        %v4631 = vsel %vm4602, %v4481, 0
        %v4634 = vsel %vm4602, %v4485, 0
        %v4637 = vsel %vm4602, %v4489, 0
        %v4640 = vsel %vm4602, %v4493, 0
        %v4643 = vsel %vm4602, %v4497, 0
        %v4646 = vsel %vm4602, %v4501, 0
        %v4649 = vsel %vm4602, %v4505, 0
        %4651 = vmatpush.msra.mxu0 %v4287
        %4652 = vmatpush.msra.mxu0 %v4284
        %4653 = vmatpush.msra.mxu0 %v4281
        %4654 = vmatpush.msra.mxu0 %v4278
        %4655 = vmatpush.msra.mxu0 %v4275
        %4656 = vmatpush.msra.mxu0 %v4272
        %4657 = vmatpush.msra.mxu0 %v4252
        %4658 = vmatpush.msra.mxu0 %v4249
        %4659 = vmatpush.msra.mxu0 %v4246
        %4660 = vmatpush.msra.mxu0 %v4243
        %4661 = vmatpush.msra.mxu0 %v4240
        %4662 = vmatpush.msra.mxu0 %v4237
        %4663 = vmatpush.msra.mxu0 %v4234
        %4664 = vmatpush.msra.mxu0 %v4231
        %4665 = vmatpush.msra.mxu0 %v4228
        %4666 = vmatpush.msra.mxu0 %v4225
        %4667 = vmatmul.f32.gmra.mxu0 %v4442
        %v4668 = vpop.f32.mrf.mxu0
        %v4669 = vadd.f32 %v4525, %v4668
        %4670 = vmatmul.f32.gmra.mxu0 %v4446
        %v4671 = vpop.f32.mrf.mxu0
        %v4672 = vadd.f32 %v4530, %v4671
        %4673 = vmatmul.f32.gmra.mxu0 %v4450
        %v4674 = vpop.f32.mrf.mxu0
        %v4675 = vadd.f32 %v4535, %v4674
        %4676 = vmatmul.f32.gmra.mxu0 %v4454
        %v4677 = vpop.f32.mrf.mxu0
        %v4678 = vadd.f32 %v4540, %v4677
        %4679 = vmatmul.f32.gmra.mxu0 %v4458
        %v4680 = vpop.f32.mrf.mxu0
        %v4681 = vadd.f32 %v4545, %v4680
        %4682 = vmatmul.f32.gmra.mxu0 %v4462
        %v4683 = vpop.f32.mrf.mxu0
        %v4684 = vadd.f32 %v4550, %v4683
        %4685 = vmatmul.f32.gmra.mxu0 %v4466
        %v4686 = vpop.f32.mrf.mxu0
        %v4687 = vadd.f32 %v4555, %v4686
        %4688 = vmatmul.f32.gmra.mxu0 %v4470
        %v4689 = vpop.f32.mrf.mxu0
        %v4690 = vadd.f32 %v4560, %v4689
        %4691 = vmatmul.f32.gmra.mxu0 %v4474
        %v4692 = vpop.f32.mrf.mxu0
        %v4693 = vadd.f32 %v4565, %v4692
        %4694 = vmatmul.f32.gmra.mxu0 %v4478
        %v4695 = vpop.f32.mrf.mxu0
        %v4696 = vadd.f32 %v4570, %v4695
        %4697 = vmatmul.f32.gmra.mxu0 %v4482
        %v4698 = vpop.f32.mrf.mxu0
        %v4699 = vadd.f32 %v4575, %v4698
        %4700 = vmatmul.f32.gmra.mxu0 %v4486
        %v4701 = vpop.f32.mrf.mxu0
        %v4702 = vadd.f32 %v4580, %v4701
        %4703 = vmatmul.f32.gmra.mxu0 %v4490
        %v4704 = vpop.f32.mrf.mxu0
        %v4705 = vadd.f32 %v4585, %v4704
        %4706 = vmatmul.f32.gmra.mxu0 %v4494
        %v4707 = vpop.f32.mrf.mxu0
        %v4708 = vadd.f32 %v4590, %v4707
        %4709 = vmatmul.f32.gmra.mxu0 %v4498
        %v4710 = vpop.f32.mrf.mxu0
        %v4711 = vadd.f32 %v4595, %v4710
        %4712 = vmatmul.f32.gmra.mxu0 %v4502
        %v4713 = vpop.f32.mrf.mxu0
        %v4714 = vadd.f32 %v4600, %v4713
        %4715 = vdwg.mxu0
        %4716 = vmatpush.msra.mxu0 %v4369
        %4717 = vmatpush.msra.mxu0 %v4366
        %4718 = vmatpush.msra.mxu0 %v4346
        %4719 = vmatpush.msra.mxu0 %v4343
        %4720 = vmatpush.msra.mxu0 %v4340
        %4721 = vmatpush.msra.mxu0 %v4337
        %4722 = vmatpush.msra.mxu0 %v4334
        %4723 = vmatpush.msra.mxu0 %v4331
        %4724 = vmatpush.msra.mxu0 %v4328
        %4725 = vmatpush.msra.mxu0 %v4325
        %4726 = vmatpush.msra.mxu0 %v4322
        %4727 = vmatpush.msra.mxu0 %v4319
        %4728 = vmatpush.msra.mxu0 %v4299
        %4729 = vmatpush.msra.mxu0 %v4296
        %4730 = vmatpush.msra.mxu0 %v4293
        %4731 = vmatpush.msra.mxu0 %v4290
        %4732 = vmatmul.f32.gmra.mxu0 %v4443
        %v4733 = vpop.f32.mrf.mxu0
        %v4734 = vadd.f32 %v4669, %v4733
        %4735 = vmatmul.f32.gmra.mxu0 %v4447
        %v4736 = vpop.f32.mrf.mxu0
        %v4737 = vadd.f32 %v4672, %v4736
        %4738 = vmatmul.f32.gmra.mxu0 %v4451
        %v4739 = vpop.f32.mrf.mxu0
        %v4740 = vadd.f32 %v4675, %v4739
        %4741 = vmatmul.f32.gmra.mxu0 %v4455
        %v4742 = vpop.f32.mrf.mxu0
        %v4743 = vadd.f32 %v4678, %v4742
        %4744 = vmatmul.f32.gmra.mxu0 %v4459
        %v4745 = vpop.f32.mrf.mxu0
        %v4746 = vadd.f32 %v4681, %v4745
        %4747 = vmatmul.f32.gmra.mxu0 %v4463
        %v4748 = vpop.f32.mrf.mxu0
        %v4749 = vadd.f32 %v4684, %v4748
        %4750 = vmatmul.f32.gmra.mxu0 %v4467
        %v4751 = vpop.f32.mrf.mxu0
        %v4752 = vadd.f32 %v4687, %v4751
        %4753 = vmatmul.f32.gmra.mxu0 %v4471
        %v4754 = vpop.f32.mrf.mxu0
        %v4755 = vadd.f32 %v4690, %v4754
        %4756 = vmatmul.f32.gmra.mxu0 %v4475
        %v4757 = vpop.f32.mrf.mxu0
        %v4758 = vadd.f32 %v4693, %v4757
        %4759 = vmatmul.f32.gmra.mxu0 %v4479
        %v4760 = vpop.f32.mrf.mxu0
        %v4761 = vadd.f32 %v4696, %v4760
        %4762 = vmatmul.f32.gmra.mxu0 %v4483
        %v4763 = vpop.f32.mrf.mxu0
        %v4764 = vadd.f32 %v4699, %v4763
        %4765 = vmatmul.f32.gmra.mxu0 %v4487
        %v4766 = vpop.f32.mrf.mxu0
        %v4767 = vadd.f32 %v4702, %v4766
        %4768 = vmatmul.f32.gmra.mxu0 %v4491
        %v4769 = vpop.f32.mrf.mxu0
        %v4770 = vadd.f32 %v4705, %v4769
        %4771 = vmatmul.f32.gmra.mxu0 %v4495
        %v4772 = vpop.f32.mrf.mxu0
        %v4773 = vadd.f32 %v4708, %v4772
        %4774 = vmatmul.f32.gmra.mxu0 %v4499
        %v4775 = vpop.f32.mrf.mxu0
        %v4776 = vadd.f32 %v4711, %v4775
        %4777 = vmatmul.f32.gmra.mxu0 %v4503
        %v4778 = vpop.f32.mrf.mxu0
        %v4779 = vadd.f32 %v4714, %v4778
        %4780 = vdwg.mxu0
        %4781 = vmatpush.msra.mxu0 %v4434
        %4782 = vmatpush.msra.mxu0 %v4431
        %4783 = vmatpush.msra.mxu0 %v4428
        %4784 = vmatpush.msra.mxu0 %v4425
        %4785 = vmatpush.msra.mxu0 %v4422
        %4786 = vmatpush.msra.mxu0 %v4419
        %4787 = vmatpush.msra.mxu0 %v4416
        %4788 = vmatpush.msra.mxu0 %v4413
        %4789 = vmatpush.msra.mxu0 %v4393
        %4790 = vmatpush.msra.mxu0 %v4390
        %4791 = vmatpush.msra.mxu0 %v4387
        %4792 = vmatpush.msra.mxu0 %v4384
        %4793 = vmatpush.msra.mxu0 %v4381
        %4794 = vmatpush.msra.mxu0 %v4378
        %4795 = vmatpush.msra.mxu0 %v4375
        %4796 = vmatpush.msra.mxu0 %v4372
        %4797 = vmatmul.f32.gmra.mxu0 %v4444
        %v4798 = vpop.f32.mrf.mxu0
        %v4799 = vadd.f32 %v4734, %v4798
        %4800 = vmatmul.f32.gmra.mxu0 %v4448
        %v4801 = vpop.f32.mrf.mxu0
        %v4802 = vadd.f32 %v4737, %v4801
        %4803 = vmatmul.f32.gmra.mxu0 %v4452
        %v4804 = vpop.f32.mrf.mxu0
        %v4805 = vadd.f32 %v4740, %v4804
        %4806 = vmatmul.f32.gmra.mxu0 %v4456
        %v4807 = vpop.f32.mrf.mxu0
        %v4808 = vadd.f32 %v4743, %v4807
        %4809 = vmatmul.f32.gmra.mxu0 %v4460
        %v4810 = vpop.f32.mrf.mxu0
        %v4811 = vadd.f32 %v4746, %v4810
        %4812 = vmatmul.f32.gmra.mxu0 %v4464
        %v4813 = vpop.f32.mrf.mxu0
        %v4814 = vadd.f32 %v4749, %v4813
        %4815 = vmatmul.f32.gmra.mxu0 %v4468
        %v4816 = vpop.f32.mrf.mxu0
        %v4817 = vadd.f32 %v4752, %v4816
        %4818 = vmatmul.f32.gmra.mxu0 %v4472
        %v4819 = vpop.f32.mrf.mxu0
        %v4820 = vadd.f32 %v4755, %v4819
        %4821 = vmatmul.f32.gmra.mxu0 %v4476
        %v4822 = vpop.f32.mrf.mxu0
        %v4823 = vadd.f32 %v4758, %v4822
        %4824 = vmatmul.f32.gmra.mxu0 %v4480
        %v4825 = vpop.f32.mrf.mxu0
        %v4826 = vadd.f32 %v4761, %v4825
        %4827 = vmatmul.f32.gmra.mxu0 %v4484
        %v4828 = vpop.f32.mrf.mxu0
        %v4829 = vadd.f32 %v4764, %v4828
        %4830 = vmatmul.f32.gmra.mxu0 %v4488
        %v4831 = vpop.f32.mrf.mxu0
        %v4832 = vadd.f32 %v4767, %v4831
        %4833 = vmatmul.f32.gmra.mxu0 %v4492
        %v4834 = vpop.f32.mrf.mxu0
        %v4835 = vadd.f32 %v4770, %v4834
        %4836 = vmatmul.f32.gmra.mxu0 %v4496
        %v4837 = vpop.f32.mrf.mxu0
        %v4838 = vadd.f32 %v4773, %v4837
        %4839 = vmatmul.f32.gmra.mxu0 %v4500
        %v4840 = vpop.f32.mrf.mxu0
        %v4841 = vadd.f32 %v4776, %v4840
        %4842 = vmatmul.f32.gmra.mxu0 %v4504
        %v4843 = vpop.f32.mrf.mxu0
        %v4844 = vadd.f32 %v4779, %v4843
        %4845 = vdwg.mxu0
        %4846 = vmatpush.msra.mxu0 0.0
        %4847 = vmatpush.msra.mxu0 0.0
        %4848 = vmatpush.msra.mxu0 0.0
        %4849 = vmatpush.msra.mxu0 0.0
        %4850 = vmatpush.msra.mxu0 0.0
        %4851 = vmatpush.msra.mxu0 0.0
        %4852 = vmatpush.msra.mxu0 0.0
        %4853 = vmatpush.msra.mxu0 0.0
        %4854 = vmatpush.msra.mxu0 0.0
        %4855 = vmatpush.msra.mxu0 0.0
        %4856 = vmatpush.msra.mxu0 0.0
        %4857 = vmatpush.msra.mxu0 0.0
        %4858 = vmatpush.msra.mxu0 0.0
        %4859 = vmatpush.msra.mxu0 0.0
        %4860 = vmatpush.msra.mxu0 %v4440
        %4861 = vmatpush.msra.mxu0 %v4437
        %4862 = vmatmul.f32.gmra.mxu0 %v4604
        %v4863 = vpop.f32.mrf.mxu0
        %v4864 = vadd.f32 %v4799, %v4863
        %4865 = vmatmul.f32.gmra.mxu0 %v4607
        %v4866 = vpop.f32.mrf.mxu0
        %v4867 = vadd.f32 %v4802, %v4866
        %4868 = vmatmul.f32.gmra.mxu0 %v4610
        %v4869 = vpop.f32.mrf.mxu0
        %v4870 = vadd.f32 %v4805, %v4869
        %4871 = vmatmul.f32.gmra.mxu0 %v4613
        %v4872 = vpop.f32.mrf.mxu0
        %v4873 = vadd.f32 %v4808, %v4872
        %4874 = vmatmul.f32.gmra.mxu0 %v4616
        %v4875 = vpop.f32.mrf.mxu0
        %v4876 = vadd.f32 %v4811, %v4875
        %4877 = vmatmul.f32.gmra.mxu0 %v4619
        %v4878 = vpop.f32.mrf.mxu0
        %v4879 = vadd.f32 %v4814, %v4878
        %4880 = vmatmul.f32.gmra.mxu0 %v4622
        %v4881 = vpop.f32.mrf.mxu0
        %v4882 = vadd.f32 %v4817, %v4881
        %4883 = vmatmul.f32.gmra.mxu0 %v4625
        %v4884 = vpop.f32.mrf.mxu0
        %v4885 = vadd.f32 %v4820, %v4884
        %4886 = vmatmul.f32.gmra.mxu0 %v4628
        %v4887 = vpop.f32.mrf.mxu0
        %v4888 = vadd.f32 %v4823, %v4887
        %4889 = vmatmul.f32.gmra.mxu0 %v4631
        %v4890 = vpop.f32.mrf.mxu0
        %v4891 = vadd.f32 %v4826, %v4890
        %4892 = vmatmul.f32.gmra.mxu0 %v4634
        %v4893 = vpop.f32.mrf.mxu0
        %v4894 = vadd.f32 %v4829, %v4893
        %4895 = vmatmul.f32.gmra.mxu0 %v4637
        %v4896 = vpop.f32.mrf.mxu0
        %v4897 = vadd.f32 %v4832, %v4896
        %4898 = vmatmul.f32.gmra.mxu0 %v4640
        %v4899 = vpop.f32.mrf.mxu0
        %v4900 = vadd.f32 %v4835, %v4899
        %4901 = vmatmul.f32.gmra.mxu0 %v4643
        %v4902 = vpop.f32.mrf.mxu0
        %v4903 = vadd.f32 %v4838, %v4902
        %4904 = vmatmul.f32.gmra.mxu0 %v4646
        %v4905 = vpop.f32.mrf.mxu0
        %v4906 = vadd.f32 %v4841, %v4905
        %4907 = vmatmul.f32.gmra.mxu0 %v4649
        %v4908 = vpop.f32.mrf.mxu0
        %v4909 = vadd.f32 %v4844, %v4908
        %4910 = vdwg.mxu0
        %v4911 = vmax.f32 %v4864, 0.0
        %v4912 = vmax.f32 %v4867, 0.0
        %v4913 = vmax.f32 %v4870, 0.0
        %v4914 = vmax.f32 %v4873, 0.0
        %v4915 = vmax.f32 %v4876, 0.0
        %v4916 = vmax.f32 %v4879, 0.0
        %v4917 = vmax.f32 %v4882, 0.0
        %v4918 = vmax.f32 %v4885, 0.0
        %v4919 = vmax.f32 %v4888, 0.0
        %v4920 = vmax.f32 %v4891, 0.0
        %v4921 = vmax.f32 %v4894, 0.0
        %v4922 = vmax.f32 %v4897, 0.0
        %v4923 = vmax.f32 %v4900, 0.0
        %v4924 = vmax.f32 %v4903, 0.0
        %v4925 = vmax.f32 %v4906, 0.0
        %v4926 = vmax.f32 %v4909, 0.0
        %v4927 = vld [vmem:[%s16] sm:$0xff]
        %v4928 = vld [vmem:[%s16 + $0x8] sm:$0xff]
        %v4929 = vld [vmem:[%s16 + $0x10] sm:$0xff]
        %v4930 = vld [vmem:[%s16 + $0x18] sm:$0xff]
        %v4931 = vld [vmem:[%s16 + $0x20] sm:$0xff]
        %v4932 = vld [vmem:[%s16 + $0x28] sm:$0xff]
        %v4933 = vld [vmem:[%s16 + $0x30] sm:$0xff]
        %v4934 = vld [vmem:[%s16 + $0x38] sm:$0xff]
        %v4935 = vld [vmem:[%s16 + $0x40] sm:$0xff]
        %v4936 = vld [vmem:[%s16 + $0x48] sm:$0xff]
        %v4937 = vld [vmem:[%s16 + $0x50] sm:$0xff]
        %v4938 = vld [vmem:[%s16 + $0x58] sm:$0xff]
        %v4939 = vld [vmem:[%s16 + $0x60] sm:$0xff]
        %v4940 = vld [vmem:[%s16 + $0x68] sm:$0xff]
        %v4941 = vld [vmem:[%s16 + $0x70] sm:$0xff]
        %v4942 = vld [vmem:[%s16 + $0x78] sm:$0xff]
        %v4943 = vld [vmem:[%s17] sm:$0xff]
        %v4944 = vld [vmem:[%s17 + $0x8] sm:$0xff]
        %v4945 = vld [vmem:[%s17 + $0x10] sm:$0xff]
        %v4946 = vld [vmem:[%s17 + $0x18] sm:$0xff]
        %v4947 = vld [vmem:[%s17 + $0x20] sm:$0xff]
        %v4948 = vld [vmem:[%s17 + $0x28] sm:$0xff]
        %v4949 = vld [vmem:[%s17 + $0x30] sm:$0xff]
        %v4950 = vld [vmem:[%s17 + $0x38] sm:$0xff]
        %v4951 = vld [vmem:[%s17 + $0x40] sm:$0xff]
        %v4952 = vld [vmem:[%s17 + $0x48] sm:$0xff]
        %v4953 = vld [vmem:[%s17 + $0x50] sm:$0xff]
        %v4954 = vld [vmem:[%s17 + $0x58] sm:$0xff]
        %v4955 = vld [vmem:[%s17 + $0x60] sm:$0xff]
        %v4956 = vld [vmem:[%s17 + $0x68] sm:$0xff]
        %v4957 = vld [vmem:[%s17 + $0x70] sm:$0xff]
        %v4958 = vld [vmem:[%s17 + $0x78] sm:$0xff]
        %4960 = vset.pattern.permute.xlu0 0
        %4961 = vperm.xlu0 %4960, %v4943
        %v4962 = vpop.permute.xlu0 %4961
        %4965 = vset.pattern.permute.xlu0 0
        %4966 = vperm.xlu0 %4965, %v4944
        %v4967 = vpop.permute.xlu0 %4966
        %4970 = vset.pattern.permute.xlu0 0
        %4971 = vperm.xlu0 %4970, %v4945
        %v4972 = vpop.permute.xlu0 %4971
        %4975 = vset.pattern.permute.xlu0 0
        %4976 = vperm.xlu0 %4975, %v4946
        %v4977 = vpop.permute.xlu0 %4976
        %4980 = vset.pattern.permute.xlu0 0
        %4981 = vperm.xlu0 %4980, %v4947
        %v4982 = vpop.permute.xlu0 %4981
        %4985 = vset.pattern.permute.xlu0 0
        %4986 = vperm.xlu0 %4985, %v4948
        %v4987 = vpop.permute.xlu0 %4986
        %4990 = vset.pattern.permute.xlu0 0
        %4991 = vperm.xlu0 %4990, %v4949
        %v4992 = vpop.permute.xlu0 %4991
        %4995 = vset.pattern.permute.xlu0 0
        %4996 = vperm.xlu0 %4995, %v4950
        %v4997 = vpop.permute.xlu0 %4996
        %5000 = vset.pattern.permute.xlu0 0
        %5001 = vperm.xlu0 %5000, %v4951
        %v5002 = vpop.permute.xlu0 %5001
        %5005 = vset.pattern.permute.xlu0 0
        %5006 = vperm.xlu0 %5005, %v4952
        %v5007 = vpop.permute.xlu0 %5006
        %5010 = vset.pattern.permute.xlu0 0
        %5011 = vperm.xlu0 %5010, %v4953
        %v5012 = vpop.permute.xlu0 %5011
        %5015 = vset.pattern.permute.xlu0 0
        %5016 = vperm.xlu0 %5015, %v4954
        %v5017 = vpop.permute.xlu0 %5016
        %5020 = vset.pattern.permute.xlu0 0
        %5021 = vperm.xlu0 %5020, %v4955
        %v5022 = vpop.permute.xlu0 %5021
        %5025 = vset.pattern.permute.xlu0 0
        %5026 = vperm.xlu0 %5025, %v4956
        %v5027 = vpop.permute.xlu0 %5026
        %5030 = vset.pattern.permute.xlu0 0
        %5031 = vperm.xlu0 %5030, %v4957
        %v5032 = vpop.permute.xlu0 %5031
        %5035 = vset.pattern.permute.xlu0 0
        %5036 = vperm.xlu0 %5035, %v4958
        %v5037 = vpop.permute.xlu0 %5036
        %5039 = vmatpush.msra.mxu0 %v4926
        %5040 = vmatpush.msra.mxu0 %v4925
        %5041 = vmatpush.msra.mxu0 %v4924
        %5042 = vmatpush.msra.mxu0 %v4923
        %5043 = vmatpush.msra.mxu0 %v4922
        %5044 = vmatpush.msra.mxu0 %v4921
        %5045 = vmatpush.msra.mxu0 %v4920
        %5046 = vmatpush.msra.mxu0 %v4919
        %5047 = vmatpush.msra.mxu0 %v4918
        %5048 = vmatpush.msra.mxu0 %v4917
        %5049 = vmatpush.msra.mxu0 %v4916
        %5050 = vmatpush.msra.mxu0 %v4915
        %5051 = vmatpush.msra.mxu0 %v4914
        %5052 = vmatpush.msra.mxu0 %v4913
        %5053 = vmatpush.msra.mxu0 %v4912
        %5054 = vmatpush.msra.mxu0 %v4911
        %5055 = vmatmul.f32.gmra.mxu0 %v4927
        %v5056 = vpop.f32.mrf.mxu0
        %v5057 = vadd.f32 %v4962, %v5056
        %5058 = vmatmul.f32.gmra.mxu0 %v4928
        %v5059 = vpop.f32.mrf.mxu0
        %v5060 = vadd.f32 %v4967, %v5059
        %5061 = vmatmul.f32.gmra.mxu0 %v4929
        %v5062 = vpop.f32.mrf.mxu0
        %v5063 = vadd.f32 %v4972, %v5062
        %5064 = vmatmul.f32.gmra.mxu0 %v4930
        %v5065 = vpop.f32.mrf.mxu0
        %v5066 = vadd.f32 %v4977, %v5065
        %5067 = vmatmul.f32.gmra.mxu0 %v4931
        %v5068 = vpop.f32.mrf.mxu0
        %v5069 = vadd.f32 %v4982, %v5068
        %5070 = vmatmul.f32.gmra.mxu0 %v4932
        %v5071 = vpop.f32.mrf.mxu0
        %v5072 = vadd.f32 %v4987, %v5071
        %5073 = vmatmul.f32.gmra.mxu0 %v4933
        %v5074 = vpop.f32.mrf.mxu0
        %v5075 = vadd.f32 %v4992, %v5074
        %5076 = vmatmul.f32.gmra.mxu0 %v4934
        %v5077 = vpop.f32.mrf.mxu0
        %v5078 = vadd.f32 %v4997, %v5077
        %5079 = vmatmul.f32.gmra.mxu0 %v4935
        %v5080 = vpop.f32.mrf.mxu0
        %v5081 = vadd.f32 %v5002, %v5080
        %5082 = vmatmul.f32.gmra.mxu0 %v4936
        %v5083 = vpop.f32.mrf.mxu0
        %v5084 = vadd.f32 %v5007, %v5083
        %5085 = vmatmul.f32.gmra.mxu0 %v4937
        %v5086 = vpop.f32.mrf.mxu0
        %v5087 = vadd.f32 %v5012, %v5086
        %5088 = vmatmul.f32.gmra.mxu0 %v4938
        %v5089 = vpop.f32.mrf.mxu0
        %v5090 = vadd.f32 %v5017, %v5089
        %5091 = vmatmul.f32.gmra.mxu0 %v4939
        %v5092 = vpop.f32.mrf.mxu0
        %v5093 = vadd.f32 %v5022, %v5092
        %5094 = vmatmul.f32.gmra.mxu0 %v4940
        %v5095 = vpop.f32.mrf.mxu0
        %v5096 = vadd.f32 %v5027, %v5095
        %5097 = vmatmul.f32.gmra.mxu0 %v4941
        %v5098 = vpop.f32.mrf.mxu0
        %v5099 = vadd.f32 %v5032, %v5098
        %5100 = vmatmul.f32.gmra.mxu0 %v4942
        %v5101 = vpop.f32.mrf.mxu0
        %v5102 = vadd.f32 %v5037, %v5101
        %5103 = vdwg.mxu0
        %v5104 = vmax.f32 %v5057, 0.0
        %v5105 = vmax.f32 %v5060, 0.0
        %v5106 = vmax.f32 %v5063, 0.0
        %v5107 = vmax.f32 %v5066, 0.0
        %v5108 = vmax.f32 %v5069, 0.0
        %v5109 = vmax.f32 %v5072, 0.0
        %v5110 = vmax.f32 %v5075, 0.0
        %v5111 = vmax.f32 %v5078, 0.0
        %v5112 = vmax.f32 %v5081, 0.0
        %v5113 = vmax.f32 %v5084, 0.0
        %v5114 = vmax.f32 %v5087, 0.0
        %v5115 = vmax.f32 %v5090, 0.0
        %v5116 = vmax.f32 %v5093, 0.0
        %v5117 = vmax.f32 %v5096, 0.0
        %v5118 = vmax.f32 %v5099, 0.0
        %v5119 = vmax.f32 %v5102, 0.0
        %v5120 = vld [vmem:[%s18] sm:$0xff]
        %v5121 = vld [vmem:[%s18 + $0x8] sm:$0xff]
        %v5122 = vld [vmem:[%s18 + $0x10] sm:$0xff]
        %v5123 = vld [vmem:[%s18 + $0x18] sm:$0xff]
        %v5124 = vld [vmem:[%s18 + $0x20] sm:$0xff]
        %v5125 = vld [vmem:[%s18 + $0x28] sm:$0xff]
        %v5126 = vld [vmem:[%s18 + $0x30] sm:$0xff]
        %v5127 = vld [vmem:[%s18 + $0x38] sm:$0xff]
        %v5128 = vld [vmem:[%s18 + $0x40] sm:$0xff]
        %v5129 = vld [vmem:[%s18 + $0x48] sm:$0xff]
        %v5130 = vld [vmem:[%s18 + $0x50] sm:$0xff]
        %v5131 = vld [vmem:[%s18 + $0x58] sm:$0xff]
        %v5132 = vld [vmem:[%s18 + $0x60] sm:$0xff]
        %v5133 = vld [vmem:[%s18 + $0x68] sm:$0xff]
        %v5134 = vld [vmem:[%s18 + $0x70] sm:$0xff]
        %v5135 = vld [vmem:[%s18 + $0x78] sm:$0xff]
        %v5136 = vld [vmem:[%s19] sm:$0xff]
        %v5137 = vld [vmem:[%s19 + $0x8] sm:$0xff]
        %v5138 = vld [vmem:[%s19 + $0x10] sm:$0xff]
        %v5139 = vld [vmem:[%s19 + $0x18] sm:$0xff]
        %v5140 = vld [vmem:[%s19 + $0x20] sm:$0xff]
        %v5141 = vld [vmem:[%s19 + $0x28] sm:$0xff]
        %v5142 = vld [vmem:[%s19 + $0x30] sm:$0xff]
        %v5143 = vld [vmem:[%s19 + $0x38] sm:$0xff]
        %v5144 = vld [vmem:[%s19 + $0x40] sm:$0xff]
        %v5145 = vld [vmem:[%s19 + $0x48] sm:$0xff]
        %v5146 = vld [vmem:[%s19 + $0x50] sm:$0xff]
        %v5147 = vld [vmem:[%s19 + $0x58] sm:$0xff]
        %v5148 = vld [vmem:[%s19 + $0x60] sm:$0xff]
        %v5149 = vld [vmem:[%s19 + $0x68] sm:$0xff]
        %v5150 = vld [vmem:[%s19 + $0x70] sm:$0xff]
        %v5151 = vld [vmem:[%s19 + $0x78] sm:$0xff]
        %5153 = vset.pattern.permute.xlu0 0
        %5154 = vperm.xlu0 %5153, %v5136
        %v5155 = vpop.permute.xlu0 %5154
        %5158 = vset.pattern.permute.xlu0 0
        %5159 = vperm.xlu0 %5158, %v5137
        %v5160 = vpop.permute.xlu0 %5159
        %5163 = vset.pattern.permute.xlu0 0
        %5164 = vperm.xlu0 %5163, %v5138
        %v5165 = vpop.permute.xlu0 %5164
        %5168 = vset.pattern.permute.xlu0 0
        %5169 = vperm.xlu0 %5168, %v5139
        %v5170 = vpop.permute.xlu0 %5169
        %5173 = vset.pattern.permute.xlu0 0
        %5174 = vperm.xlu0 %5173, %v5140
        %v5175 = vpop.permute.xlu0 %5174
        %5178 = vset.pattern.permute.xlu0 0
        %5179 = vperm.xlu0 %5178, %v5141
        %v5180 = vpop.permute.xlu0 %5179
        %5183 = vset.pattern.permute.xlu0 0
        %5184 = vperm.xlu0 %5183, %v5142
        %v5185 = vpop.permute.xlu0 %5184
        %5188 = vset.pattern.permute.xlu0 0
        %5189 = vperm.xlu0 %5188, %v5143
        %v5190 = vpop.permute.xlu0 %5189
        %5193 = vset.pattern.permute.xlu0 0
        %5194 = vperm.xlu0 %5193, %v5144
        %v5195 = vpop.permute.xlu0 %5194
        %5198 = vset.pattern.permute.xlu0 0
        %5199 = vperm.xlu0 %5198, %v5145
        %v5200 = vpop.permute.xlu0 %5199
        %5203 = vset.pattern.permute.xlu0 0
        %5204 = vperm.xlu0 %5203, %v5146
        %v5205 = vpop.permute.xlu0 %5204
        %5208 = vset.pattern.permute.xlu0 0
        %5209 = vperm.xlu0 %5208, %v5147
        %v5210 = vpop.permute.xlu0 %5209
        %5213 = vset.pattern.permute.xlu0 0
        %5214 = vperm.xlu0 %5213, %v5148
        %v5215 = vpop.permute.xlu0 %5214
        %5218 = vset.pattern.permute.xlu0 0
        %5219 = vperm.xlu0 %5218, %v5149
        %v5220 = vpop.permute.xlu0 %5219
        %5223 = vset.pattern.permute.xlu0 0
        %5224 = vperm.xlu0 %5223, %v5150
        %v5225 = vpop.permute.xlu0 %5224
        %5228 = vset.pattern.permute.xlu0 0
        %5229 = vperm.xlu0 %5228, %v5151
        %v5230 = vpop.permute.xlu0 %5229
        %5232 = vmatpush.msra.mxu0 %v5119
        %5233 = vmatpush.msra.mxu0 %v5118
        %5234 = vmatpush.msra.mxu0 %v5117
        %5235 = vmatpush.msra.mxu0 %v5116
        %5236 = vmatpush.msra.mxu0 %v5115
        %5237 = vmatpush.msra.mxu0 %v5114
        %5238 = vmatpush.msra.mxu0 %v5113
        %5239 = vmatpush.msra.mxu0 %v5112
        %5240 = vmatpush.msra.mxu0 %v5111
        %5241 = vmatpush.msra.mxu0 %v5110
        %5242 = vmatpush.msra.mxu0 %v5109
        %5243 = vmatpush.msra.mxu0 %v5108
        %5244 = vmatpush.msra.mxu0 %v5107
        %5245 = vmatpush.msra.mxu0 %v5106
        %5246 = vmatpush.msra.mxu0 %v5105
        %5247 = vmatpush.msra.mxu0 %v5104
        %5248 = vmatmul.f32.gmra.mxu0 %v5120
        %v5249 = vpop.f32.mrf.mxu0
        %v5250 = vadd.f32 %v5155, %v5249
        %5251 = vmatmul.f32.gmra.mxu0 %v5121
        %v5252 = vpop.f32.mrf.mxu0
        %v5253 = vadd.f32 %v5160, %v5252
        %5254 = vmatmul.f32.gmra.mxu0 %v5122
        %v5255 = vpop.f32.mrf.mxu0
        %v5256 = vadd.f32 %v5165, %v5255
        %5257 = vmatmul.f32.gmra.mxu0 %v5123
        %v5258 = vpop.f32.mrf.mxu0
        %v5259 = vadd.f32 %v5170, %v5258
        %5260 = vmatmul.f32.gmra.mxu0 %v5124
        %v5261 = vpop.f32.mrf.mxu0
        %v5262 = vadd.f32 %v5175, %v5261
        %5263 = vmatmul.f32.gmra.mxu0 %v5125
        %v5264 = vpop.f32.mrf.mxu0
        %v5265 = vadd.f32 %v5180, %v5264
        %5266 = vmatmul.f32.gmra.mxu0 %v5126
        %v5267 = vpop.f32.mrf.mxu0
        %v5268 = vadd.f32 %v5185, %v5267
        %5269 = vmatmul.f32.gmra.mxu0 %v5127
        %v5270 = vpop.f32.mrf.mxu0
        %v5271 = vadd.f32 %v5190, %v5270
        %5272 = vmatmul.f32.gmra.mxu0 %v5128
        %v5273 = vpop.f32.mrf.mxu0
        %v5274 = vadd.f32 %v5195, %v5273
        %5275 = vmatmul.f32.gmra.mxu0 %v5129
        %v5276 = vpop.f32.mrf.mxu0
        %v5277 = vadd.f32 %v5200, %v5276
        %5278 = vmatmul.f32.gmra.mxu0 %v5130
        %v5279 = vpop.f32.mrf.mxu0
        %v5280 = vadd.f32 %v5205, %v5279
        %5281 = vmatmul.f32.gmra.mxu0 %v5131
        %v5282 = vpop.f32.mrf.mxu0
        %v5283 = vadd.f32 %v5210, %v5282
        %5284 = vmatmul.f32.gmra.mxu0 %v5132
        %v5285 = vpop.f32.mrf.mxu0
        %v5286 = vadd.f32 %v5215, %v5285
        %5287 = vmatmul.f32.gmra.mxu0 %v5133
        %v5288 = vpop.f32.mrf.mxu0
        %v5289 = vadd.f32 %v5220, %v5288
        %5290 = vmatmul.f32.gmra.mxu0 %v5134
        %v5291 = vpop.f32.mrf.mxu0
        %v5292 = vadd.f32 %v5225, %v5291
        %5293 = vmatmul.f32.gmra.mxu0 %v5135
        %v5294 = vpop.f32.mrf.mxu0
        %v5295 = vadd.f32 %v5230, %v5294
        %5296 = vdwg.mxu0
        %vm5297 = vcmask 64512
        %5298 = vst.msk [vmem:[%s696] sm:$0xff] %vm5297, %v5250
        %5299 = vst.msk [vmem:[%s696 + $0x8] sm:$0xff] %vm5297, %v5253
        %5300 = vst.msk [vmem:[%s696 + $0x10] sm:$0xff] %vm5297, %v5256
        %5301 = vst.msk [vmem:[%s696 + $0x18] sm:$0xff] %vm5297, %v5259
        %5302 = vst.msk [vmem:[%s696 + $0x20] sm:$0xff] %vm5297, %v5262
        %5303 = vst.msk [vmem:[%s696 + $0x28] sm:$0xff] %vm5297, %v5265
        %5304 = vst.msk [vmem:[%s696 + $0x30] sm:$0xff] %vm5297, %v5268
        %5305 = vst.msk [vmem:[%s696 + $0x38] sm:$0xff] %vm5297, %v5271
        %5306 = vst.msk [vmem:[%s696 + $0x40] sm:$0xff] %vm5297, %v5274
        %5307 = vst.msk [vmem:[%s696 + $0x48] sm:$0xff] %vm5297, %v5277
        %5308 = vst.msk [vmem:[%s696 + $0x50] sm:$0xff] %vm5297, %v5280
        %5309 = vst.msk [vmem:[%s696 + $0x58] sm:$0xff] %vm5297, %v5283
        %5310 = vst.msk [vmem:[%s696 + $0x60] sm:$0xff] %vm5297, %v5286
        %5311 = vst.msk [vmem:[%s696 + $0x68] sm:$0xff] %vm5297, %v5289
        %5312 = vst.msk [vmem:[%s696 + $0x70] sm:$0xff] %vm5297, %v5292
        %5313 = vst.msk [vmem:[%s696 + $0x78] sm:$0xff] %vm5297, %v5295
        %p5314 = scmp.lt.s32.totalorder %s31, 1
        %s5315 = scalar_select %p5314, %s31, 1
        %s5316 = smul.addr %s5315, 16
        %s5317 = smul.addr %s5316, 8
        %s5318 = scalar_lea.vmem %s20, %s5317
        // Predicated region
        $region124: #{net_forward.1} parent=118 // pred_check
          %p5319 = pneg %p474
        $region125: #{net_forward.1} parent=118 // pred_check_branch
          %5321 = sbr.rel (%p5319) target = $region127
        $region126: #{net_forward.1} parent=118 // pred_region
          _
        $region127: #{net_forward.1} parent=118 // pred_fallthru
          _
      $region119: #{net_forward.1} parent=5 // pred_fallthru
        _
      %p5322 = scmp.le.s32.totalorder 2, %s26
      // Predicated region
      $region128: #{net_forward.1} parent=5 // pred_check
        %p5323 = pneg %p5322
      $region129: #{net_forward.1} parent=5 // pred_check_branch
        %5325 = sbr.rel (%p5323) target = $region131
      $region130: #{net_forward.1} parent=5 // pred_region
        %s5326 = ssub.s32 %s26, 2
        // Predicated region
        $region132: #{net_forward.1} parent=130 // pred_check
          %p5327 = pneg %p480
        $region133: #{net_forward.1} parent=130 // pred_check_branch
          %5329 = sbr.rel (%p5327) target = $region135
        $region134: #{net_forward.1} parent=130 // pred_region
          %p5330 = scmp.lt.s32.totalorder %s32, 1
          %s5331 = scalar_select %p5330, %s32, 1
          %s5332 = smul.addr %s5331, 16
          %s5333 = smul.addr %s5332, 8
          %s5334 = scalar_lea.vmem %s20, %s5333
        $region135: #{net_forward.1} parent=130 // pred_fallthru
          _
      $region131: #{net_forward.1} parent=5 // pred_fallthru
        _
    $region6: #{net_forward.1} parent=1 // loop_footer
      %s30 = sadd.s32 1, %s26
    $region7: #{net_forward.1} parent=1 // loop_footer_branch
      %25 = sbr.rel target = $region3
    $region8: #{net_forward.1} parent=1 // loop_exit
      _

</llo_original>
